<compile_context>
chip_gen: v7x
topology: tpu7x:2x2x1
jax: 0.10.0
libtpu: 0.0.40
codegen_flags: <defaults>
</compile_context>

<pallas_src>
from functools import partial

import jax
import jax.numpy as jnp
from jax.experimental import pallas as pl
from jax.experimental.pallas import tpu as pltpu

_VMEM_LIMIT = 48 * 1024 * 1024  # fits v5e/v6e (128 MiB) and v7x (64 MiB) physical VMEM


# ---------------------------------------------------------------------------
# Pallas kernels
# ---------------------------------------------------------------------------
def _conv3x3_kernel(x_ref, w_ref, sc_ref, sh_ref,      # inputs
                    y_ref, s_ref, ss_ref,              # outputs
                    pad_ref,                           # VMEM scratch (halo)
                    *, apply_input_act):
    # x_ref : (1, H, W, Cin)    raw (bias-free) activation tile for one batch elem
    # w_ref : (9, Cin, Cout)    3x3 taps flattened row-major (dy*3 + dx)
    # sc_ref/sh_ref : (1, Cin)  previous layer's fused BN scale / shift
    # y_ref : (1, H, W, Cout)   conv output (no bias; bias absorbed by BN)
    # s_ref / ss_ref : (1, 1, Cout)  per-tile channel sum / sum of squares
    # pad_ref : (H+2, W+2, Cin) zero-halo scratch in VMEM
    _, H, W, Cout = y_ref.shape
    Cin = x_ref.shape[-1]

    x = x_ref[0]                                       # (H, W, Cin), f32
    if apply_input_act:
        # Fused BN + ReLU of the previous layer, applied on the input read.
        x = jnp.maximum(x * sc_ref[0] + sh_ref[0], 0.0)

    # Build the 1-pixel zero halo entirely in VMEM (no HBM pad copy).
    pad_ref[...] = jnp.zeros_like(pad_ref)
    pad_ref[pl.ds(1, H), pl.ds(1, W), :] = x

    acc = jnp.zeros((H * W, Cout), jnp.float32)
    for dy in range(3):
        for dx in range(3):
            patch = pad_ref[pl.ds(dy, H), pl.ds(dx, W), :].reshape(H * W, Cin)
            acc = acc + jnp.dot(patch, w_ref[dy * 3 + dx],
                                preferred_element_type=jnp.float32)

    y_ref[...] = acc.reshape(1, H, W, Cout).astype(y_ref.dtype)
    # Per-channel partial statistics for training-mode BatchNorm (free VPU/XLU
    # filler under the MXU; saves two full-tensor HBM passes in the wrapper).
    s_ref[...] = jnp.sum(acc, axis=0).reshape(1, 1, Cout)
    ss_ref[...] = jnp.sum(acc * acc, axis=0).reshape(1, 1, Cout)


def _bn_relu_kernel(y_ref, scale_ref, shift_ref, o_ref):
    # y_ref: (1, H, W, C);  scale_ref/shift_ref: (1, C)
    o_ref[...] = jnp.maximum(
        y_ref[...] * scale_ref[0] + shift_ref[0], 0.0
    ).astype(o_ref.dtype)


# ---------------------------------------------------------------------------
# Wrappers
# ---------------------------------------------------------------------------
def conv3x3_pallas(x_nhwc, w_hwio, in_scale=None, in_shift=None):
    """3x3/s1/p1 conv (bias-free). Optionally fuses the previous layer's
    BN scale/shift + ReLU into the input read. Also returns per-batch-element
    per-channel sum and sum-of-squares of the conv output."""
    N, H, W, Cin = x_nhwc.shape
    Cout = w_hwio.shape[-1]
    apply_act = in_scale is not None
    if not apply_act:
        in_scale = jnp.ones((Cin,), jnp.float32)
        in_shift = jnp.zeros((Cin,), jnp.float32)
    w_flat = w_hwio.reshape(9, Cin, Cout)

    # TODO(synk): for UNet-scale images add an H-tile grid axis with a halo slab
    # (manual DMA or Element-indexed blocks) so per-step VMEM stays bounded on
    # v7x (64 MiB) and a parallel spatial axis feeds both v7x TensorCores at N=1.
    return pl.pallas_call(
        partial(_conv3x3_kernel, apply_input_act=apply_act),
        out_shape=(
            jax.ShapeDtypeStruct((N, H, W, Cout), jnp.float32),   # conv output
            jax.ShapeDtypeStruct((N, 1, Cout), jnp.float32),      # channel sums
            jax.ShapeDtypeStruct((N, 1, Cout), jnp.float32),      # channel sumsq
        ),
        grid=(N,),
        in_specs=[
            pl.BlockSpec((1, H, W, Cin), lambda n: (n, 0, 0, 0)),
            pl.BlockSpec((9, Cin, Cout), lambda n: (0, 0, 0)),
            pl.BlockSpec((1, Cin), lambda n: (0, 0)),
            pl.BlockSpec((1, Cin), lambda n: (0, 0)),
        ],
        out_specs=(
            pl.BlockSpec((1, H, W, Cout), lambda n: (n, 0, 0, 0)),
            pl.BlockSpec((1, 1, Cout), lambda n: (n, 0, 0)),
            pl.BlockSpec((1, 1, Cout), lambda n: (n, 0, 0)),
        ),
        scratch_shapes=[pltpu.VMEM((H + 2, W + 2, Cin), jnp.float32)],
        compiler_params=pltpu.CompilerParams(
            dimension_semantics=("parallel",),
            vmem_limit_bytes=_VMEM_LIMIT),
    )(x_nhwc, w_flat, in_scale.reshape(1, Cin), in_shift.reshape(1, Cin))


def bn_relu_pallas(y_nhwc, scale, shift):
    N, H, W, C = y_nhwc.shape
    return pl.pallas_call(
        _bn_relu_kernel,
        out_shape=jax.ShapeDtypeStruct((N, H, W, C), jnp.float32),
        grid=(N,),
        in_specs=[
            pl.BlockSpec((1, H, W, C), lambda n: (n, 0, 0, 0)),
            pl.BlockSpec((1, C), lambda n: (0, 0)),
            pl.BlockSpec((1, C), lambda n: (0, 0)),
        ],
        out_specs=pl.BlockSpec((1, H, W, C), lambda n: (n, 0, 0, 0)),
        compiler_params=pltpu.CompilerParams(
            dimension_semantics=("parallel",),
            vmem_limit_bytes=_VMEM_LIMIT),
    )(y_nhwc, scale.reshape(1, C), shift.reshape(1, C))


def _bn_affine(s, ss, count, gamma, beta, eps):
    """Per-channel BN scale/shift from fused sum / sum-of-squares statistics."""
    mean = jnp.sum(s, axis=(0, 1)) / count
    var = jnp.sum(ss, axis=(0, 1)) / count - mean * mean
    scale = gamma * jax.lax.rsqrt(var + eps)
    shift = beta - mean * scale
    return scale, shift


def conv_block_forward(x_nchw, params, eps=1e-5):
    """ConvBlock forward. x_nchw: (N, Cin, H, W) -> (N, Cout, H, W)."""
    x = jnp.transpose(x_nchw, (0, 2, 3, 1))            # NCHW -> NHWC
    N, H, W, _ = x.shape
    count = N * H * W

    # Layer 1: conv (+ fused channel stats). Conv bias omitted: exactly absorbed
    # by the training-mode BatchNorm mean subtraction.
    y1, s1, ss1 = conv3x3_pallas(x, params["w1"])
    scale1, shift1 = _bn_affine(s1, ss1, count, params["gamma1"], params["beta1"], eps)

    # Layer 2: BN1 + ReLU fused into the conv's input read (no separate
    # elementwise pass / HBM round trip between the two conv layers).
    y2, s2, ss2 = conv3x3_pallas(y1, params["w2"], in_scale=scale1, in_shift=shift1)
    scale2, shift2 = _bn_affine(s2, ss2, count, params["gamma2"], params["beta2"], eps)

    out = bn_relu_pallas(y2, scale2, shift2)
    return jnp.transpose(out, (0, 3, 1, 2))             # NHWC -> NCHW


# ---------------------------------------------------------------------------
# Pure-JAX reference (PyTorch semantics: bias + training-mode BN, two-pass var)
# ---------------------------------------------------------------------------
def conv_block_reference(x_nchw, params, eps=1e-5):
    x = x_nchw
    for i in (1, 2):
        w_oihw = jnp.transpose(params[f"w{i}"], (3, 2, 0, 1))
        y = jax.lax.conv_general_dilated(
            x, w_oihw, window_strides=(1, 1), padding=((1, 1), (1, 1)),
            dimension_numbers=("NCHW", "OIHW", "NCHW"))
        y = y + params[f"b{i}"][None, :, None, None]
        mean = jnp.mean(y, axis=(0, 2, 3), keepdims=True)
        var = jnp.mean((y - mean) ** 2, axis=(0, 2, 3), keepdims=True)
        y = (y - mean) / jnp.sqrt(var + eps)
        y = y * params[f"gamma{i}"][None, :, None, None] \
              + params[f"beta{i}"][None, :, None, None]
        x = jnp.maximum(y, 0.0)
    return x


# ---------------------------------------------------------------------------
def make_params(key, in_channels, out_channels):
    ks = jax.random.split(key, 8)
    return {
        "w1": 0.1 * jax.random.normal(ks[0], (3, 3, in_channels, out_channels), jnp.float32),
        "b1": 0.1 * jax.random.normal(ks[1], (out_channels,), jnp.float32),
        "gamma1": 1.0 + 0.1 * jax.random.normal(ks[2], (out_channels,), jnp.float32),
        "beta1": 0.1 * jax.random.normal(ks[3], (out_channels,), jnp.float32),
        "w2": 0.1 * jax.random.normal(ks[4], (3, 3, out_channels, out_channels), jnp.float32),
        "b2": 0.1 * jax.random.normal(ks[5], (out_channels,), jnp.float32),
        "gamma2": 1.0 + 0.1 * jax.random.normal(ks[6], (out_channels,), jnp.float32),
        "beta2": 0.1 * jax.random.normal(ks[7], (out_channels,), jnp.float32),
    }


if __name__ == "__main__":
    N, Cin, Cout, H, W = 2, 4, 8, 16, 16
    key = jax.random.PRNGKey(0)
    kx, kp = jax.random.split(key)
    x = jax.random.normal(kx, (N, Cin, H, W), jnp.float32)   # NCHW, like PyTorch
    params = make_params(kp, Cin, Cout)

    out = jax.block_until_ready(conv_block_forward(x, params))
    ref = jax.block_until_ready(conv_block_reference(x, params))

    assert out.shape == (N, Cout, H, W), out.shape
    assert jnp.allclose(out, ref, atol=1e-3, rtol=1e-3), \
        float(jnp.max(jnp.abs(out - ref)))
    print("KERNEL_OK")
</pallas_src>

<mosaic_0001>
module attributes {stable_mosaic.version = 11 : i64} {
  func.func @_conv3x3_kernel(%arg0: i32, %arg1: memref<1x16x16x4xf32, #tpu.memory_space<vmem>>, %arg2: memref<9x4x8xf32, #tpu.memory_space<vmem>>, %arg3: memref<1x4xf32, #tpu.memory_space<vmem>>, %arg4: memref<1x4xf32, #tpu.memory_space<vmem>>, %arg5: memref<1x16x16x8xf32, #tpu.memory_space<vmem>>, %arg6: memref<1x1x8xf32, #tpu.memory_space<vmem>>, %arg7: memref<1x1x8xf32, #tpu.memory_space<vmem>>, %arg8: memref<18x18x4xf32, #tpu.memory_space<vmem>>) attributes {dimension_semantics = [#tpu.dimension_semantics<parallel>], iteration_bounds = array<i64: 2>, scalar_prefetch = 0 : i64, scratch_operands = 1 : i64, tpu.core_type = #tpu.core_type<tc>, window_params = [{transform_indices = @transform_0, window_bounds = array<i64: 1, 16, 16, 4>}, {pipeline_mode = #tpu.pipeline_mode<synchronous>, transform_indices = @transform_1, window_bounds = array<i64: 9, 4, 8>}, {pipeline_mode = #tpu.pipeline_mode<synchronous>, transform_indices = @transform_2, window_bounds = array<i64: 1, 4>}, {pipeline_mode = #tpu.pipeline_mode<synchronous>, transform_indices = @transform_3, window_bounds = array<i64: 1, 4>}, {transform_indices = @transform_4, window_bounds = array<i64: 1, 16, 16, 8>}, {transform_indices = @transform_5, window_bounds = array<i64: 1, 1, 8>}, {transform_indices = @transform_6, window_bounds = array<i64: 1, 1, 8>}]} {
    %c0 = arith.constant 0 : index
    %c0_0 = arith.constant 0 : index
    %c0_1 = arith.constant 0 : index
    %c0_2 = arith.constant 0 : index
    %0 = vector.load %arg1[%c0, %c0_0, %c0_1, %c0_2] : memref<1x16x16x4xf32, #tpu.memory_space<vmem>>, vector<1x16x16x4xf32>
    %1 = vector.shape_cast %0 : vector<1x16x16x4xf32> to vector<16x16x4xf32>
    %cst = arith.constant 0.000000e+00 : f32
    %2 = vector.broadcast %cst : f32 to vector<18x18x4xf32>
    %c0_3 = arith.constant 0 : index
    %c0_4 = arith.constant 0 : index
    %c0_5 = arith.constant 0 : index
    %3 = vector.load %arg8[%c0_3, %c0_4, %c0_5] : memref<18x18x4xf32, #tpu.memory_space<vmem>>, vector<18x18x4xf32>
    tpu.vector_store %arg8[%c0_3, %c0_4, %c0_5], %2 {strides = array<i32>} : memref<18x18x4xf32, #tpu.memory_space<vmem>>, vector<18x18x4xf32>,
    %c1 = arith.constant 1 : index
    %c1_6 = arith.constant 1 : index
    %c0_7 = arith.constant 0 : index
    %4 = vector.load %arg8[%c1, %c1_6, %c0_7] : memref<18x18x4xf32, #tpu.memory_space<vmem>>, vector<16x16x4xf32>
    tpu.vector_store %arg8[%c1, %c1_6, %c0_7], %1 {strides = array<i32>} : memref<18x18x4xf32, #tpu.memory_space<vmem>>, vector<16x16x4xf32>,
    %cst_8 = arith.constant 0.000000e+00 : f32
    %5 = vector.broadcast %cst_8 : f32 to vector<256x8xf32>
    %c0_9 = arith.constant 0 : index
    %c0_10 = arith.constant 0 : index
    %c0_11 = arith.constant 0 : index
    %6 = vector.load %arg8[%c0_9, %c0_10, %c0_11] : memref<18x18x4xf32, #tpu.memory_space<vmem>>, vector<16x16x4xf32>
    %7 = vector.shape_cast %6 : vector<16x16x4xf32> to vector<256x4xf32>
    %c0_12 = arith.constant 0 : index
    %c0_13 = arith.constant 0 : index
    %c0_14 = arith.constant 0 : index
    %8 = vector.load %arg2[%c0_12, %c0_13, %c0_14] : memref<9x4x8xf32, #tpu.memory_space<vmem>>, vector<1x4x8xf32>
    %9 = vector.shape_cast %8 : vector<1x4x8xf32> to vector<4x8xf32>
    %cst_15 = arith.constant dense<0.000000e+00> : vector<256x8xf32>
    %10 = tpu.matmul %7, %9, %cst_15 {dimension_numbers = #tpu.dot_dimension_numbers<[1], [0], [0], [1], [0, 0, 1, 1], [], []>} : vector<256x4xf32>, vector<4x8xf32>, vector<256x8xf32> -> vector<256x8xf32>
    %11 = arith.addf %5, %10 : vector<256x8xf32>
    %c0_16 = arith.constant 0 : index
    %c1_17 = arith.constant 1 : index
    %c0_18 = arith.constant 0 : index
    %12 = vector.load %arg8[%c0_16, %c1_17, %c0_18] : memref<18x18x4xf32, #tpu.memory_space<vmem>>, vector<16x16x4xf32>
    %13 = vector.shape_cast %12 : vector<16x16x4xf32> to vector<256x4xf32>
    %c1_19 = arith.constant 1 : index
    %c0_20 = arith.constant 0 : index
    %c0_21 = arith.constant 0 : index
    %14 = vector.load %arg2[%c1_19, %c0_20, %c0_21] : memref<9x4x8xf32, #tpu.memory_space<vmem>>, vector<1x4x8xf32>
    %15 = vector.shape_cast %14 : vector<1x4x8xf32> to vector<4x8xf32>
    %cst_22 = arith.constant dense<0.000000e+00> : vector<256x8xf32>
    %16 = tpu.matmul %13, %15, %cst_22 {dimension_numbers = #tpu.dot_dimension_numbers<[1], [0], [0], [1], [0, 0, 1, 1], [], []>} : vector<256x4xf32>, vector<4x8xf32>, vector<256x8xf32> -> vector<256x8xf32>
    %17 = arith.addf %11, %16 : vector<256x8xf32>
    %c0_23 = arith.constant 0 : index
    %c2 = arith.constant 2 : index
    %c0_24 = arith.constant 0 : index
    %18 = vector.load %arg8[%c0_23, %c2, %c0_24] : memref<18x18x4xf32, #tpu.memory_space<vmem>>, vector<16x16x4xf32>
    %19 = vector.shape_cast %18 : vector<16x16x4xf32> to vector<256x4xf32>
    %c2_25 = arith.constant 2 : index
    %c0_26 = arith.constant 0 : index
    %c0_27 = arith.constant 0 : index
    %20 = vector.load %arg2[%c2_25, %c0_26, %c0_27] : memref<9x4x8xf32, #tpu.memory_space<vmem>>, vector<1x4x8xf32>
    %21 = vector.shape_cast %20 : vector<1x4x8xf32> to vector<4x8xf32>
    %cst_28 = arith.constant dense<0.000000e+00> : vector<256x8xf32>
    %22 = tpu.matmul %19, %21, %cst_28 {dimension_numbers = #tpu.dot_dimension_numbers<[1], [0], [0], [1], [0, 0, 1, 1], [], []>} : vector<256x4xf32>, vector<4x8xf32>, vector<256x8xf32> -> vector<256x8xf32>
    %23 = arith.addf %17, %22 : vector<256x8xf32>
    %c1_29 = arith.constant 1 : index
    %c0_30 = arith.constant 0 : index
    %c0_31 = arith.constant 0 : index
    %24 = vector.load %arg8[%c1_29, %c0_30, %c0_31] : memref<18x18x4xf32, #tpu.memory_space<vmem>>, vector<16x16x4xf32>
    %25 = vector.shape_cast %24 : vector<16x16x4xf32> to vector<256x4xf32>
    %c3 = arith.constant 3 : index
    %c0_32 = arith.constant 0 : index
    %c0_33 = arith.constant 0 : index
    %26 = vector.load %arg2[%c3, %c0_32, %c0_33] : memref<9x4x8xf32, #tpu.memory_space<vmem>>, vector<1x4x8xf32>
    %27 = vector.shape_cast %26 : vector<1x4x8xf32> to vector<4x8xf32>
    %cst_34 = arith.constant dense<0.000000e+00> : vector<256x8xf32>
    %28 = tpu.matmul %25, %27, %cst_34 {dimension_numbers = #tpu.dot_dimension_numbers<[1], [0], [0], [1], [0, 0, 1, 1], [], []>} : vector<256x4xf32>, vector<4x8xf32>, vector<256x8xf32> -> vector<256x8xf32>
    %29 = arith.addf %23, %28 : vector<256x8xf32>
    %c1_35 = arith.constant 1 : index
    %c1_36 = arith.constant 1 : index
    %c0_37 = arith.constant 0 : index
    %30 = vector.load %arg8[%c1_35, %c1_36, %c0_37] : memref<18x18x4xf32, #tpu.memory_space<vmem>>, vector<16x16x4xf32>
    %31 = vector.shape_cast %30 : vector<16x16x4xf32> to vector<256x4xf32>
    %c4 = arith.constant 4 : index
    %c0_38 = arith.constant 0 : index
    %c0_39 = arith.constant 0 : index
    %32 = vector.load %arg2[%c4, %c0_38, %c0_39] : memref<9x4x8xf32, #tpu.memory_space<vmem>>, vector<1x4x8xf32>
    %33 = vector.shape_cast %32 : vector<1x4x8xf32> to vector<4x8xf32>
    %cst_40 = arith.constant dense<0.000000e+00> : vector<256x8xf32>
    %34 = tpu.matmul %31, %33, %cst_40 {dimension_numbers = #tpu.dot_dimension_numbers<[1], [0], [0], [1], [0, 0, 1, 1], [], []>} : vector<256x4xf32>, vector<4x8xf32>, vector<256x8xf32> -> vector<256x8xf32>
    %35 = arith.addf %29, %34 : vector<256x8xf32>
    %c1_41 = arith.constant 1 : index
    %c2_42 = arith.constant 2 : index
    %c0_43 = arith.constant 0 : index
    %36 = vector.load %arg8[%c1_41, %c2_42, %c0_43] : memref<18x18x4xf32, #tpu.memory_space<vmem>>, vector<16x16x4xf32>
    %37 = vector.shape_cast %36 : vector<16x16x4xf32> to vector<256x4xf32>
    %c5 = arith.constant 5 : index
    %c0_44 = arith.constant 0 : index
    %c0_45 = arith.constant 0 : index
    %38 = vector.load %arg2[%c5, %c0_44, %c0_45] : memref<9x4x8xf32, #tpu.memory_space<vmem>>, vector<1x4x8xf32>
    %39 = vector.shape_cast %38 : vector<1x4x8xf32> to vector<4x8xf32>
    %cst_46 = arith.constant dense<0.000000e+00> : vector<256x8xf32>
    %40 = tpu.matmul %37, %39, %cst_46 {dimension_numbers = #tpu.dot_dimension_numbers<[1], [0], [0], [1], [0, 0, 1, 1], [], []>} : vector<256x4xf32>, vector<4x8xf32>, vector<256x8xf32> -> vector<256x8xf32>
    %41 = arith.addf %35, %40 : vector<256x8xf32>
    %c2_47 = arith.constant 2 : index
    %c0_48 = arith.constant 0 : index
    %c0_49 = arith.constant 0 : index
    %42 = vector.load %arg8[%c2_47, %c0_48, %c0_49] : memref<18x18x4xf32, #tpu.memory_space<vmem>>, vector<16x16x4xf32>
    %43 = vector.shape_cast %42 : vector<16x16x4xf32> to vector<256x4xf32>
    %c6 = arith.constant 6 : index
    %c0_50 = arith.constant 0 : index
    %c0_51 = arith.constant 0 : index
    %44 = vector.load %arg2[%c6, %c0_50, %c0_51] : memref<9x4x8xf32, #tpu.memory_space<vmem>>, vector<1x4x8xf32>
    %45 = vector.shape_cast %44 : vector<1x4x8xf32> to vector<4x8xf32>
    %cst_52 = arith.constant dense<0.000000e+00> : vector<256x8xf32>
    %46 = tpu.matmul %43, %45, %cst_52 {dimension_numbers = #tpu.dot_dimension_numbers<[1], [0], [0], [1], [0, 0, 1, 1], [], []>} : vector<256x4xf32>, vector<4x8xf32>, vector<256x8xf32> -> vector<256x8xf32>
    %47 = arith.addf %41, %46 : vector<256x8xf32>
    %c2_53 = arith.constant 2 : index
    %c1_54 = arith.constant 1 : index
    %c0_55 = arith.constant 0 : index
    %48 = vector.load %arg8[%c2_53, %c1_54, %c0_55] : memref<18x18x4xf32, #tpu.memory_space<vmem>>, vector<16x16x4xf32>
    %49 = vector.shape_cast %48 : vector<16x16x4xf32> to vector<256x4xf32>
    %c7 = arith.constant 7 : index
    %c0_56 = arith.constant 0 : index
    %c0_57 = arith.constant 0 : index
    %50 = vector.load %arg2[%c7, %c0_56, %c0_57] : memref<9x4x8xf32, #tpu.memory_space<vmem>>, vector<1x4x8xf32>
    %51 = vector.shape_cast %50 : vector<1x4x8xf32> to vector<4x8xf32>
    %cst_58 = arith.constant dense<0.000000e+00> : vector<256x8xf32>
    %52 = tpu.matmul %49, %51, %cst_58 {dimension_numbers = #tpu.dot_dimension_numbers<[1], [0], [0], [1], [0, 0, 1, 1], [], []>} : vector<256x4xf32>, vector<4x8xf32>, vector<256x8xf32> -> vector<256x8xf32>
    %53 = arith.addf %47, %52 : vector<256x8xf32>
    %c2_59 = arith.constant 2 : index
    %c2_60 = arith.constant 2 : index
    %c0_61 = arith.constant 0 : index
    %54 = vector.load %arg8[%c2_59, %c2_60, %c0_61] : memref<18x18x4xf32, #tpu.memory_space<vmem>>, vector<16x16x4xf32>
    %55 = vector.shape_cast %54 : vector<16x16x4xf32> to vector<256x4xf32>
    %c8 = arith.constant 8 : index
    %c0_62 = arith.constant 0 : index
    %c0_63 = arith.constant 0 : index
    %56 = vector.load %arg2[%c8, %c0_62, %c0_63] : memref<9x4x8xf32, #tpu.memory_space<vmem>>, vector<1x4x8xf32>
    %57 = vector.shape_cast %56 : vector<1x4x8xf32> to vector<4x8xf32>
    %cst_64 = arith.constant dense<0.000000e+00> : vector<256x8xf32>
    %58 = tpu.matmul %55, %57, %cst_64 {dimension_numbers = #tpu.dot_dimension_numbers<[1], [0], [0], [1], [0, 0, 1, 1], [], []>} : vector<256x4xf32>, vector<4x8xf32>, vector<256x8xf32> -> vector<256x8xf32>
    %59 = arith.addf %53, %58 : vector<256x8xf32>
    %60 = vector.shape_cast %59 : vector<256x8xf32> to vector<1x16x16x8xf32>
    %c0_65 = arith.constant 0 : index
    %c0_66 = arith.constant 0 : index
    %c0_67 = arith.constant 0 : index
    %c0_68 = arith.constant 0 : index
    %61 = vector.load %arg5[%c0_65, %c0_66, %c0_67, %c0_68] : memref<1x16x16x8xf32, #tpu.memory_space<vmem>>, vector<1x16x16x8xf32>
    tpu.vector_store %arg5[%c0_65, %c0_66, %c0_67, %c0_68], %60 {strides = array<i32>} : memref<1x16x16x8xf32, #tpu.memory_space<vmem>>, vector<1x16x16x8xf32>,
    %cst_69 = arith.constant dense<0.000000e+00> : vector<8xf32>
    %62 = vector.multi_reduction <add>, %59, %cst_69 [0] : vector<256x8xf32> to vector<8xf32>
    %63 = vector.shape_cast %62 : vector<8xf32> to vector<1x1x8xf32>
    %c0_70 = arith.constant 0 : index
    %c0_71 = arith.constant 0 : index
    %c0_72 = arith.constant 0 : index
    %64 = vector.load %arg6[%c0_70, %c0_71, %c0_72] : memref<1x1x8xf32, #tpu.memory_space<vmem>>, vector<1x1x8xf32>
    tpu.vector_store %arg6[%c0_70, %c0_71, %c0_72], %63 {strides = array<i32>} : memref<1x1x8xf32, #tpu.memory_space<vmem>>, vector<1x1x8xf32>,
    %65 = arith.mulf %59, %59 : vector<256x8xf32>
    %cst_73 = arith.constant dense<0.000000e+00> : vector<8xf32>
    %66 = vector.multi_reduction <add>, %65, %cst_73 [0] : vector<256x8xf32> to vector<8xf32>
    %67 = vector.shape_cast %66 : vector<8xf32> to vector<1x1x8xf32>
    %c0_74 = arith.constant 0 : index
    %c0_75 = arith.constant 0 : index
    %c0_76 = arith.constant 0 : index
    %68 = vector.load %arg7[%c0_74, %c0_75, %c0_76] : memref<1x1x8xf32, #tpu.memory_space<vmem>>, vector<1x1x8xf32>
    tpu.vector_store %arg7[%c0_74, %c0_75, %c0_76], %67 {strides = array<i32>} : memref<1x1x8xf32, #tpu.memory_space<vmem>>, vector<1x1x8xf32>,
    return
  }
  func.func @transform_0(%arg0: i32) -> (i32, i32, i32, i32) {
    %c0_i32 = arith.constant 0 : i32
    %c0_i32_0 = arith.constant 0 : i32
    %c0_i32_1 = arith.constant 0 : i32
    %c0_i32_2 = arith.constant 0 : i32
    return %arg0, %c0_i32, %c0_i32_0, %c0_i32_1 : i32, i32, i32, i32
  }
  func.func @transform_1(%arg0: i32) -> (i32, i32, i32) {
    %c0_i32 = arith.constant 0 : i32
    %c0_i32_0 = arith.constant 0 : i32
    %c0_i32_1 = arith.constant 0 : i32
    %c0_i32_2 = arith.constant 0 : i32
    return %c0_i32, %c0_i32_0, %c0_i32_1 : i32, i32, i32
  }
  func.func @transform_2(%arg0: i32) -> (i32, i32) {
    %c0_i32 = arith.constant 0 : i32
    %c0_i32_0 = arith.constant 0 : i32
    %c0_i32_1 = arith.constant 0 : i32
    return %c0_i32, %c0_i32_0 : i32, i32
  }
  func.func @transform_3(%arg0: i32) -> (i32, i32) {
    %c0_i32 = arith.constant 0 : i32
    %c0_i32_0 = arith.constant 0 : i32
    %c0_i32_1 = arith.constant 0 : i32
    return %c0_i32, %c0_i32_0 : i32, i32
  }
  func.func @transform_4(%arg0: i32) -> (i32, i32, i32, i32) {
    %c0_i32 = arith.constant 0 : i32
    %c0_i32_0 = arith.constant 0 : i32
    %c0_i32_1 = arith.constant 0 : i32
    %c0_i32_2 = arith.constant 0 : i32
    return %arg0, %c0_i32, %c0_i32_0, %c0_i32_1 : i32, i32, i32, i32
  }
  func.func @transform_5(%arg0: i32) -> (i32, i32, i32) {
    %c0_i32 = arith.constant 0 : i32
    %c0_i32_0 = arith.constant 0 : i32
    %c0_i32_1 = arith.constant 0 : i32
    return %arg0, %c0_i32, %c0_i32_0 : i32, i32, i32
  }
  func.func @transform_6(%arg0: i32) -> (i32, i32, i32) {
    %c0_i32 = arith.constant 0 : i32
    %c0_i32_0 = arith.constant 0 : i32
    %c0_i32_1 = arith.constant 0 : i32
    return %arg0, %c0_i32, %c0_i32_0 : i32, i32, i32
  }
}

</mosaic_0001>

<llo_original>
// kernel: tpu_custom_call.1
$region0: #{tpu_custom_call.1}
  #allocation0 [shape = 'u32[]', space=smem, size = 0x4, offset = 0x4, fixed_abs, tag = 'smem constant byte address 0x4 - core index']
  #allocation1 [shape = 'u32[144,128]{1,0:T(1,128)}', space=vmem, size = 0x12000, scoped, tag = 'internal scratch']
  #allocation2 [shape = 'f32[18,18,4]{2,1,0:T(8,128)}', space=vmem, size = 0x36000, scoped, tag = 'scratch operand']
  %s0 = inlined_call_operand.vmem [shape: f32[2,16,16,4], index: 0, kind: input, shape index: {}]
  %s1 = inlined_call_operand.vmem [shape: f32[9,4,8], index: 1, kind: input, shape index: {}]
  %s2 = inlined_call_operand.vmem [shape: f32[1,4], index: 2, kind: input, shape index: {}]
  %s3 = inlined_call_operand.vmem [shape: f32[1,4], index: 3, kind: input, shape index: {}]
  %s4 = inlined_call_operand.vmem [shape: f32[2,16,16,8], index: 4, kind: output, shape index: {0}]
  %s5 = inlined_call_operand.hbm [shape: f32[2,1,8], index: 5, kind: output, shape index: {1}]
  %s6 = inlined_call_operand.hbm [shape: f32[2,1,8], index: 6, kind: output, shape index: {2}]
  %7 = xla_tuple %s4, %s5, %s6
  %s8 = sld [smem:[#allocation0]]
  $region65: #{tpu_custom_call.1} parent=0
    _
  %s10 = ssub.s32 1, %s8
  %s11 = scalar_select 0, %s10, %s8
  $region1: #{tpu_custom_call.1} parent=0
    #allocation3 [shape = 'u8[1024]{0}', space=vmem, size = 0x400, scoped, tag = 'output window, operand 1']
    #allocation4 [shape = 's32[2]{0}', space=sflag, size = 0x8, scoped, tag = 'scoped memory for tpu_custom_call.1']
    #allocation5 [shape = 'u8[1024]{0}', space=vmem, size = 0x400, scoped, tag = 'output window, operand 2']
    #allocation6 [shape = 's32[2]{0}', space=sflag, size = 0x8, scoped, tag = 'scoped memory for tpu_custom_call.1']
    %12 = vsyncpa [#allocation4], 0
    %s13 = scalar_lea.sflag [#allocation4], 1
    %14 = vsyncpa %s13, 0
    %15 = vsyncpa [#allocation6], 0
    %s16 = scalar_lea.sflag [#allocation6], 1
    %17 = vsyncpa %s16, 0
    loop: start=0, step=1, limit=4
    $region2: #{tpu_custom_call.1} parent=1 // loop_pre_header
      _
    $region3: #{tpu_custom_call.1} parent=1 // loop_header
      %s19 = sphi 0, %s23
      %p20 = scmp.ge.s32.totalorder %s19, 4
      %s29 = sphi 0, %s31
      %s32 = sphi 0, %s29
      %s33 = sphi 0, %s32
      %s49 = sphi 0, %s33
      %s53 = sphi 0, %s53
      %s55 = sphi 0, %s53
      %s56 = sphi 0, %s55
      %s70 = sphi 0, %s56
      %s74 = sphi 0, %s74
      %s76 = sphi 0, %s74
      %s77 = sphi 0, %s76
      %s91 = sphi 0, %s77
      %s95 = sphi 0, %s95
      %s97 = sphi 0, %s95
      %s98 = sphi 0, %s97
      %s112 = sphi 0, %s98
      %s118 = sphi 0, %s120
      %s121 = sphi 0, %s118
      %s122 = sphi 0, %s121
      %s138 = sphi 0, %s122
      %s144 = sphi 0, %s146
      %s147 = sphi 0, %s144
      %s148 = sphi 0, %s147
      %s164 = sphi 0, %s148
      %s170 = sphi 0, %s172
      %s173 = sphi 0, %s170
      %s174 = sphi 0, %s173
      %s190 = sphi 0, %s174
    $region4: #{tpu_custom_call.1} parent=1 // loop_header_branch
      %22 = sbr.rel (%p20) target = $region8
    $region5: #{tpu_custom_call.1} parent=1 // loop_body
      %s24 = ssub.s32 %s19, 1
      %s25 = ssub.s32 %s19, 2
      %s26 = sadd.s32 %s19, 1
      %s27 = ssub.s32 %s19, %s26
      %p28 = scmp.eq.s32.totalorder %s27, 0
      %s30 = sadd.s32 %s29, 1
      %s31 = scalar_select %p28, %s29, %s30
      %p34 = pneg %p28
      %p35 = scmp.eq.s32.totalorder %s19, 1
      %p36 = por %p34, %p35
      %p37 = scmp.ne.s32.totalorder %s29, %s32
      %p38 = scmp.eq.s32.totalorder %s19, 0
      %p39 = por %p37, %p38
      %p40 = scmp.ne.s32.totalorder %s29, %s32
      %p41 = scmp.eq.s32.totalorder %s24, 1
      %p42 = por %p40, %p41
      %p43 = scmp.ne.s32.totalorder %s32, %s33
      %p44 = scmp.eq.s32.totalorder %s24, 0
      %p45 = por %p43, %p44
      %p46 = scmp.ne.s32.totalorder %s32, %s33
      %p47 = scmp.eq.s32.totalorder %s25, 1
      %p48 = por %p46, %p47
      %p50 = scmp.ne.s32.totalorder %s33, %s49
      %p51 = scmp.eq.s32.totalorder %s25, 0
      %p52 = por %p50, %p51
      %s54 = sadd.s32 %s53, 1
      %p57 = scmp.eq.s32.totalorder %s19, 1
      %p58 = scmp.ne.s32.totalorder %s53, %s55
      %p59 = scmp.eq.s32.totalorder %s19, 0
      %p60 = por %p58, %p59
      %p61 = scmp.ne.s32.totalorder %s53, %s55
      %p62 = scmp.eq.s32.totalorder %s24, 1
      %p63 = por %p61, %p62
      %p64 = scmp.ne.s32.totalorder %s55, %s56
      %p65 = scmp.eq.s32.totalorder %s24, 0
      %p66 = por %p64, %p65
      %p67 = scmp.ne.s32.totalorder %s55, %s56
      %p68 = scmp.eq.s32.totalorder %s25, 1
      %p69 = por %p67, %p68
      %p71 = scmp.ne.s32.totalorder %s56, %s70
      %p72 = scmp.eq.s32.totalorder %s25, 0
      %p73 = por %p71, %p72
      %s75 = sadd.s32 %s74, 1
      %p78 = scmp.eq.s32.totalorder %s19, 1
      %p79 = scmp.ne.s32.totalorder %s74, %s76
      %p80 = scmp.eq.s32.totalorder %s19, 0
      %p81 = por %p79, %p80
      %p82 = scmp.ne.s32.totalorder %s74, %s76
      %p83 = scmp.eq.s32.totalorder %s24, 1
      %p84 = por %p82, %p83
      %p85 = scmp.ne.s32.totalorder %s76, %s77
      %p86 = scmp.eq.s32.totalorder %s24, 0
      %p87 = por %p85, %p86
      %p88 = scmp.ne.s32.totalorder %s76, %s77
      %p89 = scmp.eq.s32.totalorder %s25, 1
      %p90 = por %p88, %p89
      %p92 = scmp.ne.s32.totalorder %s77, %s91
      %p93 = scmp.eq.s32.totalorder %s25, 0
      %p94 = por %p92, %p93
      %s96 = sadd.s32 %s95, 1
      %p99 = scmp.eq.s32.totalorder %s19, 1
      %p100 = scmp.ne.s32.totalorder %s95, %s97
      %p101 = scmp.eq.s32.totalorder %s19, 0
      %p102 = por %p100, %p101
      %p103 = scmp.ne.s32.totalorder %s95, %s97
      %p104 = scmp.eq.s32.totalorder %s24, 1
      %p105 = por %p103, %p104
      %p106 = scmp.ne.s32.totalorder %s97, %s98
      %p107 = scmp.eq.s32.totalorder %s24, 0
      %p108 = por %p106, %p107
      %p109 = scmp.ne.s32.totalorder %s97, %s98
      %p110 = scmp.eq.s32.totalorder %s25, 1
      %p111 = por %p109, %p110
      %p113 = scmp.ne.s32.totalorder %s98, %s112
      %p114 = scmp.eq.s32.totalorder %s25, 0
      %p115 = por %p113, %p114
      %s116 = ssub.s32 %s19, %s26
      %p117 = scmp.eq.s32.totalorder %s116, 0
      %s119 = sadd.s32 %s118, 1
      %s120 = scalar_select %p117, %s118, %s119
      %p123 = pneg %p117
      %p124 = scmp.eq.s32.totalorder %s19, 1
      %p125 = por %p123, %p124
      %p126 = scmp.ne.s32.totalorder %s118, %s121
      %p127 = scmp.eq.s32.totalorder %s19, 0
      %p128 = por %p126, %p127
      %p129 = scmp.ne.s32.totalorder %s118, %s121
      %p130 = scmp.eq.s32.totalorder %s24, 1
      %p131 = por %p129, %p130
      %p132 = scmp.ne.s32.totalorder %s121, %s122
      %p133 = scmp.eq.s32.totalorder %s24, 0
      %p134 = por %p132, %p133
      %p135 = scmp.ne.s32.totalorder %s121, %s122
      %p136 = scmp.eq.s32.totalorder %s25, 1
      %p137 = por %p135, %p136
      %p139 = scmp.ne.s32.totalorder %s122, %s138
      %p140 = scmp.eq.s32.totalorder %s25, 0
      %p141 = por %p139, %p140
      %s142 = ssub.s32 %s19, %s26
      %p143 = scmp.eq.s32.totalorder %s142, 0
      %s145 = sadd.s32 %s144, 1
      %s146 = scalar_select %p143, %s144, %s145
      %p149 = pneg %p143
      %p150 = scmp.eq.s32.totalorder %s19, 1
      %p151 = por %p149, %p150
      %p152 = scmp.ne.s32.totalorder %s144, %s147
      %p153 = scmp.eq.s32.totalorder %s19, 0
      %p154 = por %p152, %p153
      %p155 = scmp.ne.s32.totalorder %s144, %s147
      %p156 = scmp.eq.s32.totalorder %s24, 1
      %p157 = por %p155, %p156
      %p158 = scmp.ne.s32.totalorder %s147, %s148
      %p159 = scmp.eq.s32.totalorder %s24, 0
      %p160 = por %p158, %p159
      %p161 = scmp.ne.s32.totalorder %s147, %s148
      %p162 = scmp.eq.s32.totalorder %s25, 1
      %p163 = por %p161, %p162
      %p165 = scmp.ne.s32.totalorder %s148, %s164
      %p166 = scmp.eq.s32.totalorder %s25, 0
      %p167 = por %p165, %p166
      %s168 = ssub.s32 %s19, %s26
      %p169 = scmp.eq.s32.totalorder %s168, 0
      %s171 = sadd.s32 %s170, 1
      %s172 = scalar_select %p169, %s170, %s171
      %p175 = pneg %p169
      %p176 = scmp.eq.s32.totalorder %s19, 1
      %p177 = por %p175, %p176
      %p178 = scmp.ne.s32.totalorder %s170, %s173
      %p179 = scmp.eq.s32.totalorder %s19, 0
      %p180 = por %p178, %p179
      %p181 = scmp.ne.s32.totalorder %s170, %s173
      %p182 = scmp.eq.s32.totalorder %s24, 1
      %p183 = por %p181, %p182
      %p184 = scmp.ne.s32.totalorder %s173, %s174
      %p185 = scmp.eq.s32.totalorder %s24, 0
      %p186 = por %p184, %p185
      %p187 = scmp.ne.s32.totalorder %s173, %s174
      %p188 = scmp.eq.s32.totalorder %s25, 1
      %p189 = por %p187, %p188
      %p191 = scmp.ne.s32.totalorder %s174, %s190
      %p192 = scmp.eq.s32.totalorder %s25, 0
      %p193 = por %p191, %p192
      %p194 = scmp.le.s32.totalorder 1, %s19
      %p195 = scmp.lt.s32.totalorder %s19, 3
      %p196 = pnand %p194, %p195
      %p197 = pneg %p196
      // Predicated region
      $region9: #{tpu_custom_call.1} parent=5 // pred_check
        _
      $region10: #{tpu_custom_call.1} parent=5 // pred_check_branch
        %199 = sbr.rel (%p196) target = $region12
      $region11: #{tpu_custom_call.1} parent=5 // pred_region
        %s200 = ssub.s32 %s19, 1
        // Predicated region
        $region13: #{tpu_custom_call.1} parent=11 // pred_check
          %p201 = pneg %p66
        $region14: #{tpu_custom_call.1} parent=11 // pred_check_branch
          %203 = sbr.rel (%p201) target = $region16
        $region15: #{tpu_custom_call.1} parent=11 // pred_region
          _
        $region16: #{tpu_custom_call.1} parent=11 // pred_fallthru
          _
        // Predicated region
        $region17: #{tpu_custom_call.1} parent=11 // pred_check
          %p204 = pneg %p87
        $region18: #{tpu_custom_call.1} parent=11 // pred_check_branch
          %206 = sbr.rel (%p204) target = $region20
        $region19: #{tpu_custom_call.1} parent=11 // pred_region
          _
        $region20: #{tpu_custom_call.1} parent=11 // pred_fallthru
          _
        // Predicated region
        $region21: #{tpu_custom_call.1} parent=11 // pred_check
          %p207 = pneg %p108
        $region22: #{tpu_custom_call.1} parent=11 // pred_check_branch
          %209 = sbr.rel (%p207) target = $region24
        $region23: #{tpu_custom_call.1} parent=11 // pred_region
          _
        $region24: #{tpu_custom_call.1} parent=11 // pred_fallthru
          _
      $region12: #{tpu_custom_call.1} parent=5 // pred_fallthru
        _
      %p210 = scmp.lt.s32.totalorder %s19, 2
      // Predicated region
      $region25: #{tpu_custom_call.1} parent=5 // pred_check
        %p211 = pneg %p210
      $region26: #{tpu_custom_call.1} parent=5 // pred_check_branch
        %213 = sbr.rel (%p211) target = $region28
      $region27: #{tpu_custom_call.1} parent=5 // pred_region
        // Predicated region
        $region29: #{tpu_custom_call.1} parent=27 // pred_check
          %p214 = pneg %p39
        $region30: #{tpu_custom_call.1} parent=27 // pred_check_branch
          %216 = sbr.rel (%p214) target = $region32
        $region31: #{tpu_custom_call.1} parent=27 // pred_region
          %p217 = scmp.lt.s32.totalorder %s19, 1
          %s218 = scalar_select %p217, %s19, 1
          %s219 = smul.addr %s218, 32
          %s220 = smul.addr %s219, 8
          %s221 = scalar_lea.vmem %s0, %s220
        $region32: #{tpu_custom_call.1} parent=27 // pred_fallthru
          _
      $region28: #{tpu_custom_call.1} parent=5 // pred_fallthru
        _
      %p222 = scmp.le.s32.totalorder 1, %s19
      %p223 = scmp.lt.s32.totalorder %s19, 3
      %p224 = pnand %p222, %p223
      %p225 = pneg %p224
      // Predicated region
      $region33: #{tpu_custom_call.1} parent=5 // pred_check
        _
      $region34: #{tpu_custom_call.1} parent=5 // pred_check_branch
        %227 = sbr.rel (%p224) target = $region36
      $region35: #{tpu_custom_call.1} parent=5 // pred_region
        %s228 = ssub.s32 %s19, 1
        %p229 = scmp.lt.s32.totalorder %s24, 1
        %s230 = scalar_select %p229, %s24, 1
        %s231 = smul.addr %s230, 32
        %s232 = smul.addr %s231, 8
        %s233 = scalar_lea.vmem %s0, %s232
        %p234 = pneg %p45
        %p235 = pneg %p42
        %p236 = pneg %p66
        %p237 = pneg %p63
        %p238 = pneg %p87
        %p239 = pneg %p84
        %p240 = pneg %p108
        %p241 = pneg %p105
        %p242 = pneg %p134
        %p243 = pneg %p131
        %p244 = scmp.lt.s32.totalorder %s24, 1
        %s245 = scalar_select %p244, %s24, 1
        %s246 = smul.addr %s245, 32
        %s247 = smul.addr %s246, 8
        %s248 = scalar_lea.vmem %s4, %s247
        %p249 = pneg %p160
        %p250 = pneg %p157
        %s251 = sand.u32 %s147, 1
        %s252 = scalar_lea.sflag [#allocation4], %s251
        %s253 = sand.u32 %s147, 1
        %s254 = scalar_lea.vmem [#allocation3], %s253
        %p255 = pneg %p186
        %p256 = pneg %p183
        %s257 = sand.u32 %s173, 1
        %s258 = scalar_lea.sflag [#allocation6], %s257
        %s259 = sand.u32 %s173, 1
        %s260 = scalar_lea.vmem [#allocation5], %s259
        %p261 = scmp.lt.s32.totalorder %s24, 1
        %s262 = scalar_select %p261, %s24, 1
        %s263 = smul.addr %s262, 32
        %s264 = smul.addr %s263, 8
        %s265 = scalar_lea.vmem %s0, %s264
        %p266 = scmp.lt.s32.totalorder %s24, 1
        %s267 = scalar_select %p266, %s24, 1
        %s268 = smul.addr %s267, 32
        %s269 = smul.addr %s268, 8
        %s270 = scalar_lea.vmem %s4, %s269
        %v271 = vld [vmem:[%s265] sm:$0xff]
        %v272 = vld [vmem:[%s265 + $0x8] sm:$0xff]
        %v273 = vld [vmem:[%s265 + $0x10] sm:$0xff]
        %v274 = vld [vmem:[%s265 + $0x18] sm:$0xff]
        %v275 = vld [vmem:[%s265 + $0x20] sm:$0xff]
        %v276 = vld [vmem:[%s265 + $0x28] sm:$0xff]
        %v277 = vld [vmem:[%s265 + $0x30] sm:$0xff]
        %v278 = vld [vmem:[%s265 + $0x38] sm:$0xff]
        %v279 = vld [vmem:[%s265 + $0x40] sm:$0xff]
        %v280 = vld [vmem:[%s265 + $0x48] sm:$0xff]
        %v281 = vld [vmem:[%s265 + $0x50] sm:$0xff]
        %v282 = vld [vmem:[%s265 + $0x58] sm:$0xff]
        %v283 = vld [vmem:[%s265 + $0x60] sm:$0xff]
        %v284 = vld [vmem:[%s265 + $0x68] sm:$0xff]
        %v285 = vld [vmem:[%s265 + $0x70] sm:$0xff]
        %v286 = vld [vmem:[%s265 + $0x78] sm:$0xff]
        %v287 = vld [vmem:[%s265 + $0x80] sm:$0xff]
        %v288 = vld [vmem:[%s265 + $0x88] sm:$0xff]
        %v289 = vld [vmem:[%s265 + $0x90] sm:$0xff]
        %v290 = vld [vmem:[%s265 + $0x98] sm:$0xff]
        %v291 = vld [vmem:[%s265 + $0xa0] sm:$0xff]
        %v292 = vld [vmem:[%s265 + $0xa8] sm:$0xff]
        %v293 = vld [vmem:[%s265 + $0xb0] sm:$0xff]
        %v294 = vld [vmem:[%s265 + $0xb8] sm:$0xff]
        %v295 = vld [vmem:[%s265 + $0xc0] sm:$0xff]
        %v296 = vld [vmem:[%s265 + $0xc8] sm:$0xff]
        %v297 = vld [vmem:[%s265 + $0xd0] sm:$0xff]
        %v298 = vld [vmem:[%s265 + $0xd8] sm:$0xff]
        %v299 = vld [vmem:[%s265 + $0xe0] sm:$0xff]
        %v300 = vld [vmem:[%s265 + $0xe8] sm:$0xff]
        %v301 = vld [vmem:[%s265 + $0xf0] sm:$0xff]
        %v302 = vld [vmem:[%s265 + $0xf8] sm:$0xff]
        %vm303 = vcmask 31744
        %304 = vst.msk [vmem:[#allocation2] sm:$0xff] %vm303, 0.0
        %305 = vst.msk [vmem:[#allocation2 + $0x8] sm:$0xff] %vm303, 0.0
        %vm306 = vcmask 25600
        %307 = vst.msk [vmem:[#allocation2 + $0x10] sm:$0x3] %vm306, 0.0
        %308 = vst.msk [vmem:[#allocation2 + $0x18] sm:$0xff] %vm303, 0.0
        %309 = vst.msk [vmem:[#allocation2 + $0x20] sm:$0xff] %vm303, 0.0
        %310 = vst.msk [vmem:[#allocation2 + $0x28] sm:$0x3] %vm306, 0.0
        %311 = vst.msk [vmem:[#allocation2 + $0x30] sm:$0xff] %vm303, 0.0
        %312 = vst.msk [vmem:[#allocation2 + $0x38] sm:$0xff] %vm303, 0.0
        %313 = vst.msk [vmem:[#allocation2 + $0x40] sm:$0x3] %vm306, 0.0
        %314 = vst.msk [vmem:[#allocation2 + $0x48] sm:$0xff] %vm303, 0.0
        %315 = vst.msk [vmem:[#allocation2 + $0x50] sm:$0xff] %vm303, 0.0
        %316 = vst.msk [vmem:[#allocation2 + $0x58] sm:$0x3] %vm306, 0.0
        %317 = vst.msk [vmem:[#allocation2 + $0x60] sm:$0xff] %vm303, 0.0
        %318 = vst.msk [vmem:[#allocation2 + $0x68] sm:$0xff] %vm303, 0.0
        %319 = vst.msk [vmem:[#allocation2 + $0x70] sm:$0x3] %vm306, 0.0
        %320 = vst.msk [vmem:[#allocation2 + $0x78] sm:$0xff] %vm303, 0.0
        %321 = vst.msk [vmem:[#allocation2 + $0x80] sm:$0xff] %vm303, 0.0
        %322 = vst.msk [vmem:[#allocation2 + $0x88] sm:$0x3] %vm306, 0.0
        %323 = vst.msk [vmem:[#allocation2 + $0x90] sm:$0xff] %vm303, 0.0
        %324 = vst.msk [vmem:[#allocation2 + $0x98] sm:$0xff] %vm303, 0.0
        %325 = vst.msk [vmem:[#allocation2 + $0xa0] sm:$0x3] %vm306, 0.0
        %326 = vst.msk [vmem:[#allocation2 + $0xa8] sm:$0xff] %vm303, 0.0
        %327 = vst.msk [vmem:[#allocation2 + $0xb0] sm:$0xff] %vm303, 0.0
        %328 = vst.msk [vmem:[#allocation2 + $0xb8] sm:$0x3] %vm306, 0.0
        %329 = vst.msk [vmem:[#allocation2 + $0xc0] sm:$0xff] %vm303, 0.0
        %330 = vst.msk [vmem:[#allocation2 + $0xc8] sm:$0xff] %vm303, 0.0
        %331 = vst.msk [vmem:[#allocation2 + $0xd0] sm:$0x3] %vm306, 0.0
        %332 = vst.msk [vmem:[#allocation2 + $0xd8] sm:$0xff] %vm303, 0.0
        %333 = vst.msk [vmem:[#allocation2 + $0xe0] sm:$0xff] %vm303, 0.0
        %334 = vst.msk [vmem:[#allocation2 + $0xe8] sm:$0x3] %vm306, 0.0
        %335 = vst.msk [vmem:[#allocation2 + $0xf0] sm:$0xff] %vm303, 0.0
        %336 = vst.msk [vmem:[#allocation2 + $0xf8] sm:$0xff] %vm303, 0.0
        %337 = vst.msk [vmem:[#allocation2 + $0x100] sm:$0x3] %vm306, 0.0
        %338 = vst.msk [vmem:[#allocation2 + $0x108] sm:$0xff] %vm303, 0.0
        %339 = vst.msk [vmem:[#allocation2 + $0x110] sm:$0xff] %vm303, 0.0
        %340 = vst.msk [vmem:[#allocation2 + $0x118] sm:$0x3] %vm306, 0.0
        %341 = vst.msk [vmem:[#allocation2 + $0x120] sm:$0xff] %vm303, 0.0
        %342 = vst.msk [vmem:[#allocation2 + $0x128] sm:$0xff] %vm303, 0.0
        %343 = vst.msk [vmem:[#allocation2 + $0x130] sm:$0x3] %vm306, 0.0
        %344 = vst.msk [vmem:[#allocation2 + $0x138] sm:$0xff] %vm303, 0.0
        %345 = vst.msk [vmem:[#allocation2 + $0x140] sm:$0xff] %vm303, 0.0
        %346 = vst.msk [vmem:[#allocation2 + $0x148] sm:$0x3] %vm306, 0.0
        %347 = vst.msk [vmem:[#allocation2 + $0x150] sm:$0xff] %vm303, 0.0
        %348 = vst.msk [vmem:[#allocation2 + $0x158] sm:$0xff] %vm303, 0.0
        %349 = vst.msk [vmem:[#allocation2 + $0x160] sm:$0x3] %vm306, 0.0
        %350 = vst.msk [vmem:[#allocation2 + $0x168] sm:$0xff] %vm303, 0.0
        %351 = vst.msk [vmem:[#allocation2 + $0x170] sm:$0xff] %vm303, 0.0
        %352 = vst.msk [vmem:[#allocation2 + $0x178] sm:$0x3] %vm306, 0.0
        %353 = vst.msk [vmem:[#allocation2 + $0x180] sm:$0xff] %vm303, 0.0
        %354 = vst.msk [vmem:[#allocation2 + $0x188] sm:$0xff] %vm303, 0.0
        %355 = vst.msk [vmem:[#allocation2 + $0x190] sm:$0x3] %vm306, 0.0
        %356 = vst.msk [vmem:[#allocation2 + $0x198] sm:$0xff] %vm303, 0.0
        %357 = vst.msk [vmem:[#allocation2 + $0x1a0] sm:$0xff] %vm303, 0.0
        %358 = vst.msk [vmem:[#allocation2 + $0x1a8] sm:$0x3] %vm306, 0.0
        %s359 = scalar_lea.vmem [#allocation2], 24
        %360 = vst.msk [vmem:[%s359 + $0x1] sm:$0xff] %vm303, %v271
        %361 = vst.msk [vmem:[%s359 + $0x9] sm:$0xff] %vm303, %v272
        %362 = vst.msk [vmem:[%s359 + $0x19] sm:$0xff] %vm303, %v273
        %363 = vst.msk [vmem:[%s359 + $0x21] sm:$0xff] %vm303, %v274
        %364 = vst.msk [vmem:[%s359 + $0x31] sm:$0xff] %vm303, %v275
        %365 = vst.msk [vmem:[%s359 + $0x39] sm:$0xff] %vm303, %v276
        %366 = vst.msk [vmem:[%s359 + $0x49] sm:$0xff] %vm303, %v277
        %367 = vst.msk [vmem:[%s359 + $0x51] sm:$0xff] %vm303, %v278
        %368 = vst.msk [vmem:[%s359 + $0x61] sm:$0xff] %vm303, %v279
        %369 = vst.msk [vmem:[%s359 + $0x69] sm:$0xff] %vm303, %v280
        %370 = vst.msk [vmem:[%s359 + $0x79] sm:$0xff] %vm303, %v281
        %371 = vst.msk [vmem:[%s359 + $0x81] sm:$0xff] %vm303, %v282
        %372 = vst.msk [vmem:[%s359 + $0x91] sm:$0xff] %vm303, %v283
        %373 = vst.msk [vmem:[%s359 + $0x99] sm:$0xff] %vm303, %v284
        %374 = vst.msk [vmem:[%s359 + $0xa9] sm:$0xff] %vm303, %v285
        %375 = vst.msk [vmem:[%s359 + $0xb1] sm:$0xff] %vm303, %v286
        %376 = vst.msk [vmem:[%s359 + $0xc1] sm:$0xff] %vm303, %v287
        %377 = vst.msk [vmem:[%s359 + $0xc9] sm:$0xff] %vm303, %v288
        %378 = vst.msk [vmem:[%s359 + $0xd9] sm:$0xff] %vm303, %v289
        %379 = vst.msk [vmem:[%s359 + $0xe1] sm:$0xff] %vm303, %v290
        %380 = vst.msk [vmem:[%s359 + $0xf1] sm:$0xff] %vm303, %v291
        %381 = vst.msk [vmem:[%s359 + $0xf9] sm:$0xff] %vm303, %v292
        %382 = vst.msk [vmem:[%s359 + $0x109] sm:$0xff] %vm303, %v293
        %383 = vst.msk [vmem:[%s359 + $0x111] sm:$0xff] %vm303, %v294
        %384 = vst.msk [vmem:[%s359 + $0x121] sm:$0xff] %vm303, %v295
        %385 = vst.msk [vmem:[%s359 + $0x129] sm:$0xff] %vm303, %v296
        %386 = vst.msk [vmem:[%s359 + $0x139] sm:$0xff] %vm303, %v297
        %387 = vst.msk [vmem:[%s359 + $0x141] sm:$0xff] %vm303, %v298
        %388 = vst.msk [vmem:[%s359 + $0x151] sm:$0xff] %vm303, %v299
        %389 = vst.msk [vmem:[%s359 + $0x159] sm:$0xff] %vm303, %v300
        %390 = vst.msk [vmem:[%s359 + $0x169] sm:$0xff] %vm303, %v301
        %391 = vst.msk [vmem:[%s359 + $0x171] sm:$0xff] %vm303, %v302
        %v392 = vld [vmem:[#allocation2] sm:$0xff]
        %v393 = vld [vmem:[#allocation2 + $0x8] sm:$0xff]
        %v394 = vld [vmem:[#allocation2 + $0x18] sm:$0xff]
        %v395 = vld [vmem:[#allocation2 + $0x20] sm:$0xff]
        %v396 = vld [vmem:[#allocation2 + $0x30] sm:$0xff]
        %v397 = vld [vmem:[#allocation2 + $0x38] sm:$0xff]
        %v398 = vld [vmem:[#allocation2 + $0x48] sm:$0xff]
        %v399 = vld [vmem:[#allocation2 + $0x50] sm:$0xff]
        %v400 = vld [vmem:[#allocation2 + $0x60] sm:$0xff]
        %v401 = vld [vmem:[#allocation2 + $0x68] sm:$0xff]
        %v402 = vld [vmem:[#allocation2 + $0x78] sm:$0xff]
        %v403 = vld [vmem:[#allocation2 + $0x80] sm:$0xff]
        %v404 = vld [vmem:[#allocation2 + $0x90] sm:$0xff]
        %v405 = vld [vmem:[#allocation2 + $0x98] sm:$0xff]
        %v406 = vld [vmem:[#allocation2 + $0xa8] sm:$0xff]
        %v407 = vld [vmem:[#allocation2 + $0xb0] sm:$0xff]
        %v408 = vld [vmem:[#allocation2 + $0xc0] sm:$0xff]
        %v409 = vld [vmem:[#allocation2 + $0xc8] sm:$0xff]
        %v410 = vld [vmem:[#allocation2 + $0xd8] sm:$0xff]
        %v411 = vld [vmem:[#allocation2 + $0xe0] sm:$0xff]
        %v412 = vld [vmem:[#allocation2 + $0xf0] sm:$0xff]
        %v413 = vld [vmem:[#allocation2 + $0xf8] sm:$0xff]
        %v414 = vld [vmem:[#allocation2 + $0x108] sm:$0xff]
        %v415 = vld [vmem:[#allocation2 + $0x110] sm:$0xff]
        %v416 = vld [vmem:[#allocation2 + $0x120] sm:$0xff]
        %v417 = vld [vmem:[#allocation2 + $0x128] sm:$0xff]
        %v418 = vld [vmem:[#allocation2 + $0x138] sm:$0xff]
        %v419 = vld [vmem:[#allocation2 + $0x140] sm:$0xff]
        %v420 = vld [vmem:[#allocation2 + $0x150] sm:$0xff]
        %v421 = vld [vmem:[#allocation2 + $0x158] sm:$0xff]
        %v422 = vld [vmem:[#allocation2 + $0x168] sm:$0xff]
        %v423 = vld [vmem:[#allocation2 + $0x170] sm:$0xff]
        %v424 = vld [vmem:[%s1] sm:$0xf]
        %v425 = vld [vmem:[#allocation2 + $0x1] sm:$0xff]
        %v426 = vld [vmem:[#allocation2 + $0x9] sm:$0xff]
        %v427 = vld [vmem:[#allocation2 + $0x19] sm:$0xff]
        %v428 = vld [vmem:[#allocation2 + $0x21] sm:$0xff]
        %v429 = vld [vmem:[#allocation2 + $0x31] sm:$0xff]
        %v430 = vld [vmem:[#allocation2 + $0x39] sm:$0xff]
        %v431 = vld [vmem:[#allocation2 + $0x49] sm:$0xff]
        %v432 = vld [vmem:[#allocation2 + $0x51] sm:$0xff]
        %v433 = vld [vmem:[#allocation2 + $0x61] sm:$0xff]
        %v434 = vld [vmem:[#allocation2 + $0x69] sm:$0xff]
        %v435 = vld [vmem:[#allocation2 + $0x79] sm:$0xff]
        %v436 = vld [vmem:[#allocation2 + $0x81] sm:$0xff]
        %v437 = vld [vmem:[#allocation2 + $0x91] sm:$0xff]
        %v438 = vld [vmem:[#allocation2 + $0x99] sm:$0xff]
        %v439 = vld [vmem:[#allocation2 + $0xa9] sm:$0xff]
        %v440 = vld [vmem:[#allocation2 + $0xb1] sm:$0xff]
        %v441 = vld [vmem:[#allocation2 + $0xc1] sm:$0xff]
        %v442 = vld [vmem:[#allocation2 + $0xc9] sm:$0xff]
        %v443 = vld [vmem:[#allocation2 + $0xd9] sm:$0xff]
        %v444 = vld [vmem:[#allocation2 + $0xe1] sm:$0xff]
        %v445 = vld [vmem:[#allocation2 + $0xf1] sm:$0xff]
        %v446 = vld [vmem:[#allocation2 + $0xf9] sm:$0xff]
        %v447 = vld [vmem:[#allocation2 + $0x109] sm:$0xff]
        %v448 = vld [vmem:[#allocation2 + $0x111] sm:$0xff]
        %v449 = vld [vmem:[#allocation2 + $0x121] sm:$0xff]
        %v450 = vld [vmem:[#allocation2 + $0x129] sm:$0xff]
        %v451 = vld [vmem:[#allocation2 + $0x139] sm:$0xff]
        %v452 = vld [vmem:[#allocation2 + $0x141] sm:$0xff]
        %v453 = vld [vmem:[#allocation2 + $0x151] sm:$0xff]
        %v454 = vld [vmem:[#allocation2 + $0x159] sm:$0xff]
        %v455 = vld [vmem:[#allocation2 + $0x169] sm:$0xff]
        %v456 = vld [vmem:[#allocation2 + $0x171] sm:$0xff]
        %s457 = scalar_lea.vmem %s1, 4
        %v458 = vld [vmem:[%s457] sm:$0xf]
        %v460 = vsel %vm303, %v425, 0
        %v463 = vsel %vm303, %v426, 0
        %v466 = vsel %vm303, %v427, 0
        %v469 = vsel %vm303, %v428, 0
        %v472 = vsel %vm303, %v429, 0
        %v475 = vsel %vm303, %v430, 0
        %v478 = vsel %vm303, %v431, 0
        %v481 = vsel %vm303, %v432, 0
        %v484 = vsel %vm303, %v433, 0
        %v487 = vsel %vm303, %v434, 0
        %v490 = vsel %vm303, %v435, 0
        %v493 = vsel %vm303, %v436, 0
        %v496 = vsel %vm303, %v437, 0
        %v499 = vsel %vm303, %v438, 0
        %v502 = vsel %vm303, %v439, 0
        %v505 = vsel %vm303, %v440, 0
        %v508 = vsel %vm303, %v441, 0
        %v511 = vsel %vm303, %v442, 0
        %v514 = vsel %vm303, %v443, 0
        %v517 = vsel %vm303, %v444, 0
        %v520 = vsel %vm303, %v445, 0
        %v523 = vsel %vm303, %v446, 0
        %v526 = vsel %vm303, %v447, 0
        %v529 = vsel %vm303, %v448, 0
        %v532 = vsel %vm303, %v449, 0
        %v535 = vsel %vm303, %v450, 0
        %v538 = vsel %vm303, %v451, 0
        %v541 = vsel %vm303, %v452, 0
        %v544 = vsel %vm303, %v453, 0
        %v547 = vsel %vm303, %v454, 0
        %v550 = vsel %vm303, %v455, 0
        %v553 = vsel %vm303, %v456, 0
        %vm555 = vcmask 1043456
        %v557 = vsel %vm555, %v458, 0
        %559 = vmatprep.subr.mxu0 0.0
        %560 = vmatpush1.msra.mxu0 %v557
        %561 = vmatprep.subr.mxu0 0.0
        %562 = vmatpush1.msra.mxu0 0.0
        %563 = vmatprep.subr.mxu0 0.0
        %564 = vmatpush1.msra.mxu0 0.0
        %565 = vmatprep.subr.mxu0 0.0
        %566 = vmatpush1.msra.mxu0 0.0
        %567 = vmatprep.subr.mxu0 0.0
        %568 = vmatpush1.msra.mxu0 0.0
        %569 = vmatprep.subr.mxu0 0.0
        %570 = vmatpush1.msra.mxu0 0.0
        %571 = vmatprep.subr.mxu0 0.0
        %572 = vmatpush1.msra.mxu0 0.0
        %573 = vmatprep.subr.mxu0 0.0
        %574 = vmatpush1.msra.mxu0 0.0
        %575 = vmatprep.subr.mxu0 0.0
        %576 = vmatpush1.msra.mxu0 0.0
        %577 = vmatprep.subr.mxu0 0.0
        %578 = vmatpush1.msra.mxu0 0.0
        %579 = vmatprep.subr.mxu0 0.0
        %580 = vmatpush1.msra.mxu0 0.0
        %581 = vmatprep.subr.mxu0 0.0
        %582 = vmatpush1.msra.mxu0 0.0
        %583 = vmatprep.subr.mxu0 0.0
        %584 = vmatpush1.msra.mxu0 0.0
        %585 = vmatprep.subr.mxu0 0.0
        %586 = vmatpush1.msra.mxu0 0.0
        %587 = vmatprep.subr.mxu0 0.0
        %588 = vmatpush1.msra.mxu0 0.0
        %589 = vmatprep.subr.mxu0 0.0
        %590 = vmatpush1.msra.mxu0 0.0
        %591 = vmatprep.subr.mxu0 0.0
        %592 = vmatpush1.msra.mxu0 0.0
        %593 = vmatprep.subr.mxu0 0.0
        %594 = vmatpush1.msra.mxu0 0.0
        %595 = vmatprep.subr.mxu0 0.0
        %596 = vmatpush1.msra.mxu0 0.0
        %597 = vmatprep.subr.mxu0 0.0
        %598 = vmatpush1.msra.mxu0 0.0
        %599 = vmatprep.subr.mxu0 0.0
        %600 = vmatpush1.msra.mxu0 0.0
        %601 = vmatprep.subr.mxu0 0.0
        %602 = vmatpush1.msra.mxu0 0.0
        %603 = vmatprep.subr.mxu0 0.0
        %604 = vmatpush1.msra.mxu0 0.0
        %605 = vmatprep.subr.mxu0 0.0
        %606 = vmatpush1.msra.mxu0 0.0
        %607 = vmatprep.subr.mxu0 0.0
        %608 = vmatpush1.msra.mxu0 0.0
        %609 = vmatprep.subr.mxu0 0.0
        %610 = vmatpush1.msra.mxu0 0.0
        %611 = vmatprep.subr.mxu0 0.0
        %612 = vmatpush1.msra.mxu0 0.0
        %613 = vmatprep.subr.mxu0 0.0
        %614 = vmatpush1.msra.mxu0 0.0
        %615 = vmatprep.subr.mxu0 0.0
        %616 = vmatpush1.msra.mxu0 0.0
        %617 = vmatprep.subr.mxu0 0.0
        %618 = vmatpush1.msra.mxu0 0.0
        %619 = vmatprep.subr.mxu0 0.0
        %620 = vmatpush1.msra.mxu0 0.0
        %621 = vmatprep.subr.mxu0 0.0
        %622 = vmatpush1.msra.mxu0 0.0
        %623 = vmatprep.mubr.f32.mxu0 0.0
        %624 = vmatmul.mubr.f32.gmra.mrb[0].mxu0 %v460
        %v625 = vpop.f32.mrb[0].mxu0
        %v626 = vadd.f32 0.0, %v625
        %v627 = vpop.f32.mrb[0].mxu0
        %628 = vmatprep.mubr.f32.mxu0 0.0
        %629 = vmatmul.mubr.f32.gmra.mrb[0].mxu0 %v463
        %v630 = vpop.f32.mrb[0].mxu0
        %v631 = vadd.f32 0.0, %v630
        %v632 = vpop.f32.mrb[0].mxu0
        %633 = vmatprep.mubr.f32.mxu0 0.0
        %634 = vmatmul.mubr.f32.gmra.mrb[0].mxu0 %v466
        %v635 = vpop.f32.mrb[0].mxu0
        %v636 = vadd.f32 0.0, %v635
        %v637 = vpop.f32.mrb[0].mxu0
        %638 = vmatprep.mubr.f32.mxu0 0.0
        %639 = vmatmul.mubr.f32.gmra.mrb[0].mxu0 %v469
        %v640 = vpop.f32.mrb[0].mxu0
        %v641 = vadd.f32 0.0, %v640
        %v642 = vpop.f32.mrb[0].mxu0
        %643 = vmatprep.mubr.f32.mxu0 0.0
        %644 = vmatmul.mubr.f32.gmra.mrb[0].mxu0 %v472
        %v645 = vpop.f32.mrb[0].mxu0
        %v646 = vadd.f32 0.0, %v645
        %v647 = vpop.f32.mrb[0].mxu0
        %648 = vmatprep.mubr.f32.mxu0 0.0
        %649 = vmatmul.mubr.f32.gmra.mrb[0].mxu0 %v475
        %v650 = vpop.f32.mrb[0].mxu0
        %v651 = vadd.f32 0.0, %v650
        %v652 = vpop.f32.mrb[0].mxu0
        %653 = vmatprep.mubr.f32.mxu0 0.0
        %654 = vmatmul.mubr.f32.gmra.mrb[0].mxu0 %v478
        %v655 = vpop.f32.mrb[0].mxu0
        %v656 = vadd.f32 0.0, %v655
        %v657 = vpop.f32.mrb[0].mxu0
        %658 = vmatprep.mubr.f32.mxu0 0.0
        %659 = vmatmul.mubr.f32.gmra.mrb[0].mxu0 %v481
        %v660 = vpop.f32.mrb[0].mxu0
        %v661 = vadd.f32 0.0, %v660
        %v662 = vpop.f32.mrb[0].mxu0
        %663 = vmatprep.mubr.f32.mxu0 0.0
        %664 = vmatmul.mubr.f32.gmra.mrb[0].mxu0 %v484
        %v665 = vpop.f32.mrb[0].mxu0
        %v666 = vadd.f32 0.0, %v665
        %v667 = vpop.f32.mrb[0].mxu0
        %668 = vmatprep.mubr.f32.mxu0 0.0
        %669 = vmatmul.mubr.f32.gmra.mrb[0].mxu0 %v487
        %v670 = vpop.f32.mrb[0].mxu0
        %v671 = vadd.f32 0.0, %v670
        %v672 = vpop.f32.mrb[0].mxu0
        %673 = vmatprep.mubr.f32.mxu0 0.0
        %674 = vmatmul.mubr.f32.gmra.mrb[0].mxu0 %v490
        %v675 = vpop.f32.mrb[0].mxu0
        %v676 = vadd.f32 0.0, %v675
        %v677 = vpop.f32.mrb[0].mxu0
        %678 = vmatprep.mubr.f32.mxu0 0.0
        %679 = vmatmul.mubr.f32.gmra.mrb[0].mxu0 %v493
        %v680 = vpop.f32.mrb[0].mxu0
        %v681 = vadd.f32 0.0, %v680
        %v682 = vpop.f32.mrb[0].mxu0
        %683 = vmatprep.mubr.f32.mxu0 0.0
        %684 = vmatmul.mubr.f32.gmra.mrb[0].mxu0 %v496
        %v685 = vpop.f32.mrb[0].mxu0
        %v686 = vadd.f32 0.0, %v685
        %v687 = vpop.f32.mrb[0].mxu0
        %688 = vmatprep.mubr.f32.mxu0 0.0
        %689 = vmatmul.mubr.f32.gmra.mrb[0].mxu0 %v499
        %v690 = vpop.f32.mrb[0].mxu0
        %v691 = vadd.f32 0.0, %v690
        %v692 = vpop.f32.mrb[0].mxu0
        %693 = vmatprep.mubr.f32.mxu0 0.0
        %694 = vmatmul.mubr.f32.gmra.mrb[0].mxu0 %v502
        %v695 = vpop.f32.mrb[0].mxu0
        %v696 = vadd.f32 0.0, %v695
        %v697 = vpop.f32.mrb[0].mxu0
        %698 = vmatprep.mubr.f32.mxu0 0.0
        %699 = vmatmul.mubr.f32.gmra.mrb[0].mxu0 %v505
        %v700 = vpop.f32.mrb[0].mxu0
        %v701 = vadd.f32 0.0, %v700
        %v702 = vpop.f32.mrb[0].mxu0
        %703 = vmatprep.mubr.f32.mxu0 0.0
        %704 = vmatmul.mubr.f32.gmra.mrb[0].mxu0 %v508
        %v705 = vpop.f32.mrb[0].mxu0
        %v706 = vadd.f32 0.0, %v705
        %v707 = vpop.f32.mrb[0].mxu0
        %708 = vmatprep.mubr.f32.mxu0 0.0
        %709 = vmatmul.mubr.f32.gmra.mrb[0].mxu0 %v511
        %v710 = vpop.f32.mrb[0].mxu0
        %v711 = vadd.f32 0.0, %v710
        %v712 = vpop.f32.mrb[0].mxu0
        %713 = vmatprep.mubr.f32.mxu0 0.0
        %714 = vmatmul.mubr.f32.gmra.mrb[0].mxu0 %v514
        %v715 = vpop.f32.mrb[0].mxu0
        %v716 = vadd.f32 0.0, %v715
        %v717 = vpop.f32.mrb[0].mxu0
        %718 = vmatprep.mubr.f32.mxu0 0.0
        %719 = vmatmul.mubr.f32.gmra.mrb[0].mxu0 %v517
        %v720 = vpop.f32.mrb[0].mxu0
        %v721 = vadd.f32 0.0, %v720
        %v722 = vpop.f32.mrb[0].mxu0
        %723 = vmatprep.mubr.f32.mxu0 0.0
        %724 = vmatmul.mubr.f32.gmra.mrb[0].mxu0 %v520
        %v725 = vpop.f32.mrb[0].mxu0
        %v726 = vadd.f32 0.0, %v725
        %v727 = vpop.f32.mrb[0].mxu0
        %728 = vmatprep.mubr.f32.mxu0 0.0
        %729 = vmatmul.mubr.f32.gmra.mrb[0].mxu0 %v523
        %v730 = vpop.f32.mrb[0].mxu0
        %v731 = vadd.f32 0.0, %v730
        %v732 = vpop.f32.mrb[0].mxu0
        %733 = vmatprep.mubr.f32.mxu0 0.0
        %734 = vmatmul.mubr.f32.gmra.mrb[0].mxu0 %v526
        %v735 = vpop.f32.mrb[0].mxu0
        %v736 = vadd.f32 0.0, %v735
        %v737 = vpop.f32.mrb[0].mxu0
        %738 = vmatprep.mubr.f32.mxu0 0.0
        %739 = vmatmul.mubr.f32.gmra.mrb[0].mxu0 %v529
        %v740 = vpop.f32.mrb[0].mxu0
        %v741 = vadd.f32 0.0, %v740
        %v742 = vpop.f32.mrb[0].mxu0
        %743 = vmatprep.mubr.f32.mxu0 0.0
        %744 = vmatmul.mubr.f32.gmra.mrb[0].mxu0 %v532
        %v745 = vpop.f32.mrb[0].mxu0
        %v746 = vadd.f32 0.0, %v745
        %v747 = vpop.f32.mrb[0].mxu0
        %748 = vmatprep.mubr.f32.mxu0 0.0
        %749 = vmatmul.mubr.f32.gmra.mrb[0].mxu0 %v535
        %v750 = vpop.f32.mrb[0].mxu0
        %v751 = vadd.f32 0.0, %v750
        %v752 = vpop.f32.mrb[0].mxu0
        %753 = vmatprep.mubr.f32.mxu0 0.0
        %754 = vmatmul.mubr.f32.gmra.mrb[0].mxu0 %v538
        %v755 = vpop.f32.mrb[0].mxu0
        %v756 = vadd.f32 0.0, %v755
        %v757 = vpop.f32.mrb[0].mxu0
        %758 = vmatprep.mubr.f32.mxu0 0.0
        %759 = vmatmul.mubr.f32.gmra.mrb[0].mxu0 %v541
        %v760 = vpop.f32.mrb[0].mxu0
        %v761 = vadd.f32 0.0, %v760
        %v762 = vpop.f32.mrb[0].mxu0
        %763 = vmatprep.mubr.f32.mxu0 0.0
        %764 = vmatmul.mubr.f32.gmra.mrb[0].mxu0 %v544
        %v765 = vpop.f32.mrb[0].mxu0
        %v766 = vadd.f32 0.0, %v765
        %v767 = vpop.f32.mrb[0].mxu0
        %768 = vmatprep.mubr.f32.mxu0 0.0
        %769 = vmatmul.mubr.f32.gmra.mrb[0].mxu0 %v547
        %v770 = vpop.f32.mrb[0].mxu0
        %v771 = vadd.f32 0.0, %v770
        %v772 = vpop.f32.mrb[0].mxu0
        %773 = vmatprep.mubr.f32.mxu0 0.0
        %774 = vmatmul.mubr.f32.gmra.mrb[0].mxu0 %v550
        %v775 = vpop.f32.mrb[0].mxu0
        %v776 = vadd.f32 0.0, %v775
        %v777 = vpop.f32.mrb[0].mxu0
        %778 = vmatprep.mubr.f32.mxu0 0.0
        %779 = vmatmul.mubr.f32.gmra.mrb[0].mxu0 %v553
        %v780 = vpop.f32.mrb[0].mxu0
        %v781 = vadd.f32 0.0, %v780
        %v782 = vpop.f32.mrb[0].mxu0
        %783 = vdwg.mxu0
        %v785 = vsel %vm303, %v392, 0
        %v788 = vsel %vm303, %v393, 0
        %v791 = vsel %vm303, %v394, 0
        %v794 = vsel %vm303, %v395, 0
        %v797 = vsel %vm303, %v396, 0
        %v800 = vsel %vm303, %v397, 0
        %v803 = vsel %vm303, %v398, 0
        %v806 = vsel %vm303, %v399, 0
        %v809 = vsel %vm303, %v400, 0
        %v812 = vsel %vm303, %v401, 0
        %v815 = vsel %vm303, %v402, 0
        %v818 = vsel %vm303, %v403, 0
        %v821 = vsel %vm303, %v404, 0
        %v824 = vsel %vm303, %v405, 0
        %v827 = vsel %vm303, %v406, 0
        %v830 = vsel %vm303, %v407, 0
        %v833 = vsel %vm303, %v408, 0
        %v836 = vsel %vm303, %v409, 0
        %v839 = vsel %vm303, %v410, 0
        %v842 = vsel %vm303, %v411, 0
        %v845 = vsel %vm303, %v412, 0
        %v848 = vsel %vm303, %v413, 0
        %v851 = vsel %vm303, %v414, 0
        %v854 = vsel %vm303, %v415, 0
        %v857 = vsel %vm303, %v416, 0
        %v860 = vsel %vm303, %v417, 0
        %v863 = vsel %vm303, %v418, 0
        %v866 = vsel %vm303, %v419, 0
        %v869 = vsel %vm303, %v420, 0
        %v872 = vsel %vm303, %v421, 0
        %v875 = vsel %vm303, %v422, 0
        %v878 = vsel %vm303, %v423, 0
        %v881 = vsel %vm555, %v424, 0
        %883 = vmatprep.subr.mxu0 0.0
        %884 = vmatpush1.msra.mxu0 %v881
        %885 = vmatprep.subr.mxu0 0.0
        %886 = vmatpush1.msra.mxu0 0.0
        %887 = vmatprep.subr.mxu0 0.0
        %888 = vmatpush1.msra.mxu0 0.0
        %889 = vmatprep.subr.mxu0 0.0
        %890 = vmatpush1.msra.mxu0 0.0
        %891 = vmatprep.subr.mxu0 0.0
        %892 = vmatpush1.msra.mxu0 0.0
        %893 = vmatprep.subr.mxu0 0.0
        %894 = vmatpush1.msra.mxu0 0.0
        %895 = vmatprep.subr.mxu0 0.0
        %896 = vmatpush1.msra.mxu0 0.0
        %897 = vmatprep.subr.mxu0 0.0
        %898 = vmatpush1.msra.mxu0 0.0
        %899 = vmatprep.subr.mxu0 0.0
        %900 = vmatpush1.msra.mxu0 0.0
        %901 = vmatprep.subr.mxu0 0.0
        %902 = vmatpush1.msra.mxu0 0.0
        %903 = vmatprep.subr.mxu0 0.0
        %904 = vmatpush1.msra.mxu0 0.0
        %905 = vmatprep.subr.mxu0 0.0
        %906 = vmatpush1.msra.mxu0 0.0
        %907 = vmatprep.subr.mxu0 0.0
        %908 = vmatpush1.msra.mxu0 0.0
        %909 = vmatprep.subr.mxu0 0.0
        %910 = vmatpush1.msra.mxu0 0.0
        %911 = vmatprep.subr.mxu0 0.0
        %912 = vmatpush1.msra.mxu0 0.0
        %913 = vmatprep.subr.mxu0 0.0
        %914 = vmatpush1.msra.mxu0 0.0
        %915 = vmatprep.subr.mxu0 0.0
        %916 = vmatpush1.msra.mxu0 0.0
        %917 = vmatprep.subr.mxu0 0.0
        %918 = vmatpush1.msra.mxu0 0.0
        %919 = vmatprep.subr.mxu0 0.0
        %920 = vmatpush1.msra.mxu0 0.0
        %921 = vmatprep.subr.mxu0 0.0
        %922 = vmatpush1.msra.mxu0 0.0
        %923 = vmatprep.subr.mxu0 0.0
        %924 = vmatpush1.msra.mxu0 0.0
        %925 = vmatprep.subr.mxu0 0.0
        %926 = vmatpush1.msra.mxu0 0.0
        %927 = vmatprep.subr.mxu0 0.0
        %928 = vmatpush1.msra.mxu0 0.0
        %929 = vmatprep.subr.mxu0 0.0
        %930 = vmatpush1.msra.mxu0 0.0
        %931 = vmatprep.subr.mxu0 0.0
        %932 = vmatpush1.msra.mxu0 0.0
        %933 = vmatprep.subr.mxu0 0.0
        %934 = vmatpush1.msra.mxu0 0.0
        %935 = vmatprep.subr.mxu0 0.0
        %936 = vmatpush1.msra.mxu0 0.0
        %937 = vmatprep.subr.mxu0 0.0
        %938 = vmatpush1.msra.mxu0 0.0
        %939 = vmatprep.subr.mxu0 0.0
        %940 = vmatpush1.msra.mxu0 0.0
        %941 = vmatprep.subr.mxu0 0.0
        %942 = vmatpush1.msra.mxu0 0.0
        %943 = vmatprep.subr.mxu0 0.0
        %944 = vmatpush1.msra.mxu0 0.0
        %945 = vmatprep.subr.mxu0 0.0
        %946 = vmatpush1.msra.mxu0 0.0
        %947 = vmatprep.mubr.f32.mxu0 0.0
        %948 = vmatmul.mubr.f32.gmra.mrb[0].mxu0 %v785
        %v949 = vpop.f32.mrb[0].mxu0
        %v950 = vadd.f32 %v626, %v949
        %v951 = vpop.f32.mrb[0].mxu0
        %952 = vmatprep.mubr.f32.mxu0 0.0
        %953 = vmatmul.mubr.f32.gmra.mrb[0].mxu0 %v788
        %v954 = vpop.f32.mrb[0].mxu0
        %v955 = vadd.f32 %v631, %v954
        %v956 = vpop.f32.mrb[0].mxu0
        %957 = vmatprep.mubr.f32.mxu0 0.0
        %958 = vmatmul.mubr.f32.gmra.mrb[0].mxu0 %v791
        %v959 = vpop.f32.mrb[0].mxu0
        %v960 = vadd.f32 %v636, %v959
        %v961 = vpop.f32.mrb[0].mxu0
        %962 = vmatprep.mubr.f32.mxu0 0.0
        %963 = vmatmul.mubr.f32.gmra.mrb[0].mxu0 %v794
        %v964 = vpop.f32.mrb[0].mxu0
        %v965 = vadd.f32 %v641, %v964
        %v966 = vpop.f32.mrb[0].mxu0
        %967 = vmatprep.mubr.f32.mxu0 0.0
        %968 = vmatmul.mubr.f32.gmra.mrb[0].mxu0 %v797
        %v969 = vpop.f32.mrb[0].mxu0
        %v970 = vadd.f32 %v646, %v969
        %v971 = vpop.f32.mrb[0].mxu0
        %972 = vmatprep.mubr.f32.mxu0 0.0
        %973 = vmatmul.mubr.f32.gmra.mrb[0].mxu0 %v800
        %v974 = vpop.f32.mrb[0].mxu0
        %v975 = vadd.f32 %v651, %v974
        %v976 = vpop.f32.mrb[0].mxu0
        %977 = vmatprep.mubr.f32.mxu0 0.0
        %978 = vmatmul.mubr.f32.gmra.mrb[0].mxu0 %v803
        %v979 = vpop.f32.mrb[0].mxu0
        %v980 = vadd.f32 %v656, %v979
        %v981 = vpop.f32.mrb[0].mxu0
        %982 = vmatprep.mubr.f32.mxu0 0.0
        %983 = vmatmul.mubr.f32.gmra.mrb[0].mxu0 %v806
        %v984 = vpop.f32.mrb[0].mxu0
        %v985 = vadd.f32 %v661, %v984
        %v986 = vpop.f32.mrb[0].mxu0
        %987 = vmatprep.mubr.f32.mxu0 0.0
        %988 = vmatmul.mubr.f32.gmra.mrb[0].mxu0 %v809
        %v989 = vpop.f32.mrb[0].mxu0
        %v990 = vadd.f32 %v666, %v989
        %v991 = vpop.f32.mrb[0].mxu0
        %992 = vmatprep.mubr.f32.mxu0 0.0
        %993 = vmatmul.mubr.f32.gmra.mrb[0].mxu0 %v812
        %v994 = vpop.f32.mrb[0].mxu0
        %v995 = vadd.f32 %v671, %v994
        %v996 = vpop.f32.mrb[0].mxu0
        %997 = vmatprep.mubr.f32.mxu0 0.0
        %998 = vmatmul.mubr.f32.gmra.mrb[0].mxu0 %v815
        %v999 = vpop.f32.mrb[0].mxu0
        %v1000 = vadd.f32 %v676, %v999
        %v1001 = vpop.f32.mrb[0].mxu0
        %1002 = vmatprep.mubr.f32.mxu0 0.0
        %1003 = vmatmul.mubr.f32.gmra.mrb[0].mxu0 %v818
        %v1004 = vpop.f32.mrb[0].mxu0
        %v1005 = vadd.f32 %v681, %v1004
        %v1006 = vpop.f32.mrb[0].mxu0
        %1007 = vmatprep.mubr.f32.mxu0 0.0
        %1008 = vmatmul.mubr.f32.gmra.mrb[0].mxu0 %v821
        %v1009 = vpop.f32.mrb[0].mxu0
        %v1010 = vadd.f32 %v686, %v1009
        %v1011 = vpop.f32.mrb[0].mxu0
        %1012 = vmatprep.mubr.f32.mxu0 0.0
        %1013 = vmatmul.mubr.f32.gmra.mrb[0].mxu0 %v824
        %v1014 = vpop.f32.mrb[0].mxu0
        %v1015 = vadd.f32 %v691, %v1014
        %v1016 = vpop.f32.mrb[0].mxu0
        %1017 = vmatprep.mubr.f32.mxu0 0.0
        %1018 = vmatmul.mubr.f32.gmra.mrb[0].mxu0 %v827
        %v1019 = vpop.f32.mrb[0].mxu0
        %v1020 = vadd.f32 %v696, %v1019
        %v1021 = vpop.f32.mrb[0].mxu0
        %1022 = vmatprep.mubr.f32.mxu0 0.0
        %1023 = vmatmul.mubr.f32.gmra.mrb[0].mxu0 %v830
        %v1024 = vpop.f32.mrb[0].mxu0
        %v1025 = vadd.f32 %v701, %v1024
        %v1026 = vpop.f32.mrb[0].mxu0
        %1027 = vmatprep.mubr.f32.mxu0 0.0
        %1028 = vmatmul.mubr.f32.gmra.mrb[0].mxu0 %v833
        %v1029 = vpop.f32.mrb[0].mxu0
        %v1030 = vadd.f32 %v706, %v1029
        %v1031 = vpop.f32.mrb[0].mxu0
        %1032 = vmatprep.mubr.f32.mxu0 0.0
        %1033 = vmatmul.mubr.f32.gmra.mrb[0].mxu0 %v836
        %v1034 = vpop.f32.mrb[0].mxu0
        %v1035 = vadd.f32 %v711, %v1034
        %v1036 = vpop.f32.mrb[0].mxu0
        %1037 = vmatprep.mubr.f32.mxu0 0.0
        %1038 = vmatmul.mubr.f32.gmra.mrb[0].mxu0 %v839
        %v1039 = vpop.f32.mrb[0].mxu0
        %v1040 = vadd.f32 %v716, %v1039
        %v1041 = vpop.f32.mrb[0].mxu0
        %1042 = vmatprep.mubr.f32.mxu0 0.0
        %1043 = vmatmul.mubr.f32.gmra.mrb[0].mxu0 %v842
        %v1044 = vpop.f32.mrb[0].mxu0
        %v1045 = vadd.f32 %v721, %v1044
        %v1046 = vpop.f32.mrb[0].mxu0
        %1047 = vmatprep.mubr.f32.mxu0 0.0
        %1048 = vmatmul.mubr.f32.gmra.mrb[0].mxu0 %v845
        %v1049 = vpop.f32.mrb[0].mxu0
        %v1050 = vadd.f32 %v726, %v1049
        %v1051 = vpop.f32.mrb[0].mxu0
        %1052 = vmatprep.mubr.f32.mxu0 0.0
        %1053 = vmatmul.mubr.f32.gmra.mrb[0].mxu0 %v848
        %v1054 = vpop.f32.mrb[0].mxu0
        %v1055 = vadd.f32 %v731, %v1054
        %v1056 = vpop.f32.mrb[0].mxu0
        %1057 = vmatprep.mubr.f32.mxu0 0.0
        %1058 = vmatmul.mubr.f32.gmra.mrb[0].mxu0 %v851
        %v1059 = vpop.f32.mrb[0].mxu0
        %v1060 = vadd.f32 %v736, %v1059
        %v1061 = vpop.f32.mrb[0].mxu0
        %1062 = vmatprep.mubr.f32.mxu0 0.0
        %1063 = vmatmul.mubr.f32.gmra.mrb[0].mxu0 %v854
        %v1064 = vpop.f32.mrb[0].mxu0
        %v1065 = vadd.f32 %v741, %v1064
        %v1066 = vpop.f32.mrb[0].mxu0
        %1067 = vmatprep.mubr.f32.mxu0 0.0
        %1068 = vmatmul.mubr.f32.gmra.mrb[0].mxu0 %v857
        %v1069 = vpop.f32.mrb[0].mxu0
        %v1070 = vadd.f32 %v746, %v1069
        %v1071 = vpop.f32.mrb[0].mxu0
        %1072 = vmatprep.mubr.f32.mxu0 0.0
        %1073 = vmatmul.mubr.f32.gmra.mrb[0].mxu0 %v860
        %v1074 = vpop.f32.mrb[0].mxu0
        %v1075 = vadd.f32 %v751, %v1074
        %v1076 = vpop.f32.mrb[0].mxu0
        %1077 = vmatprep.mubr.f32.mxu0 0.0
        %1078 = vmatmul.mubr.f32.gmra.mrb[0].mxu0 %v863
        %v1079 = vpop.f32.mrb[0].mxu0
        %v1080 = vadd.f32 %v756, %v1079
        %v1081 = vpop.f32.mrb[0].mxu0
        %1082 = vmatprep.mubr.f32.mxu0 0.0
        %1083 = vmatmul.mubr.f32.gmra.mrb[0].mxu0 %v866
        %v1084 = vpop.f32.mrb[0].mxu0
        %v1085 = vadd.f32 %v761, %v1084
        %v1086 = vpop.f32.mrb[0].mxu0
        %1087 = vmatprep.mubr.f32.mxu0 0.0
        %1088 = vmatmul.mubr.f32.gmra.mrb[0].mxu0 %v869
        %v1089 = vpop.f32.mrb[0].mxu0
        %v1090 = vadd.f32 %v766, %v1089
        %v1091 = vpop.f32.mrb[0].mxu0
        %1092 = vmatprep.mubr.f32.mxu0 0.0
        %1093 = vmatmul.mubr.f32.gmra.mrb[0].mxu0 %v872
        %v1094 = vpop.f32.mrb[0].mxu0
        %v1095 = vadd.f32 %v771, %v1094
        %v1096 = vpop.f32.mrb[0].mxu0
        %1097 = vmatprep.mubr.f32.mxu0 0.0
        %1098 = vmatmul.mubr.f32.gmra.mrb[0].mxu0 %v875
        %v1099 = vpop.f32.mrb[0].mxu0
        %v1100 = vadd.f32 %v776, %v1099
        %v1101 = vpop.f32.mrb[0].mxu0
        %1102 = vmatprep.mubr.f32.mxu0 0.0
        %1103 = vmatmul.mubr.f32.gmra.mrb[0].mxu0 %v878
        %v1104 = vpop.f32.mrb[0].mxu0
        %v1105 = vadd.f32 %v781, %v1104
        %v1106 = vpop.f32.mrb[0].mxu0
        %1107 = vdwg.mxu0
        %v1108 = vld [vmem:[#allocation2 + $0x2] sm:$0xff]
        %v1109 = vld [vmem:[#allocation2 + $0xa] sm:$0xff]
        %v1110 = vld [vmem:[#allocation2 + $0x1a] sm:$0xff]
        %v1111 = vld [vmem:[#allocation2 + $0x22] sm:$0xff]
        %v1112 = vld [vmem:[#allocation2 + $0x32] sm:$0xff]
        %v1113 = vld [vmem:[#allocation2 + $0x3a] sm:$0xff]
        %v1114 = vld [vmem:[#allocation2 + $0x4a] sm:$0xff]
        %v1115 = vld [vmem:[#allocation2 + $0x52] sm:$0xff]
        %v1116 = vld [vmem:[#allocation2 + $0x62] sm:$0xff]
        %v1117 = vld [vmem:[#allocation2 + $0x6a] sm:$0xff]
        %v1118 = vld [vmem:[#allocation2 + $0x7a] sm:$0xff]
        %v1119 = vld [vmem:[#allocation2 + $0x82] sm:$0xff]
        %v1120 = vld [vmem:[#allocation2 + $0x92] sm:$0xff]
        %v1121 = vld [vmem:[#allocation2 + $0x9a] sm:$0xff]
        %v1122 = vld [vmem:[#allocation2 + $0xaa] sm:$0xff]
        %v1123 = vld [vmem:[#allocation2 + $0xb2] sm:$0xff]
        %v1124 = vld [vmem:[#allocation2 + $0xc2] sm:$0xff]
        %v1125 = vld [vmem:[#allocation2 + $0xca] sm:$0xff]
        %v1126 = vld [vmem:[#allocation2 + $0xda] sm:$0xff]
        %v1127 = vld [vmem:[#allocation2 + $0xe2] sm:$0xff]
        %v1128 = vld [vmem:[#allocation2 + $0xf2] sm:$0xff]
        %v1129 = vld [vmem:[#allocation2 + $0xfa] sm:$0xff]
        %v1130 = vld [vmem:[#allocation2 + $0x10a] sm:$0xff]
        %v1131 = vld [vmem:[#allocation2 + $0x112] sm:$0xff]
        %v1132 = vld [vmem:[#allocation2 + $0x122] sm:$0xff]
        %v1133 = vld [vmem:[#allocation2 + $0x12a] sm:$0xff]
        %v1134 = vld [vmem:[#allocation2 + $0x13a] sm:$0xff]
        %v1135 = vld [vmem:[#allocation2 + $0x142] sm:$0xff]
        %v1136 = vld [vmem:[#allocation2 + $0x152] sm:$0xff]
        %v1137 = vld [vmem:[#allocation2 + $0x15a] sm:$0xff]
        %v1138 = vld [vmem:[#allocation2 + $0x16a] sm:$0xff]
        %v1139 = vld [vmem:[#allocation2 + $0x172] sm:$0xff]
        %s1140 = scalar_lea.vmem %s1, 8
        %v1141 = vld [vmem:[%s1140] sm:$0xf]
        %v1143 = vsel %vm303, %v1108, 0
        %v1146 = vsel %vm303, %v1109, 0
        %v1149 = vsel %vm303, %v1110, 0
        %v1152 = vsel %vm303, %v1111, 0
        %v1155 = vsel %vm303, %v1112, 0
        %v1158 = vsel %vm303, %v1113, 0
        %v1161 = vsel %vm303, %v1114, 0
        %v1164 = vsel %vm303, %v1115, 0
        %v1167 = vsel %vm303, %v1116, 0
        %v1170 = vsel %vm303, %v1117, 0
        %v1173 = vsel %vm303, %v1118, 0
        %v1176 = vsel %vm303, %v1119, 0
        %v1179 = vsel %vm303, %v1120, 0
        %v1182 = vsel %vm303, %v1121, 0
        %v1185 = vsel %vm303, %v1122, 0
        %v1188 = vsel %vm303, %v1123, 0
        %v1191 = vsel %vm303, %v1124, 0
        %v1194 = vsel %vm303, %v1125, 0
        %v1197 = vsel %vm303, %v1126, 0
        %v1200 = vsel %vm303, %v1127, 0
        %v1203 = vsel %vm303, %v1128, 0
        %v1206 = vsel %vm303, %v1129, 0
        %v1209 = vsel %vm303, %v1130, 0
        %v1212 = vsel %vm303, %v1131, 0
        %v1215 = vsel %vm303, %v1132, 0
        %v1218 = vsel %vm303, %v1133, 0
        %v1221 = vsel %vm303, %v1134, 0
        %v1224 = vsel %vm303, %v1135, 0
        %v1227 = vsel %vm303, %v1136, 0
        %v1230 = vsel %vm303, %v1137, 0
        %v1233 = vsel %vm303, %v1138, 0
        %v1236 = vsel %vm303, %v1139, 0
        %v1239 = vsel %vm555, %v1141, 0
        %1241 = vmatprep.subr.mxu0 0.0
        %1242 = vmatpush1.msra.mxu0 %v1239
        %1243 = vmatprep.subr.mxu0 0.0
        %1244 = vmatpush1.msra.mxu0 0.0
        %1245 = vmatprep.subr.mxu0 0.0
        %1246 = vmatpush1.msra.mxu0 0.0
        %1247 = vmatprep.subr.mxu0 0.0
        %1248 = vmatpush1.msra.mxu0 0.0
        %1249 = vmatprep.subr.mxu0 0.0
        %1250 = vmatpush1.msra.mxu0 0.0
        %1251 = vmatprep.subr.mxu0 0.0
        %1252 = vmatpush1.msra.mxu0 0.0
        %1253 = vmatprep.subr.mxu0 0.0
        %1254 = vmatpush1.msra.mxu0 0.0
        %1255 = vmatprep.subr.mxu0 0.0
        %1256 = vmatpush1.msra.mxu0 0.0
        %1257 = vmatprep.subr.mxu0 0.0
        %1258 = vmatpush1.msra.mxu0 0.0
        %1259 = vmatprep.subr.mxu0 0.0
        %1260 = vmatpush1.msra.mxu0 0.0
        %1261 = vmatprep.subr.mxu0 0.0
        %1262 = vmatpush1.msra.mxu0 0.0
        %1263 = vmatprep.subr.mxu0 0.0
        %1264 = vmatpush1.msra.mxu0 0.0
        %1265 = vmatprep.subr.mxu0 0.0
        %1266 = vmatpush1.msra.mxu0 0.0
        %1267 = vmatprep.subr.mxu0 0.0
        %1268 = vmatpush1.msra.mxu0 0.0
        %1269 = vmatprep.subr.mxu0 0.0
        %1270 = vmatpush1.msra.mxu0 0.0
        %1271 = vmatprep.subr.mxu0 0.0
        %1272 = vmatpush1.msra.mxu0 0.0
        %1273 = vmatprep.subr.mxu0 0.0
        %1274 = vmatpush1.msra.mxu0 0.0
        %1275 = vmatprep.subr.mxu0 0.0
        %1276 = vmatpush1.msra.mxu0 0.0
        %1277 = vmatprep.subr.mxu0 0.0
        %1278 = vmatpush1.msra.mxu0 0.0
        %1279 = vmatprep.subr.mxu0 0.0
        %1280 = vmatpush1.msra.mxu0 0.0
        %1281 = vmatprep.subr.mxu0 0.0
        %1282 = vmatpush1.msra.mxu0 0.0
        %1283 = vmatprep.subr.mxu0 0.0
        %1284 = vmatpush1.msra.mxu0 0.0
        %1285 = vmatprep.subr.mxu0 0.0
        %1286 = vmatpush1.msra.mxu0 0.0
        %1287 = vmatprep.subr.mxu0 0.0
        %1288 = vmatpush1.msra.mxu0 0.0
        %1289 = vmatprep.subr.mxu0 0.0
        %1290 = vmatpush1.msra.mxu0 0.0
        %1291 = vmatprep.subr.mxu0 0.0
        %1292 = vmatpush1.msra.mxu0 0.0
        %1293 = vmatprep.subr.mxu0 0.0
        %1294 = vmatpush1.msra.mxu0 0.0
        %1295 = vmatprep.subr.mxu0 0.0
        %1296 = vmatpush1.msra.mxu0 0.0
        %1297 = vmatprep.subr.mxu0 0.0
        %1298 = vmatpush1.msra.mxu0 0.0
        %1299 = vmatprep.subr.mxu0 0.0
        %1300 = vmatpush1.msra.mxu0 0.0
        %1301 = vmatprep.subr.mxu0 0.0
        %1302 = vmatpush1.msra.mxu0 0.0
        %1303 = vmatprep.subr.mxu0 0.0
        %1304 = vmatpush1.msra.mxu0 0.0
        %1305 = vmatprep.mubr.f32.mxu0 0.0
        %1306 = vmatmul.mubr.f32.gmra.mrb[0].mxu0 %v1143
        %v1307 = vpop.f32.mrb[0].mxu0
        %v1308 = vadd.f32 0.0, %v1307
        %v1309 = vpop.f32.mrb[0].mxu0
        %1310 = vmatprep.mubr.f32.mxu0 0.0
        %1311 = vmatmul.mubr.f32.gmra.mrb[0].mxu0 %v1146
        %v1312 = vpop.f32.mrb[0].mxu0
        %v1313 = vadd.f32 0.0, %v1312
        %v1314 = vpop.f32.mrb[0].mxu0
        %1315 = vmatprep.mubr.f32.mxu0 0.0
        %1316 = vmatmul.mubr.f32.gmra.mrb[0].mxu0 %v1149
        %v1317 = vpop.f32.mrb[0].mxu0
        %v1318 = vadd.f32 0.0, %v1317
        %v1319 = vpop.f32.mrb[0].mxu0
        %1320 = vmatprep.mubr.f32.mxu0 0.0
        %1321 = vmatmul.mubr.f32.gmra.mrb[0].mxu0 %v1152
        %v1322 = vpop.f32.mrb[0].mxu0
        %v1323 = vadd.f32 0.0, %v1322
        %v1324 = vpop.f32.mrb[0].mxu0
        %1325 = vmatprep.mubr.f32.mxu0 0.0
        %1326 = vmatmul.mubr.f32.gmra.mrb[0].mxu0 %v1155
        %v1327 = vpop.f32.mrb[0].mxu0
        %v1328 = vadd.f32 0.0, %v1327
        %v1329 = vpop.f32.mrb[0].mxu0
        %1330 = vmatprep.mubr.f32.mxu0 0.0
        %1331 = vmatmul.mubr.f32.gmra.mrb[0].mxu0 %v1158
        %v1332 = vpop.f32.mrb[0].mxu0
        %v1333 = vadd.f32 0.0, %v1332
        %v1334 = vpop.f32.mrb[0].mxu0
        %1335 = vmatprep.mubr.f32.mxu0 0.0
        %1336 = vmatmul.mubr.f32.gmra.mrb[0].mxu0 %v1161
        %v1337 = vpop.f32.mrb[0].mxu0
        %v1338 = vadd.f32 0.0, %v1337
        %v1339 = vpop.f32.mrb[0].mxu0
        %1340 = vmatprep.mubr.f32.mxu0 0.0
        %1341 = vmatmul.mubr.f32.gmra.mrb[0].mxu0 %v1164
        %v1342 = vpop.f32.mrb[0].mxu0
        %v1343 = vadd.f32 0.0, %v1342
        %v1344 = vpop.f32.mrb[0].mxu0
        %1345 = vmatprep.mubr.f32.mxu0 0.0
        %1346 = vmatmul.mubr.f32.gmra.mrb[0].mxu0 %v1167
        %v1347 = vpop.f32.mrb[0].mxu0
        %v1348 = vadd.f32 0.0, %v1347
        %v1349 = vpop.f32.mrb[0].mxu0
        %1350 = vmatprep.mubr.f32.mxu0 0.0
        %1351 = vmatmul.mubr.f32.gmra.mrb[0].mxu0 %v1170
        %v1352 = vpop.f32.mrb[0].mxu0
        %v1353 = vadd.f32 0.0, %v1352
        %v1354 = vpop.f32.mrb[0].mxu0
        %1355 = vmatprep.mubr.f32.mxu0 0.0
        %1356 = vmatmul.mubr.f32.gmra.mrb[0].mxu0 %v1173
        %v1357 = vpop.f32.mrb[0].mxu0
        %v1358 = vadd.f32 0.0, %v1357
        %v1359 = vpop.f32.mrb[0].mxu0
        %1360 = vmatprep.mubr.f32.mxu0 0.0
        %1361 = vmatmul.mubr.f32.gmra.mrb[0].mxu0 %v1176
        %v1362 = vpop.f32.mrb[0].mxu0
        %v1363 = vadd.f32 0.0, %v1362
        %v1364 = vpop.f32.mrb[0].mxu0
        %1365 = vmatprep.mubr.f32.mxu0 0.0
        %1366 = vmatmul.mubr.f32.gmra.mrb[0].mxu0 %v1179
        %v1367 = vpop.f32.mrb[0].mxu0
        %v1368 = vadd.f32 0.0, %v1367
        %v1369 = vpop.f32.mrb[0].mxu0
        %1370 = vmatprep.mubr.f32.mxu0 0.0
        %1371 = vmatmul.mubr.f32.gmra.mrb[0].mxu0 %v1182
        %v1372 = vpop.f32.mrb[0].mxu0
        %v1373 = vadd.f32 0.0, %v1372
        %v1374 = vpop.f32.mrb[0].mxu0
        %1375 = vmatprep.mubr.f32.mxu0 0.0
        %1376 = vmatmul.mubr.f32.gmra.mrb[0].mxu0 %v1185
        %v1377 = vpop.f32.mrb[0].mxu0
        %v1378 = vadd.f32 0.0, %v1377
        %v1379 = vpop.f32.mrb[0].mxu0
        %1380 = vmatprep.mubr.f32.mxu0 0.0
        %1381 = vmatmul.mubr.f32.gmra.mrb[0].mxu0 %v1188
        %v1382 = vpop.f32.mrb[0].mxu0
        %v1383 = vadd.f32 0.0, %v1382
        %v1384 = vpop.f32.mrb[0].mxu0
        %1385 = vmatprep.mubr.f32.mxu0 0.0
        %1386 = vmatmul.mubr.f32.gmra.mrb[0].mxu0 %v1191
        %v1387 = vpop.f32.mrb[0].mxu0
        %v1388 = vadd.f32 0.0, %v1387
        %v1389 = vpop.f32.mrb[0].mxu0
        %1390 = vmatprep.mubr.f32.mxu0 0.0
        %1391 = vmatmul.mubr.f32.gmra.mrb[0].mxu0 %v1194
        %v1392 = vpop.f32.mrb[0].mxu0
        %v1393 = vadd.f32 0.0, %v1392
        %v1394 = vpop.f32.mrb[0].mxu0
        %1395 = vmatprep.mubr.f32.mxu0 0.0
        %1396 = vmatmul.mubr.f32.gmra.mrb[0].mxu0 %v1197
        %v1397 = vpop.f32.mrb[0].mxu0
        %v1398 = vadd.f32 0.0, %v1397
        %v1399 = vpop.f32.mrb[0].mxu0
        %1400 = vmatprep.mubr.f32.mxu0 0.0
        %1401 = vmatmul.mubr.f32.gmra.mrb[0].mxu0 %v1200
        %v1402 = vpop.f32.mrb[0].mxu0
        %v1403 = vadd.f32 0.0, %v1402
        %v1404 = vpop.f32.mrb[0].mxu0
        %1405 = vmatprep.mubr.f32.mxu0 0.0
        %1406 = vmatmul.mubr.f32.gmra.mrb[0].mxu0 %v1203
        %v1407 = vpop.f32.mrb[0].mxu0
        %v1408 = vadd.f32 0.0, %v1407
        %v1409 = vpop.f32.mrb[0].mxu0
        %1410 = vmatprep.mubr.f32.mxu0 0.0
        %1411 = vmatmul.mubr.f32.gmra.mrb[0].mxu0 %v1206
        %v1412 = vpop.f32.mrb[0].mxu0
        %v1413 = vadd.f32 0.0, %v1412
        %v1414 = vpop.f32.mrb[0].mxu0
        %1415 = vmatprep.mubr.f32.mxu0 0.0
        %1416 = vmatmul.mubr.f32.gmra.mrb[0].mxu0 %v1209
        %v1417 = vpop.f32.mrb[0].mxu0
        %v1418 = vadd.f32 0.0, %v1417
        %v1419 = vpop.f32.mrb[0].mxu0
        %1420 = vmatprep.mubr.f32.mxu0 0.0
        %1421 = vmatmul.mubr.f32.gmra.mrb[0].mxu0 %v1212
        %v1422 = vpop.f32.mrb[0].mxu0
        %v1423 = vadd.f32 0.0, %v1422
        %v1424 = vpop.f32.mrb[0].mxu0
        %1425 = vmatprep.mubr.f32.mxu0 0.0
        %1426 = vmatmul.mubr.f32.gmra.mrb[0].mxu0 %v1215
        %v1427 = vpop.f32.mrb[0].mxu0
        %v1428 = vadd.f32 0.0, %v1427
        %v1429 = vpop.f32.mrb[0].mxu0
        %1430 = vmatprep.mubr.f32.mxu0 0.0
        %1431 = vmatmul.mubr.f32.gmra.mrb[0].mxu0 %v1218
        %v1432 = vpop.f32.mrb[0].mxu0
        %v1433 = vadd.f32 0.0, %v1432
        %v1434 = vpop.f32.mrb[0].mxu0
        %1435 = vmatprep.mubr.f32.mxu0 0.0
        %1436 = vmatmul.mubr.f32.gmra.mrb[0].mxu0 %v1221
        %v1437 = vpop.f32.mrb[0].mxu0
        %v1438 = vadd.f32 0.0, %v1437
        %v1439 = vpop.f32.mrb[0].mxu0
        %1440 = vmatprep.mubr.f32.mxu0 0.0
        %1441 = vmatmul.mubr.f32.gmra.mrb[0].mxu0 %v1224
        %v1442 = vpop.f32.mrb[0].mxu0
        %v1443 = vadd.f32 0.0, %v1442
        %v1444 = vpop.f32.mrb[0].mxu0
        %1445 = vmatprep.mubr.f32.mxu0 0.0
        %1446 = vmatmul.mubr.f32.gmra.mrb[0].mxu0 %v1227
        %v1447 = vpop.f32.mrb[0].mxu0
        %v1448 = vadd.f32 0.0, %v1447
        %v1449 = vpop.f32.mrb[0].mxu0
        %1450 = vmatprep.mubr.f32.mxu0 0.0
        %1451 = vmatmul.mubr.f32.gmra.mrb[0].mxu0 %v1230
        %v1452 = vpop.f32.mrb[0].mxu0
        %v1453 = vadd.f32 0.0, %v1452
        %v1454 = vpop.f32.mrb[0].mxu0
        %1455 = vmatprep.mubr.f32.mxu0 0.0
        %1456 = vmatmul.mubr.f32.gmra.mrb[0].mxu0 %v1233
        %v1457 = vpop.f32.mrb[0].mxu0
        %v1458 = vadd.f32 0.0, %v1457
        %v1459 = vpop.f32.mrb[0].mxu0
        %1460 = vmatprep.mubr.f32.mxu0 0.0
        %1461 = vmatmul.mubr.f32.gmra.mrb[0].mxu0 %v1236
        %v1462 = vpop.f32.mrb[0].mxu0
        %v1463 = vadd.f32 0.0, %v1462
        %v1464 = vpop.f32.mrb[0].mxu0
        %1465 = vdwg.mxu0
        %v1466 = vadd.f32 %v950, %v1308
        %v1467 = vadd.f32 %v955, %v1313
        %v1468 = vadd.f32 %v960, %v1318
        %v1469 = vadd.f32 %v965, %v1323
        %v1470 = vadd.f32 %v970, %v1328
        %v1471 = vadd.f32 %v975, %v1333
        %v1472 = vadd.f32 %v980, %v1338
        %v1473 = vadd.f32 %v985, %v1343
        %v1474 = vadd.f32 %v990, %v1348
        %v1475 = vadd.f32 %v995, %v1353
        %v1476 = vadd.f32 %v1000, %v1358
        %v1477 = vadd.f32 %v1005, %v1363
        %v1478 = vadd.f32 %v1010, %v1368
        %v1479 = vadd.f32 %v1015, %v1373
        %v1480 = vadd.f32 %v1020, %v1378
        %v1481 = vadd.f32 %v1025, %v1383
        %v1482 = vadd.f32 %v1030, %v1388
        %v1483 = vadd.f32 %v1035, %v1393
        %v1484 = vadd.f32 %v1040, %v1398
        %v1485 = vadd.f32 %v1045, %v1403
        %v1486 = vadd.f32 %v1050, %v1408
        %v1487 = vadd.f32 %v1055, %v1413
        %v1488 = vadd.f32 %v1060, %v1418
        %v1489 = vadd.f32 %v1065, %v1423
        %v1490 = vadd.f32 %v1070, %v1428
        %v1491 = vadd.f32 %v1075, %v1433
        %v1492 = vadd.f32 %v1080, %v1438
        %v1493 = vadd.f32 %v1085, %v1443
        %v1494 = vadd.f32 %v1090, %v1448
        %v1495 = vadd.f32 %v1095, %v1453
        %v1496 = vadd.f32 %v1100, %v1458
        %v1497 = vadd.f32 %v1105, %v1463
        %v1498 = vld [vmem:[%s359] sm:$0xff]
        %v1499 = vld [vmem:[%s359 + $0x8] sm:$0xff]
        %v1500 = vld [vmem:[%s359 + $0x18] sm:$0xff]
        %v1501 = vld [vmem:[%s359 + $0x20] sm:$0xff]
        %v1502 = vld [vmem:[%s359 + $0x30] sm:$0xff]
        %v1503 = vld [vmem:[%s359 + $0x38] sm:$0xff]
        %v1504 = vld [vmem:[%s359 + $0x48] sm:$0xff]
        %v1505 = vld [vmem:[%s359 + $0x50] sm:$0xff]
        %v1506 = vld [vmem:[%s359 + $0x60] sm:$0xff]
        %v1507 = vld [vmem:[%s359 + $0x68] sm:$0xff]
        %v1508 = vld [vmem:[%s359 + $0x78] sm:$0xff]
        %v1509 = vld [vmem:[%s359 + $0x80] sm:$0xff]
        %v1510 = vld [vmem:[%s359 + $0x90] sm:$0xff]
        %v1511 = vld [vmem:[%s359 + $0x98] sm:$0xff]
        %v1512 = vld [vmem:[%s359 + $0xa8] sm:$0xff]
        %v1513 = vld [vmem:[%s359 + $0xb0] sm:$0xff]
        %v1514 = vld [vmem:[%s359 + $0xc0] sm:$0xff]
        %v1515 = vld [vmem:[%s359 + $0xc8] sm:$0xff]
        %v1516 = vld [vmem:[%s359 + $0xd8] sm:$0xff]
        %v1517 = vld [vmem:[%s359 + $0xe0] sm:$0xff]
        %v1518 = vld [vmem:[%s359 + $0xf0] sm:$0xff]
        %v1519 = vld [vmem:[%s359 + $0xf8] sm:$0xff]
        %v1520 = vld [vmem:[%s359 + $0x108] sm:$0xff]
        %v1521 = vld [vmem:[%s359 + $0x110] sm:$0xff]
        %v1522 = vld [vmem:[%s359 + $0x120] sm:$0xff]
        %v1523 = vld [vmem:[%s359 + $0x128] sm:$0xff]
        %v1524 = vld [vmem:[%s359 + $0x138] sm:$0xff]
        %v1525 = vld [vmem:[%s359 + $0x140] sm:$0xff]
        %v1526 = vld [vmem:[%s359 + $0x150] sm:$0xff]
        %v1527 = vld [vmem:[%s359 + $0x158] sm:$0xff]
        %v1528 = vld [vmem:[%s359 + $0x168] sm:$0xff]
        %v1529 = vld [vmem:[%s359 + $0x170] sm:$0xff]
        %s1530 = scalar_lea.vmem %s1, 12
        %v1531 = vld [vmem:[%s1530] sm:$0xf]
        %v1533 = vsel %vm303, %v1498, 0
        %v1536 = vsel %vm303, %v1499, 0
        %v1539 = vsel %vm303, %v1500, 0
        %v1542 = vsel %vm303, %v1501, 0
        %v1545 = vsel %vm303, %v1502, 0
        %v1548 = vsel %vm303, %v1503, 0
        %v1551 = vsel %vm303, %v1504, 0
        %v1554 = vsel %vm303, %v1505, 0
        %v1557 = vsel %vm303, %v1506, 0
        %v1560 = vsel %vm303, %v1507, 0
        %v1563 = vsel %vm303, %v1508, 0
        %v1566 = vsel %vm303, %v1509, 0
        %v1569 = vsel %vm303, %v1510, 0
        %v1572 = vsel %vm303, %v1511, 0
        %v1575 = vsel %vm303, %v1512, 0
        %v1578 = vsel %vm303, %v1513, 0
        %v1581 = vsel %vm303, %v1514, 0
        %v1584 = vsel %vm303, %v1515, 0
        %v1587 = vsel %vm303, %v1516, 0
        %v1590 = vsel %vm303, %v1517, 0
        %v1593 = vsel %vm303, %v1518, 0
        %v1596 = vsel %vm303, %v1519, 0
        %v1599 = vsel %vm303, %v1520, 0
        %v1602 = vsel %vm303, %v1521, 0
        %v1605 = vsel %vm303, %v1522, 0
        %v1608 = vsel %vm303, %v1523, 0
        %v1611 = vsel %vm303, %v1524, 0
        %v1614 = vsel %vm303, %v1525, 0
        %v1617 = vsel %vm303, %v1526, 0
        %v1620 = vsel %vm303, %v1527, 0
        %v1623 = vsel %vm303, %v1528, 0
        %v1626 = vsel %vm303, %v1529, 0
        %v1629 = vsel %vm555, %v1531, 0
        %1631 = vmatprep.subr.mxu0 0.0
        %1632 = vmatpush1.msra.mxu0 %v1629
        %1633 = vmatprep.subr.mxu0 0.0
        %1634 = vmatpush1.msra.mxu0 0.0
        %1635 = vmatprep.subr.mxu0 0.0
        %1636 = vmatpush1.msra.mxu0 0.0
        %1637 = vmatprep.subr.mxu0 0.0
        %1638 = vmatpush1.msra.mxu0 0.0
        %1639 = vmatprep.subr.mxu0 0.0
        %1640 = vmatpush1.msra.mxu0 0.0
        %1641 = vmatprep.subr.mxu0 0.0
        %1642 = vmatpush1.msra.mxu0 0.0
        %1643 = vmatprep.subr.mxu0 0.0
        %1644 = vmatpush1.msra.mxu0 0.0
        %1645 = vmatprep.subr.mxu0 0.0
        %1646 = vmatpush1.msra.mxu0 0.0
        %1647 = vmatprep.subr.mxu0 0.0
        %1648 = vmatpush1.msra.mxu0 0.0
        %1649 = vmatprep.subr.mxu0 0.0
        %1650 = vmatpush1.msra.mxu0 0.0
        %1651 = vmatprep.subr.mxu0 0.0
        %1652 = vmatpush1.msra.mxu0 0.0
        %1653 = vmatprep.subr.mxu0 0.0
        %1654 = vmatpush1.msra.mxu0 0.0
        %1655 = vmatprep.subr.mxu0 0.0
        %1656 = vmatpush1.msra.mxu0 0.0
        %1657 = vmatprep.subr.mxu0 0.0
        %1658 = vmatpush1.msra.mxu0 0.0
        %1659 = vmatprep.subr.mxu0 0.0
        %1660 = vmatpush1.msra.mxu0 0.0
        %1661 = vmatprep.subr.mxu0 0.0
        %1662 = vmatpush1.msra.mxu0 0.0
        %1663 = vmatprep.subr.mxu0 0.0
        %1664 = vmatpush1.msra.mxu0 0.0
        %1665 = vmatprep.subr.mxu0 0.0
        %1666 = vmatpush1.msra.mxu0 0.0
        %1667 = vmatprep.subr.mxu0 0.0
        %1668 = vmatpush1.msra.mxu0 0.0
        %1669 = vmatprep.subr.mxu0 0.0
        %1670 = vmatpush1.msra.mxu0 0.0
        %1671 = vmatprep.subr.mxu0 0.0
        %1672 = vmatpush1.msra.mxu0 0.0
        %1673 = vmatprep.subr.mxu0 0.0
        %1674 = vmatpush1.msra.mxu0 0.0
        %1675 = vmatprep.subr.mxu0 0.0
        %1676 = vmatpush1.msra.mxu0 0.0
        %1677 = vmatprep.subr.mxu0 0.0
        %1678 = vmatpush1.msra.mxu0 0.0
        %1679 = vmatprep.subr.mxu0 0.0
        %1680 = vmatpush1.msra.mxu0 0.0
        %1681 = vmatprep.subr.mxu0 0.0
        %1682 = vmatpush1.msra.mxu0 0.0
        %1683 = vmatprep.subr.mxu0 0.0
        %1684 = vmatpush1.msra.mxu0 0.0
        %1685 = vmatprep.subr.mxu0 0.0
        %1686 = vmatpush1.msra.mxu0 0.0
        %1687 = vmatprep.subr.mxu0 0.0
        %1688 = vmatpush1.msra.mxu0 0.0
        %1689 = vmatprep.subr.mxu0 0.0
        %1690 = vmatpush1.msra.mxu0 0.0
        %1691 = vmatprep.subr.mxu0 0.0
        %1692 = vmatpush1.msra.mxu0 0.0
        %1693 = vmatprep.subr.mxu0 0.0
        %1694 = vmatpush1.msra.mxu0 0.0
        %1695 = vmatprep.mubr.f32.mxu0 0.0
        %1696 = vmatmul.mubr.f32.gmra.mrb[0].mxu0 %v1533
        %v1697 = vpop.f32.mrb[0].mxu0
        %v1698 = vadd.f32 0.0, %v1697
        %v1699 = vpop.f32.mrb[0].mxu0
        %1700 = vmatprep.mubr.f32.mxu0 0.0
        %1701 = vmatmul.mubr.f32.gmra.mrb[0].mxu0 %v1536
        %v1702 = vpop.f32.mrb[0].mxu0
        %v1703 = vadd.f32 0.0, %v1702
        %v1704 = vpop.f32.mrb[0].mxu0
        %1705 = vmatprep.mubr.f32.mxu0 0.0
        %1706 = vmatmul.mubr.f32.gmra.mrb[0].mxu0 %v1539
        %v1707 = vpop.f32.mrb[0].mxu0
        %v1708 = vadd.f32 0.0, %v1707
        %v1709 = vpop.f32.mrb[0].mxu0
        %1710 = vmatprep.mubr.f32.mxu0 0.0
        %1711 = vmatmul.mubr.f32.gmra.mrb[0].mxu0 %v1542
        %v1712 = vpop.f32.mrb[0].mxu0
        %v1713 = vadd.f32 0.0, %v1712
        %v1714 = vpop.f32.mrb[0].mxu0
        %1715 = vmatprep.mubr.f32.mxu0 0.0
        %1716 = vmatmul.mubr.f32.gmra.mrb[0].mxu0 %v1545
        %v1717 = vpop.f32.mrb[0].mxu0
        %v1718 = vadd.f32 0.0, %v1717
        %v1719 = vpop.f32.mrb[0].mxu0
        %1720 = vmatprep.mubr.f32.mxu0 0.0
        %1721 = vmatmul.mubr.f32.gmra.mrb[0].mxu0 %v1548
        %v1722 = vpop.f32.mrb[0].mxu0
        %v1723 = vadd.f32 0.0, %v1722
        %v1724 = vpop.f32.mrb[0].mxu0
        %1725 = vmatprep.mubr.f32.mxu0 0.0
        %1726 = vmatmul.mubr.f32.gmra.mrb[0].mxu0 %v1551
        %v1727 = vpop.f32.mrb[0].mxu0
        %v1728 = vadd.f32 0.0, %v1727
        %v1729 = vpop.f32.mrb[0].mxu0
        %1730 = vmatprep.mubr.f32.mxu0 0.0
        %1731 = vmatmul.mubr.f32.gmra.mrb[0].mxu0 %v1554
        %v1732 = vpop.f32.mrb[0].mxu0
        %v1733 = vadd.f32 0.0, %v1732
        %v1734 = vpop.f32.mrb[0].mxu0
        %1735 = vmatprep.mubr.f32.mxu0 0.0
        %1736 = vmatmul.mubr.f32.gmra.mrb[0].mxu0 %v1557
        %v1737 = vpop.f32.mrb[0].mxu0
        %v1738 = vadd.f32 0.0, %v1737
        %v1739 = vpop.f32.mrb[0].mxu0
        %1740 = vmatprep.mubr.f32.mxu0 0.0
        %1741 = vmatmul.mubr.f32.gmra.mrb[0].mxu0 %v1560
        %v1742 = vpop.f32.mrb[0].mxu0
        %v1743 = vadd.f32 0.0, %v1742
        %v1744 = vpop.f32.mrb[0].mxu0
        %1745 = vmatprep.mubr.f32.mxu0 0.0
        %1746 = vmatmul.mubr.f32.gmra.mrb[0].mxu0 %v1563
        %v1747 = vpop.f32.mrb[0].mxu0
        %v1748 = vadd.f32 0.0, %v1747
        %v1749 = vpop.f32.mrb[0].mxu0
        %1750 = vmatprep.mubr.f32.mxu0 0.0
        %1751 = vmatmul.mubr.f32.gmra.mrb[0].mxu0 %v1566
        %v1752 = vpop.f32.mrb[0].mxu0
        %v1753 = vadd.f32 0.0, %v1752
        %v1754 = vpop.f32.mrb[0].mxu0
        %1755 = vmatprep.mubr.f32.mxu0 0.0
        %1756 = vmatmul.mubr.f32.gmra.mrb[0].mxu0 %v1569
        %v1757 = vpop.f32.mrb[0].mxu0
        %v1758 = vadd.f32 0.0, %v1757
        %v1759 = vpop.f32.mrb[0].mxu0
        %1760 = vmatprep.mubr.f32.mxu0 0.0
        %1761 = vmatmul.mubr.f32.gmra.mrb[0].mxu0 %v1572
        %v1762 = vpop.f32.mrb[0].mxu0
        %v1763 = vadd.f32 0.0, %v1762
        %v1764 = vpop.f32.mrb[0].mxu0
        %1765 = vmatprep.mubr.f32.mxu0 0.0
        %1766 = vmatmul.mubr.f32.gmra.mrb[0].mxu0 %v1575
        %v1767 = vpop.f32.mrb[0].mxu0
        %v1768 = vadd.f32 0.0, %v1767
        %v1769 = vpop.f32.mrb[0].mxu0
        %1770 = vmatprep.mubr.f32.mxu0 0.0
        %1771 = vmatmul.mubr.f32.gmra.mrb[0].mxu0 %v1578
        %v1772 = vpop.f32.mrb[0].mxu0
        %v1773 = vadd.f32 0.0, %v1772
        %v1774 = vpop.f32.mrb[0].mxu0
        %1775 = vmatprep.mubr.f32.mxu0 0.0
        %1776 = vmatmul.mubr.f32.gmra.mrb[0].mxu0 %v1581
        %v1777 = vpop.f32.mrb[0].mxu0
        %v1778 = vadd.f32 0.0, %v1777
        %v1779 = vpop.f32.mrb[0].mxu0
        %1780 = vmatprep.mubr.f32.mxu0 0.0
        %1781 = vmatmul.mubr.f32.gmra.mrb[0].mxu0 %v1584
        %v1782 = vpop.f32.mrb[0].mxu0
        %v1783 = vadd.f32 0.0, %v1782
        %v1784 = vpop.f32.mrb[0].mxu0
        %1785 = vmatprep.mubr.f32.mxu0 0.0
        %1786 = vmatmul.mubr.f32.gmra.mrb[0].mxu0 %v1587
        %v1787 = vpop.f32.mrb[0].mxu0
        %v1788 = vadd.f32 0.0, %v1787
        %v1789 = vpop.f32.mrb[0].mxu0
        %1790 = vmatprep.mubr.f32.mxu0 0.0
        %1791 = vmatmul.mubr.f32.gmra.mrb[0].mxu0 %v1590
        %v1792 = vpop.f32.mrb[0].mxu0
        %v1793 = vadd.f32 0.0, %v1792
        %v1794 = vpop.f32.mrb[0].mxu0
        %1795 = vmatprep.mubr.f32.mxu0 0.0
        %1796 = vmatmul.mubr.f32.gmra.mrb[0].mxu0 %v1593
        %v1797 = vpop.f32.mrb[0].mxu0
        %v1798 = vadd.f32 0.0, %v1797
        %v1799 = vpop.f32.mrb[0].mxu0
        %1800 = vmatprep.mubr.f32.mxu0 0.0
        %1801 = vmatmul.mubr.f32.gmra.mrb[0].mxu0 %v1596
        %v1802 = vpop.f32.mrb[0].mxu0
        %v1803 = vadd.f32 0.0, %v1802
        %v1804 = vpop.f32.mrb[0].mxu0
        %1805 = vmatprep.mubr.f32.mxu0 0.0
        %1806 = vmatmul.mubr.f32.gmra.mrb[0].mxu0 %v1599
        %v1807 = vpop.f32.mrb[0].mxu0
        %v1808 = vadd.f32 0.0, %v1807
        %v1809 = vpop.f32.mrb[0].mxu0
        %1810 = vmatprep.mubr.f32.mxu0 0.0
        %1811 = vmatmul.mubr.f32.gmra.mrb[0].mxu0 %v1602
        %v1812 = vpop.f32.mrb[0].mxu0
        %v1813 = vadd.f32 0.0, %v1812
        %v1814 = vpop.f32.mrb[0].mxu0
        %1815 = vmatprep.mubr.f32.mxu0 0.0
        %1816 = vmatmul.mubr.f32.gmra.mrb[0].mxu0 %v1605
        %v1817 = vpop.f32.mrb[0].mxu0
        %v1818 = vadd.f32 0.0, %v1817
        %v1819 = vpop.f32.mrb[0].mxu0
        %1820 = vmatprep.mubr.f32.mxu0 0.0
        %1821 = vmatmul.mubr.f32.gmra.mrb[0].mxu0 %v1608
        %v1822 = vpop.f32.mrb[0].mxu0
        %v1823 = vadd.f32 0.0, %v1822
        %v1824 = vpop.f32.mrb[0].mxu0
        %1825 = vmatprep.mubr.f32.mxu0 0.0
        %1826 = vmatmul.mubr.f32.gmra.mrb[0].mxu0 %v1611
        %v1827 = vpop.f32.mrb[0].mxu0
        %v1828 = vadd.f32 0.0, %v1827
        %v1829 = vpop.f32.mrb[0].mxu0
        %1830 = vmatprep.mubr.f32.mxu0 0.0
        %1831 = vmatmul.mubr.f32.gmra.mrb[0].mxu0 %v1614
        %v1832 = vpop.f32.mrb[0].mxu0
        %v1833 = vadd.f32 0.0, %v1832
        %v1834 = vpop.f32.mrb[0].mxu0
        %1835 = vmatprep.mubr.f32.mxu0 0.0
        %1836 = vmatmul.mubr.f32.gmra.mrb[0].mxu0 %v1617
        %v1837 = vpop.f32.mrb[0].mxu0
        %v1838 = vadd.f32 0.0, %v1837
        %v1839 = vpop.f32.mrb[0].mxu0
        %1840 = vmatprep.mubr.f32.mxu0 0.0
        %1841 = vmatmul.mubr.f32.gmra.mrb[0].mxu0 %v1620
        %v1842 = vpop.f32.mrb[0].mxu0
        %v1843 = vadd.f32 0.0, %v1842
        %v1844 = vpop.f32.mrb[0].mxu0
        %1845 = vmatprep.mubr.f32.mxu0 0.0
        %1846 = vmatmul.mubr.f32.gmra.mrb[0].mxu0 %v1623
        %v1847 = vpop.f32.mrb[0].mxu0
        %v1848 = vadd.f32 0.0, %v1847
        %v1849 = vpop.f32.mrb[0].mxu0
        %1850 = vmatprep.mubr.f32.mxu0 0.0
        %1851 = vmatmul.mubr.f32.gmra.mrb[0].mxu0 %v1626
        %v1852 = vpop.f32.mrb[0].mxu0
        %v1853 = vadd.f32 0.0, %v1852
        %v1854 = vpop.f32.mrb[0].mxu0
        %1855 = vdwg.mxu0
        %v1856 = vadd.f32 %v1466, %v1698
        %v1857 = vadd.f32 %v1467, %v1703
        %v1858 = vadd.f32 %v1468, %v1708
        %v1859 = vadd.f32 %v1469, %v1713
        %v1860 = vadd.f32 %v1470, %v1718
        %v1861 = vadd.f32 %v1471, %v1723
        %v1862 = vadd.f32 %v1472, %v1728
        %v1863 = vadd.f32 %v1473, %v1733
        %v1864 = vadd.f32 %v1474, %v1738
        %v1865 = vadd.f32 %v1475, %v1743
        %v1866 = vadd.f32 %v1476, %v1748
        %v1867 = vadd.f32 %v1477, %v1753
        %v1868 = vadd.f32 %v1478, %v1758
        %v1869 = vadd.f32 %v1479, %v1763
        %v1870 = vadd.f32 %v1480, %v1768
        %v1871 = vadd.f32 %v1481, %v1773
        %v1872 = vadd.f32 %v1482, %v1778
        %v1873 = vadd.f32 %v1483, %v1783
        %v1874 = vadd.f32 %v1484, %v1788
        %v1875 = vadd.f32 %v1485, %v1793
        %v1876 = vadd.f32 %v1486, %v1798
        %v1877 = vadd.f32 %v1487, %v1803
        %v1878 = vadd.f32 %v1488, %v1808
        %v1879 = vadd.f32 %v1489, %v1813
        %v1880 = vadd.f32 %v1490, %v1818
        %v1881 = vadd.f32 %v1491, %v1823
        %v1882 = vadd.f32 %v1492, %v1828
        %v1883 = vadd.f32 %v1493, %v1833
        %v1884 = vadd.f32 %v1494, %v1838
        %v1885 = vadd.f32 %v1495, %v1843
        %v1886 = vadd.f32 %v1496, %v1848
        %v1887 = vadd.f32 %v1497, %v1853
        %v1888 = vld [vmem:[%s359 + $0x1] sm:$0xff]
        %v1889 = vld [vmem:[%s359 + $0x9] sm:$0xff]
        %v1890 = vld [vmem:[%s359 + $0x19] sm:$0xff]
        %v1891 = vld [vmem:[%s359 + $0x21] sm:$0xff]
        %v1892 = vld [vmem:[%s359 + $0x31] sm:$0xff]
        %v1893 = vld [vmem:[%s359 + $0x39] sm:$0xff]
        %v1894 = vld [vmem:[%s359 + $0x49] sm:$0xff]
        %v1895 = vld [vmem:[%s359 + $0x51] sm:$0xff]
        %v1896 = vld [vmem:[%s359 + $0x61] sm:$0xff]
        %v1897 = vld [vmem:[%s359 + $0x69] sm:$0xff]
        %v1898 = vld [vmem:[%s359 + $0x79] sm:$0xff]
        %v1899 = vld [vmem:[%s359 + $0x81] sm:$0xff]
        %v1900 = vld [vmem:[%s359 + $0x91] sm:$0xff]
        %v1901 = vld [vmem:[%s359 + $0x99] sm:$0xff]
        %v1902 = vld [vmem:[%s359 + $0xa9] sm:$0xff]
        %v1903 = vld [vmem:[%s359 + $0xb1] sm:$0xff]
        %v1904 = vld [vmem:[%s359 + $0xc1] sm:$0xff]
        %v1905 = vld [vmem:[%s359 + $0xc9] sm:$0xff]
        %v1906 = vld [vmem:[%s359 + $0xd9] sm:$0xff]
        %v1907 = vld [vmem:[%s359 + $0xe1] sm:$0xff]
        %v1908 = vld [vmem:[%s359 + $0xf1] sm:$0xff]
        %v1909 = vld [vmem:[%s359 + $0xf9] sm:$0xff]
        %v1910 = vld [vmem:[%s359 + $0x109] sm:$0xff]
        %v1911 = vld [vmem:[%s359 + $0x111] sm:$0xff]
        %v1912 = vld [vmem:[%s359 + $0x121] sm:$0xff]
        %v1913 = vld [vmem:[%s359 + $0x129] sm:$0xff]
        %v1914 = vld [vmem:[%s359 + $0x139] sm:$0xff]
        %v1915 = vld [vmem:[%s359 + $0x141] sm:$0xff]
        %v1916 = vld [vmem:[%s359 + $0x151] sm:$0xff]
        %v1917 = vld [vmem:[%s359 + $0x159] sm:$0xff]
        %v1918 = vld [vmem:[%s359 + $0x169] sm:$0xff]
        %v1919 = vld [vmem:[%s359 + $0x171] sm:$0xff]
        %s1920 = scalar_lea.vmem %s1, 16
        %v1921 = vld [vmem:[%s1920] sm:$0xf]
        %v1923 = vsel %vm303, %v1888, 0
        %v1926 = vsel %vm303, %v1889, 0
        %v1929 = vsel %vm303, %v1890, 0
        %v1932 = vsel %vm303, %v1891, 0
        %v1935 = vsel %vm303, %v1892, 0
        %v1938 = vsel %vm303, %v1893, 0
        %v1941 = vsel %vm303, %v1894, 0
        %v1944 = vsel %vm303, %v1895, 0
        %v1947 = vsel %vm303, %v1896, 0
        %v1950 = vsel %vm303, %v1897, 0
        %v1953 = vsel %vm303, %v1898, 0
        %v1956 = vsel %vm303, %v1899, 0
        %v1959 = vsel %vm303, %v1900, 0
        %v1962 = vsel %vm303, %v1901, 0
        %v1965 = vsel %vm303, %v1902, 0
        %v1968 = vsel %vm303, %v1903, 0
        %v1971 = vsel %vm303, %v1904, 0
        %v1974 = vsel %vm303, %v1905, 0
        %v1977 = vsel %vm303, %v1906, 0
        %v1980 = vsel %vm303, %v1907, 0
        %v1983 = vsel %vm303, %v1908, 0
        %v1986 = vsel %vm303, %v1909, 0
        %v1989 = vsel %vm303, %v1910, 0
        %v1992 = vsel %vm303, %v1911, 0
        %v1995 = vsel %vm303, %v1912, 0
        %v1998 = vsel %vm303, %v1913, 0
        %v2001 = vsel %vm303, %v1914, 0
        %v2004 = vsel %vm303, %v1915, 0
        %v2007 = vsel %vm303, %v1916, 0
        %v2010 = vsel %vm303, %v1917, 0
        %v2013 = vsel %vm303, %v1918, 0
        %v2016 = vsel %vm303, %v1919, 0
        %v2019 = vsel %vm555, %v1921, 0
        %2021 = vmatprep.subr.mxu0 0.0
        %2022 = vmatpush1.msra.mxu0 %v2019
        %2023 = vmatprep.subr.mxu0 0.0
        %2024 = vmatpush1.msra.mxu0 0.0
        %2025 = vmatprep.subr.mxu0 0.0
        %2026 = vmatpush1.msra.mxu0 0.0
        %2027 = vmatprep.subr.mxu0 0.0
        %2028 = vmatpush1.msra.mxu0 0.0
        %2029 = vmatprep.subr.mxu0 0.0
        %2030 = vmatpush1.msra.mxu0 0.0
        %2031 = vmatprep.subr.mxu0 0.0
        %2032 = vmatpush1.msra.mxu0 0.0
        %2033 = vmatprep.subr.mxu0 0.0
        %2034 = vmatpush1.msra.mxu0 0.0
        %2035 = vmatprep.subr.mxu0 0.0
        %2036 = vmatpush1.msra.mxu0 0.0
        %2037 = vmatprep.subr.mxu0 0.0
        %2038 = vmatpush1.msra.mxu0 0.0
        %2039 = vmatprep.subr.mxu0 0.0
        %2040 = vmatpush1.msra.mxu0 0.0
        %2041 = vmatprep.subr.mxu0 0.0
        %2042 = vmatpush1.msra.mxu0 0.0
        %2043 = vmatprep.subr.mxu0 0.0
        %2044 = vmatpush1.msra.mxu0 0.0
        %2045 = vmatprep.subr.mxu0 0.0
        %2046 = vmatpush1.msra.mxu0 0.0
        %2047 = vmatprep.subr.mxu0 0.0
        %2048 = vmatpush1.msra.mxu0 0.0
        %2049 = vmatprep.subr.mxu0 0.0
        %2050 = vmatpush1.msra.mxu0 0.0
        %2051 = vmatprep.subr.mxu0 0.0
        %2052 = vmatpush1.msra.mxu0 0.0
        %2053 = vmatprep.subr.mxu0 0.0
        %2054 = vmatpush1.msra.mxu0 0.0
        %2055 = vmatprep.subr.mxu0 0.0
        %2056 = vmatpush1.msra.mxu0 0.0
        %2057 = vmatprep.subr.mxu0 0.0
        %2058 = vmatpush1.msra.mxu0 0.0
        %2059 = vmatprep.subr.mxu0 0.0
        %2060 = vmatpush1.msra.mxu0 0.0
        %2061 = vmatprep.subr.mxu0 0.0
        %2062 = vmatpush1.msra.mxu0 0.0
        %2063 = vmatprep.subr.mxu0 0.0
        %2064 = vmatpush1.msra.mxu0 0.0
        %2065 = vmatprep.subr.mxu0 0.0
        %2066 = vmatpush1.msra.mxu0 0.0
        %2067 = vmatprep.subr.mxu0 0.0
        %2068 = vmatpush1.msra.mxu0 0.0
        %2069 = vmatprep.subr.mxu0 0.0
        %2070 = vmatpush1.msra.mxu0 0.0
        %2071 = vmatprep.subr.mxu0 0.0
        %2072 = vmatpush1.msra.mxu0 0.0
        %2073 = vmatprep.subr.mxu0 0.0
        %2074 = vmatpush1.msra.mxu0 0.0
        %2075 = vmatprep.subr.mxu0 0.0
        %2076 = vmatpush1.msra.mxu0 0.0
        %2077 = vmatprep.subr.mxu0 0.0
        %2078 = vmatpush1.msra.mxu0 0.0
        %2079 = vmatprep.subr.mxu0 0.0
        %2080 = vmatpush1.msra.mxu0 0.0
        %2081 = vmatprep.subr.mxu0 0.0
        %2082 = vmatpush1.msra.mxu0 0.0
        %2083 = vmatprep.subr.mxu0 0.0
        %2084 = vmatpush1.msra.mxu0 0.0
        %2085 = vmatprep.mubr.f32.mxu0 0.0
        %2086 = vmatmul.mubr.f32.gmra.mrb[0].mxu0 %v1923
        %v2087 = vpop.f32.mrb[0].mxu0
        %v2088 = vadd.f32 0.0, %v2087
        %v2089 = vpop.f32.mrb[0].mxu0
        %2090 = vmatprep.mubr.f32.mxu0 0.0
        %2091 = vmatmul.mubr.f32.gmra.mrb[0].mxu0 %v1926
        %v2092 = vpop.f32.mrb[0].mxu0
        %v2093 = vadd.f32 0.0, %v2092
        %v2094 = vpop.f32.mrb[0].mxu0
        %2095 = vmatprep.mubr.f32.mxu0 0.0
        %2096 = vmatmul.mubr.f32.gmra.mrb[0].mxu0 %v1929
        %v2097 = vpop.f32.mrb[0].mxu0
        %v2098 = vadd.f32 0.0, %v2097
        %v2099 = vpop.f32.mrb[0].mxu0
        %2100 = vmatprep.mubr.f32.mxu0 0.0
        %2101 = vmatmul.mubr.f32.gmra.mrb[0].mxu0 %v1932
        %v2102 = vpop.f32.mrb[0].mxu0
        %v2103 = vadd.f32 0.0, %v2102
        %v2104 = vpop.f32.mrb[0].mxu0
        %2105 = vmatprep.mubr.f32.mxu0 0.0
        %2106 = vmatmul.mubr.f32.gmra.mrb[0].mxu0 %v1935
        %v2107 = vpop.f32.mrb[0].mxu0
        %v2108 = vadd.f32 0.0, %v2107
        %v2109 = vpop.f32.mrb[0].mxu0
        %2110 = vmatprep.mubr.f32.mxu0 0.0
        %2111 = vmatmul.mubr.f32.gmra.mrb[0].mxu0 %v1938
        %v2112 = vpop.f32.mrb[0].mxu0
        %v2113 = vadd.f32 0.0, %v2112
        %v2114 = vpop.f32.mrb[0].mxu0
        %2115 = vmatprep.mubr.f32.mxu0 0.0
        %2116 = vmatmul.mubr.f32.gmra.mrb[0].mxu0 %v1941
        %v2117 = vpop.f32.mrb[0].mxu0
        %v2118 = vadd.f32 0.0, %v2117
        %v2119 = vpop.f32.mrb[0].mxu0
        %2120 = vmatprep.mubr.f32.mxu0 0.0
        %2121 = vmatmul.mubr.f32.gmra.mrb[0].mxu0 %v1944
        %v2122 = vpop.f32.mrb[0].mxu0
        %v2123 = vadd.f32 0.0, %v2122
        %v2124 = vpop.f32.mrb[0].mxu0
        %2125 = vmatprep.mubr.f32.mxu0 0.0
        %2126 = vmatmul.mubr.f32.gmra.mrb[0].mxu0 %v1947
        %v2127 = vpop.f32.mrb[0].mxu0
        %v2128 = vadd.f32 0.0, %v2127
        %v2129 = vpop.f32.mrb[0].mxu0
        %2130 = vmatprep.mubr.f32.mxu0 0.0
        %2131 = vmatmul.mubr.f32.gmra.mrb[0].mxu0 %v1950
        %v2132 = vpop.f32.mrb[0].mxu0
        %v2133 = vadd.f32 0.0, %v2132
        %v2134 = vpop.f32.mrb[0].mxu0
        %2135 = vmatprep.mubr.f32.mxu0 0.0
        %2136 = vmatmul.mubr.f32.gmra.mrb[0].mxu0 %v1953
        %v2137 = vpop.f32.mrb[0].mxu0
        %v2138 = vadd.f32 0.0, %v2137
        %v2139 = vpop.f32.mrb[0].mxu0
        %2140 = vmatprep.mubr.f32.mxu0 0.0
        %2141 = vmatmul.mubr.f32.gmra.mrb[0].mxu0 %v1956
        %v2142 = vpop.f32.mrb[0].mxu0
        %v2143 = vadd.f32 0.0, %v2142
        %v2144 = vpop.f32.mrb[0].mxu0
        %2145 = vmatprep.mubr.f32.mxu0 0.0
        %2146 = vmatmul.mubr.f32.gmra.mrb[0].mxu0 %v1959
        %v2147 = vpop.f32.mrb[0].mxu0
        %v2148 = vadd.f32 0.0, %v2147
        %v2149 = vpop.f32.mrb[0].mxu0
        %2150 = vmatprep.mubr.f32.mxu0 0.0
        %2151 = vmatmul.mubr.f32.gmra.mrb[0].mxu0 %v1962
        %v2152 = vpop.f32.mrb[0].mxu0
        %v2153 = vadd.f32 0.0, %v2152
        %v2154 = vpop.f32.mrb[0].mxu0
        %2155 = vmatprep.mubr.f32.mxu0 0.0
        %2156 = vmatmul.mubr.f32.gmra.mrb[0].mxu0 %v1965
        %v2157 = vpop.f32.mrb[0].mxu0
        %v2158 = vadd.f32 0.0, %v2157
        %v2159 = vpop.f32.mrb[0].mxu0
        %2160 = vmatprep.mubr.f32.mxu0 0.0
        %2161 = vmatmul.mubr.f32.gmra.mrb[0].mxu0 %v1968
        %v2162 = vpop.f32.mrb[0].mxu0
        %v2163 = vadd.f32 0.0, %v2162
        %v2164 = vpop.f32.mrb[0].mxu0
        %2165 = vmatprep.mubr.f32.mxu0 0.0
        %2166 = vmatmul.mubr.f32.gmra.mrb[0].mxu0 %v1971
        %v2167 = vpop.f32.mrb[0].mxu0
        %v2168 = vadd.f32 0.0, %v2167
        %v2169 = vpop.f32.mrb[0].mxu0
        %2170 = vmatprep.mubr.f32.mxu0 0.0
        %2171 = vmatmul.mubr.f32.gmra.mrb[0].mxu0 %v1974
        %v2172 = vpop.f32.mrb[0].mxu0
        %v2173 = vadd.f32 0.0, %v2172
        %v2174 = vpop.f32.mrb[0].mxu0
        %2175 = vmatprep.mubr.f32.mxu0 0.0
        %2176 = vmatmul.mubr.f32.gmra.mrb[0].mxu0 %v1977
        %v2177 = vpop.f32.mrb[0].mxu0
        %v2178 = vadd.f32 0.0, %v2177
        %v2179 = vpop.f32.mrb[0].mxu0
        %2180 = vmatprep.mubr.f32.mxu0 0.0
        %2181 = vmatmul.mubr.f32.gmra.mrb[0].mxu0 %v1980
        %v2182 = vpop.f32.mrb[0].mxu0
        %v2183 = vadd.f32 0.0, %v2182
        %v2184 = vpop.f32.mrb[0].mxu0
        %2185 = vmatprep.mubr.f32.mxu0 0.0
        %2186 = vmatmul.mubr.f32.gmra.mrb[0].mxu0 %v1983
        %v2187 = vpop.f32.mrb[0].mxu0
        %v2188 = vadd.f32 0.0, %v2187
        %v2189 = vpop.f32.mrb[0].mxu0
        %2190 = vmatprep.mubr.f32.mxu0 0.0
        %2191 = vmatmul.mubr.f32.gmra.mrb[0].mxu0 %v1986
        %v2192 = vpop.f32.mrb[0].mxu0
        %v2193 = vadd.f32 0.0, %v2192
        %v2194 = vpop.f32.mrb[0].mxu0
        %2195 = vmatprep.mubr.f32.mxu0 0.0
        %2196 = vmatmul.mubr.f32.gmra.mrb[0].mxu0 %v1989
        %v2197 = vpop.f32.mrb[0].mxu0
        %v2198 = vadd.f32 0.0, %v2197
        %v2199 = vpop.f32.mrb[0].mxu0
        %2200 = vmatprep.mubr.f32.mxu0 0.0
        %2201 = vmatmul.mubr.f32.gmra.mrb[0].mxu0 %v1992
        %v2202 = vpop.f32.mrb[0].mxu0
        %v2203 = vadd.f32 0.0, %v2202
        %v2204 = vpop.f32.mrb[0].mxu0
        %2205 = vmatprep.mubr.f32.mxu0 0.0
        %2206 = vmatmul.mubr.f32.gmra.mrb[0].mxu0 %v1995
        %v2207 = vpop.f32.mrb[0].mxu0
        %v2208 = vadd.f32 0.0, %v2207
        %v2209 = vpop.f32.mrb[0].mxu0
        %2210 = vmatprep.mubr.f32.mxu0 0.0
        %2211 = vmatmul.mubr.f32.gmra.mrb[0].mxu0 %v1998
        %v2212 = vpop.f32.mrb[0].mxu0
        %v2213 = vadd.f32 0.0, %v2212
        %v2214 = vpop.f32.mrb[0].mxu0
        %2215 = vmatprep.mubr.f32.mxu0 0.0
        %2216 = vmatmul.mubr.f32.gmra.mrb[0].mxu0 %v2001
        %v2217 = vpop.f32.mrb[0].mxu0
        %v2218 = vadd.f32 0.0, %v2217
        %v2219 = vpop.f32.mrb[0].mxu0
        %2220 = vmatprep.mubr.f32.mxu0 0.0
        %2221 = vmatmul.mubr.f32.gmra.mrb[0].mxu0 %v2004
        %v2222 = vpop.f32.mrb[0].mxu0
        %v2223 = vadd.f32 0.0, %v2222
        %v2224 = vpop.f32.mrb[0].mxu0
        %2225 = vmatprep.mubr.f32.mxu0 0.0
        %2226 = vmatmul.mubr.f32.gmra.mrb[0].mxu0 %v2007
        %v2227 = vpop.f32.mrb[0].mxu0
        %v2228 = vadd.f32 0.0, %v2227
        %v2229 = vpop.f32.mrb[0].mxu0
        %2230 = vmatprep.mubr.f32.mxu0 0.0
        %2231 = vmatmul.mubr.f32.gmra.mrb[0].mxu0 %v2010
        %v2232 = vpop.f32.mrb[0].mxu0
        %v2233 = vadd.f32 0.0, %v2232
        %v2234 = vpop.f32.mrb[0].mxu0
        %2235 = vmatprep.mubr.f32.mxu0 0.0
        %2236 = vmatmul.mubr.f32.gmra.mrb[0].mxu0 %v2013
        %v2237 = vpop.f32.mrb[0].mxu0
        %v2238 = vadd.f32 0.0, %v2237
        %v2239 = vpop.f32.mrb[0].mxu0
        %2240 = vmatprep.mubr.f32.mxu0 0.0
        %2241 = vmatmul.mubr.f32.gmra.mrb[0].mxu0 %v2016
        %v2242 = vpop.f32.mrb[0].mxu0
        %v2243 = vadd.f32 0.0, %v2242
        %v2244 = vpop.f32.mrb[0].mxu0
        %2245 = vdwg.mxu0
        %v2246 = vadd.f32 %v1856, %v2088
        %v2247 = vadd.f32 %v1857, %v2093
        %v2248 = vadd.f32 %v1858, %v2098
        %v2249 = vadd.f32 %v1859, %v2103
        %v2250 = vadd.f32 %v1860, %v2108
        %v2251 = vadd.f32 %v1861, %v2113
        %v2252 = vadd.f32 %v1862, %v2118
        %v2253 = vadd.f32 %v1863, %v2123
        %v2254 = vadd.f32 %v1864, %v2128
        %v2255 = vadd.f32 %v1865, %v2133
        %v2256 = vadd.f32 %v1866, %v2138
        %v2257 = vadd.f32 %v1867, %v2143
        %v2258 = vadd.f32 %v1868, %v2148
        %v2259 = vadd.f32 %v1869, %v2153
        %v2260 = vadd.f32 %v1870, %v2158
        %v2261 = vadd.f32 %v1871, %v2163
        %v2262 = vadd.f32 %v1872, %v2168
        %v2263 = vadd.f32 %v1873, %v2173
        %v2264 = vadd.f32 %v1874, %v2178
        %v2265 = vadd.f32 %v1875, %v2183
        %v2266 = vadd.f32 %v1876, %v2188
        %v2267 = vadd.f32 %v1877, %v2193
        %v2268 = vadd.f32 %v1878, %v2198
        %v2269 = vadd.f32 %v1879, %v2203
        %v2270 = vadd.f32 %v1880, %v2208
        %v2271 = vadd.f32 %v1881, %v2213
        %v2272 = vadd.f32 %v1882, %v2218
        %v2273 = vadd.f32 %v1883, %v2223
        %v2274 = vadd.f32 %v1884, %v2228
        %v2275 = vadd.f32 %v1885, %v2233
        %v2276 = vadd.f32 %v1886, %v2238
        %v2277 = vadd.f32 %v1887, %v2243
        %v2278 = vld [vmem:[%s359 + $0x2] sm:$0xff]
        %v2279 = vld [vmem:[%s359 + $0xa] sm:$0xff]
        %v2280 = vld [vmem:[%s359 + $0x1a] sm:$0xff]
        %v2281 = vld [vmem:[%s359 + $0x22] sm:$0xff]
        %v2282 = vld [vmem:[%s359 + $0x32] sm:$0xff]
        %v2283 = vld [vmem:[%s359 + $0x3a] sm:$0xff]
        %v2284 = vld [vmem:[%s359 + $0x4a] sm:$0xff]
        %v2285 = vld [vmem:[%s359 + $0x52] sm:$0xff]
        %v2286 = vld [vmem:[%s359 + $0x62] sm:$0xff]
        %v2287 = vld [vmem:[%s359 + $0x6a] sm:$0xff]
        %v2288 = vld [vmem:[%s359 + $0x7a] sm:$0xff]
        %v2289 = vld [vmem:[%s359 + $0x82] sm:$0xff]
        %v2290 = vld [vmem:[%s359 + $0x92] sm:$0xff]
        %v2291 = vld [vmem:[%s359 + $0x9a] sm:$0xff]
        %v2292 = vld [vmem:[%s359 + $0xaa] sm:$0xff]
        %v2293 = vld [vmem:[%s359 + $0xb2] sm:$0xff]
        %v2294 = vld [vmem:[%s359 + $0xc2] sm:$0xff]
        %v2295 = vld [vmem:[%s359 + $0xca] sm:$0xff]
        %v2296 = vld [vmem:[%s359 + $0xda] sm:$0xff]
        %v2297 = vld [vmem:[%s359 + $0xe2] sm:$0xff]
        %v2298 = vld [vmem:[%s359 + $0xf2] sm:$0xff]
        %v2299 = vld [vmem:[%s359 + $0xfa] sm:$0xff]
        %v2300 = vld [vmem:[%s359 + $0x10a] sm:$0xff]
        %v2301 = vld [vmem:[%s359 + $0x112] sm:$0xff]
        %v2302 = vld [vmem:[%s359 + $0x122] sm:$0xff]
        %v2303 = vld [vmem:[%s359 + $0x12a] sm:$0xff]
        %v2304 = vld [vmem:[%s359 + $0x13a] sm:$0xff]
        %v2305 = vld [vmem:[%s359 + $0x142] sm:$0xff]
        %v2306 = vld [vmem:[%s359 + $0x152] sm:$0xff]
        %v2307 = vld [vmem:[%s359 + $0x15a] sm:$0xff]
        %v2308 = vld [vmem:[%s359 + $0x16a] sm:$0xff]
        %v2309 = vld [vmem:[%s359 + $0x172] sm:$0xff]
        %s2310 = scalar_lea.vmem %s1, 20
        %v2311 = vld [vmem:[%s2310] sm:$0xf]
        %v2313 = vsel %vm303, %v2278, 0
        %v2316 = vsel %vm303, %v2279, 0
        %v2319 = vsel %vm303, %v2280, 0
        %v2322 = vsel %vm303, %v2281, 0
        %v2325 = vsel %vm303, %v2282, 0
        %v2328 = vsel %vm303, %v2283, 0
        %v2331 = vsel %vm303, %v2284, 0
        %v2334 = vsel %vm303, %v2285, 0
        %v2337 = vsel %vm303, %v2286, 0
        %v2340 = vsel %vm303, %v2287, 0
        %v2343 = vsel %vm303, %v2288, 0
        %v2346 = vsel %vm303, %v2289, 0
        %v2349 = vsel %vm303, %v2290, 0
        %v2352 = vsel %vm303, %v2291, 0
        %v2355 = vsel %vm303, %v2292, 0
        %v2358 = vsel %vm303, %v2293, 0
        %v2361 = vsel %vm303, %v2294, 0
        %v2364 = vsel %vm303, %v2295, 0
        %v2367 = vsel %vm303, %v2296, 0
        %v2370 = vsel %vm303, %v2297, 0
        %v2373 = vsel %vm303, %v2298, 0
        %v2376 = vsel %vm303, %v2299, 0
        %v2379 = vsel %vm303, %v2300, 0
        %v2382 = vsel %vm303, %v2301, 0
        %v2385 = vsel %vm303, %v2302, 0
        %v2388 = vsel %vm303, %v2303, 0
        %v2391 = vsel %vm303, %v2304, 0
        %v2394 = vsel %vm303, %v2305, 0
        %v2397 = vsel %vm303, %v2306, 0
        %v2400 = vsel %vm303, %v2307, 0
        %v2403 = vsel %vm303, %v2308, 0
        %v2406 = vsel %vm303, %v2309, 0
        %v2409 = vsel %vm555, %v2311, 0
        %2411 = vmatprep.subr.mxu0 0.0
        %2412 = vmatpush1.msra.mxu0 %v2409
        %2413 = vmatprep.subr.mxu0 0.0
        %2414 = vmatpush1.msra.mxu0 0.0
        %2415 = vmatprep.subr.mxu0 0.0
        %2416 = vmatpush1.msra.mxu0 0.0
        %2417 = vmatprep.subr.mxu0 0.0
        %2418 = vmatpush1.msra.mxu0 0.0
        %2419 = vmatprep.subr.mxu0 0.0
        %2420 = vmatpush1.msra.mxu0 0.0
        %2421 = vmatprep.subr.mxu0 0.0
        %2422 = vmatpush1.msra.mxu0 0.0
        %2423 = vmatprep.subr.mxu0 0.0
        %2424 = vmatpush1.msra.mxu0 0.0
        %2425 = vmatprep.subr.mxu0 0.0
        %2426 = vmatpush1.msra.mxu0 0.0
        %2427 = vmatprep.subr.mxu0 0.0
        %2428 = vmatpush1.msra.mxu0 0.0
        %2429 = vmatprep.subr.mxu0 0.0
        %2430 = vmatpush1.msra.mxu0 0.0
        %2431 = vmatprep.subr.mxu0 0.0
        %2432 = vmatpush1.msra.mxu0 0.0
        %2433 = vmatprep.subr.mxu0 0.0
        %2434 = vmatpush1.msra.mxu0 0.0
        %2435 = vmatprep.subr.mxu0 0.0
        %2436 = vmatpush1.msra.mxu0 0.0
        %2437 = vmatprep.subr.mxu0 0.0
        %2438 = vmatpush1.msra.mxu0 0.0
        %2439 = vmatprep.subr.mxu0 0.0
        %2440 = vmatpush1.msra.mxu0 0.0
        %2441 = vmatprep.subr.mxu0 0.0
        %2442 = vmatpush1.msra.mxu0 0.0
        %2443 = vmatprep.subr.mxu0 0.0
        %2444 = vmatpush1.msra.mxu0 0.0
        %2445 = vmatprep.subr.mxu0 0.0
        %2446 = vmatpush1.msra.mxu0 0.0
        %2447 = vmatprep.subr.mxu0 0.0
        %2448 = vmatpush1.msra.mxu0 0.0
        %2449 = vmatprep.subr.mxu0 0.0
        %2450 = vmatpush1.msra.mxu0 0.0
        %2451 = vmatprep.subr.mxu0 0.0
        %2452 = vmatpush1.msra.mxu0 0.0
        %2453 = vmatprep.subr.mxu0 0.0
        %2454 = vmatpush1.msra.mxu0 0.0
        %2455 = vmatprep.subr.mxu0 0.0
        %2456 = vmatpush1.msra.mxu0 0.0
        %2457 = vmatprep.subr.mxu0 0.0
        %2458 = vmatpush1.msra.mxu0 0.0
        %2459 = vmatprep.subr.mxu0 0.0
        %2460 = vmatpush1.msra.mxu0 0.0
        %2461 = vmatprep.subr.mxu0 0.0
        %2462 = vmatpush1.msra.mxu0 0.0
        %2463 = vmatprep.subr.mxu0 0.0
        %2464 = vmatpush1.msra.mxu0 0.0
        %2465 = vmatprep.subr.mxu0 0.0
        %2466 = vmatpush1.msra.mxu0 0.0
        %2467 = vmatprep.subr.mxu0 0.0
        %2468 = vmatpush1.msra.mxu0 0.0
        %2469 = vmatprep.subr.mxu0 0.0
        %2470 = vmatpush1.msra.mxu0 0.0
        %2471 = vmatprep.subr.mxu0 0.0
        %2472 = vmatpush1.msra.mxu0 0.0
        %2473 = vmatprep.subr.mxu0 0.0
        %2474 = vmatpush1.msra.mxu0 0.0
        %2475 = vmatprep.mubr.f32.mxu0 0.0
        %2476 = vmatmul.mubr.f32.gmra.mrb[0].mxu0 %v2313
        %v2477 = vpop.f32.mrb[0].mxu0
        %v2478 = vadd.f32 0.0, %v2477
        %v2479 = vpop.f32.mrb[0].mxu0
        %2480 = vmatprep.mubr.f32.mxu0 0.0
        %2481 = vmatmul.mubr.f32.gmra.mrb[0].mxu0 %v2316
        %v2482 = vpop.f32.mrb[0].mxu0
        %v2483 = vadd.f32 0.0, %v2482
        %v2484 = vpop.f32.mrb[0].mxu0
        %2485 = vmatprep.mubr.f32.mxu0 0.0
        %2486 = vmatmul.mubr.f32.gmra.mrb[0].mxu0 %v2319
        %v2487 = vpop.f32.mrb[0].mxu0
        %v2488 = vadd.f32 0.0, %v2487
        %v2489 = vpop.f32.mrb[0].mxu0
        %2490 = vmatprep.mubr.f32.mxu0 0.0
        %2491 = vmatmul.mubr.f32.gmra.mrb[0].mxu0 %v2322
        %v2492 = vpop.f32.mrb[0].mxu0
        %v2493 = vadd.f32 0.0, %v2492
        %v2494 = vpop.f32.mrb[0].mxu0
        %2495 = vmatprep.mubr.f32.mxu0 0.0
        %2496 = vmatmul.mubr.f32.gmra.mrb[0].mxu0 %v2325
        %v2497 = vpop.f32.mrb[0].mxu0
        %v2498 = vadd.f32 0.0, %v2497
        %v2499 = vpop.f32.mrb[0].mxu0
        %2500 = vmatprep.mubr.f32.mxu0 0.0
        %2501 = vmatmul.mubr.f32.gmra.mrb[0].mxu0 %v2328
        %v2502 = vpop.f32.mrb[0].mxu0
        %v2503 = vadd.f32 0.0, %v2502
        %v2504 = vpop.f32.mrb[0].mxu0
        %2505 = vmatprep.mubr.f32.mxu0 0.0
        %2506 = vmatmul.mubr.f32.gmra.mrb[0].mxu0 %v2331
        %v2507 = vpop.f32.mrb[0].mxu0
        %v2508 = vadd.f32 0.0, %v2507
        %v2509 = vpop.f32.mrb[0].mxu0
        %2510 = vmatprep.mubr.f32.mxu0 0.0
        %2511 = vmatmul.mubr.f32.gmra.mrb[0].mxu0 %v2334
        %v2512 = vpop.f32.mrb[0].mxu0
        %v2513 = vadd.f32 0.0, %v2512
        %v2514 = vpop.f32.mrb[0].mxu0
        %2515 = vmatprep.mubr.f32.mxu0 0.0
        %2516 = vmatmul.mubr.f32.gmra.mrb[0].mxu0 %v2337
        %v2517 = vpop.f32.mrb[0].mxu0
        %v2518 = vadd.f32 0.0, %v2517
        %v2519 = vpop.f32.mrb[0].mxu0
        %2520 = vmatprep.mubr.f32.mxu0 0.0
        %2521 = vmatmul.mubr.f32.gmra.mrb[0].mxu0 %v2340
        %v2522 = vpop.f32.mrb[0].mxu0
        %v2523 = vadd.f32 0.0, %v2522
        %v2524 = vpop.f32.mrb[0].mxu0
        %2525 = vmatprep.mubr.f32.mxu0 0.0
        %2526 = vmatmul.mubr.f32.gmra.mrb[0].mxu0 %v2343
        %v2527 = vpop.f32.mrb[0].mxu0
        %v2528 = vadd.f32 0.0, %v2527
        %v2529 = vpop.f32.mrb[0].mxu0
        %2530 = vmatprep.mubr.f32.mxu0 0.0
        %2531 = vmatmul.mubr.f32.gmra.mrb[0].mxu0 %v2346
        %v2532 = vpop.f32.mrb[0].mxu0
        %v2533 = vadd.f32 0.0, %v2532
        %v2534 = vpop.f32.mrb[0].mxu0
        %2535 = vmatprep.mubr.f32.mxu0 0.0
        %2536 = vmatmul.mubr.f32.gmra.mrb[0].mxu0 %v2349
        %v2537 = vpop.f32.mrb[0].mxu0
        %v2538 = vadd.f32 0.0, %v2537
        %v2539 = vpop.f32.mrb[0].mxu0
        %2540 = vmatprep.mubr.f32.mxu0 0.0
        %2541 = vmatmul.mubr.f32.gmra.mrb[0].mxu0 %v2352
        %v2542 = vpop.f32.mrb[0].mxu0
        %v2543 = vadd.f32 0.0, %v2542
        %v2544 = vpop.f32.mrb[0].mxu0
        %2545 = vmatprep.mubr.f32.mxu0 0.0
        %2546 = vmatmul.mubr.f32.gmra.mrb[0].mxu0 %v2355
        %v2547 = vpop.f32.mrb[0].mxu0
        %v2548 = vadd.f32 0.0, %v2547
        %v2549 = vpop.f32.mrb[0].mxu0
        %2550 = vmatprep.mubr.f32.mxu0 0.0
        %2551 = vmatmul.mubr.f32.gmra.mrb[0].mxu0 %v2358
        %v2552 = vpop.f32.mrb[0].mxu0
        %v2553 = vadd.f32 0.0, %v2552
        %v2554 = vpop.f32.mrb[0].mxu0
        %2555 = vmatprep.mubr.f32.mxu0 0.0
        %2556 = vmatmul.mubr.f32.gmra.mrb[0].mxu0 %v2361
        %v2557 = vpop.f32.mrb[0].mxu0
        %v2558 = vadd.f32 0.0, %v2557
        %v2559 = vpop.f32.mrb[0].mxu0
        %2560 = vmatprep.mubr.f32.mxu0 0.0
        %2561 = vmatmul.mubr.f32.gmra.mrb[0].mxu0 %v2364
        %v2562 = vpop.f32.mrb[0].mxu0
        %v2563 = vadd.f32 0.0, %v2562
        %v2564 = vpop.f32.mrb[0].mxu0
        %2565 = vmatprep.mubr.f32.mxu0 0.0
        %2566 = vmatmul.mubr.f32.gmra.mrb[0].mxu0 %v2367
        %v2567 = vpop.f32.mrb[0].mxu0
        %v2568 = vadd.f32 0.0, %v2567
        %v2569 = vpop.f32.mrb[0].mxu0
        %2570 = vmatprep.mubr.f32.mxu0 0.0
        %2571 = vmatmul.mubr.f32.gmra.mrb[0].mxu0 %v2370
        %v2572 = vpop.f32.mrb[0].mxu0
        %v2573 = vadd.f32 0.0, %v2572
        %v2574 = vpop.f32.mrb[0].mxu0
        %2575 = vmatprep.mubr.f32.mxu0 0.0
        %2576 = vmatmul.mubr.f32.gmra.mrb[0].mxu0 %v2373
        %v2577 = vpop.f32.mrb[0].mxu0
        %v2578 = vadd.f32 0.0, %v2577
        %v2579 = vpop.f32.mrb[0].mxu0
        %2580 = vmatprep.mubr.f32.mxu0 0.0
        %2581 = vmatmul.mubr.f32.gmra.mrb[0].mxu0 %v2376
        %v2582 = vpop.f32.mrb[0].mxu0
        %v2583 = vadd.f32 0.0, %v2582
        %v2584 = vpop.f32.mrb[0].mxu0
        %2585 = vmatprep.mubr.f32.mxu0 0.0
        %2586 = vmatmul.mubr.f32.gmra.mrb[0].mxu0 %v2379
        %v2587 = vpop.f32.mrb[0].mxu0
        %v2588 = vadd.f32 0.0, %v2587
        %v2589 = vpop.f32.mrb[0].mxu0
        %2590 = vmatprep.mubr.f32.mxu0 0.0
        %2591 = vmatmul.mubr.f32.gmra.mrb[0].mxu0 %v2382
        %v2592 = vpop.f32.mrb[0].mxu0
        %v2593 = vadd.f32 0.0, %v2592
        %v2594 = vpop.f32.mrb[0].mxu0
        %2595 = vmatprep.mubr.f32.mxu0 0.0
        %2596 = vmatmul.mubr.f32.gmra.mrb[0].mxu0 %v2385
        %v2597 = vpop.f32.mrb[0].mxu0
        %v2598 = vadd.f32 0.0, %v2597
        %v2599 = vpop.f32.mrb[0].mxu0
        %2600 = vmatprep.mubr.f32.mxu0 0.0
        %2601 = vmatmul.mubr.f32.gmra.mrb[0].mxu0 %v2388
        %v2602 = vpop.f32.mrb[0].mxu0
        %v2603 = vadd.f32 0.0, %v2602
        %v2604 = vpop.f32.mrb[0].mxu0
        %2605 = vmatprep.mubr.f32.mxu0 0.0
        %2606 = vmatmul.mubr.f32.gmra.mrb[0].mxu0 %v2391
        %v2607 = vpop.f32.mrb[0].mxu0
        %v2608 = vadd.f32 0.0, %v2607
        %v2609 = vpop.f32.mrb[0].mxu0
        %2610 = vmatprep.mubr.f32.mxu0 0.0
        %2611 = vmatmul.mubr.f32.gmra.mrb[0].mxu0 %v2394
        %v2612 = vpop.f32.mrb[0].mxu0
        %v2613 = vadd.f32 0.0, %v2612
        %v2614 = vpop.f32.mrb[0].mxu0
        %2615 = vmatprep.mubr.f32.mxu0 0.0
        %2616 = vmatmul.mubr.f32.gmra.mrb[0].mxu0 %v2397
        %v2617 = vpop.f32.mrb[0].mxu0
        %v2618 = vadd.f32 0.0, %v2617
        %v2619 = vpop.f32.mrb[0].mxu0
        %2620 = vmatprep.mubr.f32.mxu0 0.0
        %2621 = vmatmul.mubr.f32.gmra.mrb[0].mxu0 %v2400
        %v2622 = vpop.f32.mrb[0].mxu0
        %v2623 = vadd.f32 0.0, %v2622
        %v2624 = vpop.f32.mrb[0].mxu0
        %2625 = vmatprep.mubr.f32.mxu0 0.0
        %2626 = vmatmul.mubr.f32.gmra.mrb[0].mxu0 %v2403
        %v2627 = vpop.f32.mrb[0].mxu0
        %v2628 = vadd.f32 0.0, %v2627
        %v2629 = vpop.f32.mrb[0].mxu0
        %2630 = vmatprep.mubr.f32.mxu0 0.0
        %2631 = vmatmul.mubr.f32.gmra.mrb[0].mxu0 %v2406
        %v2632 = vpop.f32.mrb[0].mxu0
        %v2633 = vadd.f32 0.0, %v2632
        %v2634 = vpop.f32.mrb[0].mxu0
        %2635 = vdwg.mxu0
        %v2636 = vadd.f32 %v2246, %v2478
        %v2637 = vadd.f32 %v2247, %v2483
        %v2638 = vadd.f32 %v2248, %v2488
        %v2639 = vadd.f32 %v2249, %v2493
        %v2640 = vadd.f32 %v2250, %v2498
        %v2641 = vadd.f32 %v2251, %v2503
        %v2642 = vadd.f32 %v2252, %v2508
        %v2643 = vadd.f32 %v2253, %v2513
        %v2644 = vadd.f32 %v2254, %v2518
        %v2645 = vadd.f32 %v2255, %v2523
        %v2646 = vadd.f32 %v2256, %v2528
        %v2647 = vadd.f32 %v2257, %v2533
        %v2648 = vadd.f32 %v2258, %v2538
        %v2649 = vadd.f32 %v2259, %v2543
        %v2650 = vadd.f32 %v2260, %v2548
        %v2651 = vadd.f32 %v2261, %v2553
        %v2652 = vadd.f32 %v2262, %v2558
        %v2653 = vadd.f32 %v2263, %v2563
        %v2654 = vadd.f32 %v2264, %v2568
        %v2655 = vadd.f32 %v2265, %v2573
        %v2656 = vadd.f32 %v2266, %v2578
        %v2657 = vadd.f32 %v2267, %v2583
        %v2658 = vadd.f32 %v2268, %v2588
        %v2659 = vadd.f32 %v2269, %v2593
        %v2660 = vadd.f32 %v2270, %v2598
        %v2661 = vadd.f32 %v2271, %v2603
        %v2662 = vadd.f32 %v2272, %v2608
        %v2663 = vadd.f32 %v2273, %v2613
        %v2664 = vadd.f32 %v2274, %v2618
        %v2665 = vadd.f32 %v2275, %v2623
        %v2666 = vadd.f32 %v2276, %v2628
        %v2667 = vadd.f32 %v2277, %v2633
        %s2668 = scalar_lea.vmem [#allocation2], 48
        %v2669 = vld [vmem:[%s2668] sm:$0xff]
        %v2670 = vld [vmem:[%s2668 + $0x8] sm:$0xff]
        %v2671 = vld [vmem:[%s2668 + $0x18] sm:$0xff]
        %v2672 = vld [vmem:[%s2668 + $0x20] sm:$0xff]
        %v2673 = vld [vmem:[%s2668 + $0x30] sm:$0xff]
        %v2674 = vld [vmem:[%s2668 + $0x38] sm:$0xff]
        %v2675 = vld [vmem:[%s2668 + $0x48] sm:$0xff]
        %v2676 = vld [vmem:[%s2668 + $0x50] sm:$0xff]
        %v2677 = vld [vmem:[%s2668 + $0x60] sm:$0xff]
        %v2678 = vld [vmem:[%s2668 + $0x68] sm:$0xff]
        %v2679 = vld [vmem:[%s2668 + $0x78] sm:$0xff]
        %v2680 = vld [vmem:[%s2668 + $0x80] sm:$0xff]
        %v2681 = vld [vmem:[%s2668 + $0x90] sm:$0xff]
        %v2682 = vld [vmem:[%s2668 + $0x98] sm:$0xff]
        %v2683 = vld [vmem:[%s2668 + $0xa8] sm:$0xff]
        %v2684 = vld [vmem:[%s2668 + $0xb0] sm:$0xff]
        %v2685 = vld [vmem:[%s2668 + $0xc0] sm:$0xff]
        %v2686 = vld [vmem:[%s2668 + $0xc8] sm:$0xff]
        %v2687 = vld [vmem:[%s2668 + $0xd8] sm:$0xff]
        %v2688 = vld [vmem:[%s2668 + $0xe0] sm:$0xff]
        %v2689 = vld [vmem:[%s2668 + $0xf0] sm:$0xff]
        %v2690 = vld [vmem:[%s2668 + $0xf8] sm:$0xff]
        %v2691 = vld [vmem:[%s2668 + $0x108] sm:$0xff]
        %v2692 = vld [vmem:[%s2668 + $0x110] sm:$0xff]
        %v2693 = vld [vmem:[%s2668 + $0x120] sm:$0xff]
        %v2694 = vld [vmem:[%s2668 + $0x128] sm:$0xff]
        %v2695 = vld [vmem:[%s2668 + $0x138] sm:$0xff]
        %v2696 = vld [vmem:[%s2668 + $0x140] sm:$0xff]
        %v2697 = vld [vmem:[%s2668 + $0x150] sm:$0xff]
        %v2698 = vld [vmem:[%s2668 + $0x158] sm:$0xff]
        %v2699 = vld [vmem:[%s2668 + $0x168] sm:$0xff]
        %v2700 = vld [vmem:[%s2668 + $0x170] sm:$0xff]
        %s2701 = scalar_lea.vmem %s1, 24
        %v2702 = vld [vmem:[%s2701] sm:$0xf]
        %v2704 = vsel %vm303, %v2669, 0
        %v2707 = vsel %vm303, %v2670, 0
        %v2710 = vsel %vm303, %v2671, 0
        %v2713 = vsel %vm303, %v2672, 0
        %v2716 = vsel %vm303, %v2673, 0
        %v2719 = vsel %vm303, %v2674, 0
        %v2722 = vsel %vm303, %v2675, 0
        %v2725 = vsel %vm303, %v2676, 0
        %v2728 = vsel %vm303, %v2677, 0
        %v2731 = vsel %vm303, %v2678, 0
        %v2734 = vsel %vm303, %v2679, 0
        %v2737 = vsel %vm303, %v2680, 0
        %v2740 = vsel %vm303, %v2681, 0
        %v2743 = vsel %vm303, %v2682, 0
        %v2746 = vsel %vm303, %v2683, 0
        %v2749 = vsel %vm303, %v2684, 0
        %v2752 = vsel %vm303, %v2685, 0
        %v2755 = vsel %vm303, %v2686, 0
        %v2758 = vsel %vm303, %v2687, 0
        %v2761 = vsel %vm303, %v2688, 0
        %v2764 = vsel %vm303, %v2689, 0
        %v2767 = vsel %vm303, %v2690, 0
        %v2770 = vsel %vm303, %v2691, 0
        %v2773 = vsel %vm303, %v2692, 0
        %v2776 = vsel %vm303, %v2693, 0
        %v2779 = vsel %vm303, %v2694, 0
        %v2782 = vsel %vm303, %v2695, 0
        %v2785 = vsel %vm303, %v2696, 0
        %v2788 = vsel %vm303, %v2697, 0
        %v2791 = vsel %vm303, %v2698, 0
        %v2794 = vsel %vm303, %v2699, 0
        %v2797 = vsel %vm303, %v2700, 0
        %v2800 = vsel %vm555, %v2702, 0
        %2802 = vmatprep.subr.mxu0 0.0
        %2803 = vmatpush1.msra.mxu0 %v2800
        %2804 = vmatprep.subr.mxu0 0.0
        %2805 = vmatpush1.msra.mxu0 0.0
        %2806 = vmatprep.subr.mxu0 0.0
        %2807 = vmatpush1.msra.mxu0 0.0
        %2808 = vmatprep.subr.mxu0 0.0
        %2809 = vmatpush1.msra.mxu0 0.0
        %2810 = vmatprep.subr.mxu0 0.0
        %2811 = vmatpush1.msra.mxu0 0.0
        %2812 = vmatprep.subr.mxu0 0.0
        %2813 = vmatpush1.msra.mxu0 0.0
        %2814 = vmatprep.subr.mxu0 0.0
        %2815 = vmatpush1.msra.mxu0 0.0
        %2816 = vmatprep.subr.mxu0 0.0
        %2817 = vmatpush1.msra.mxu0 0.0
        %2818 = vmatprep.subr.mxu0 0.0
        %2819 = vmatpush1.msra.mxu0 0.0
        %2820 = vmatprep.subr.mxu0 0.0
        %2821 = vmatpush1.msra.mxu0 0.0
        %2822 = vmatprep.subr.mxu0 0.0
        %2823 = vmatpush1.msra.mxu0 0.0
        %2824 = vmatprep.subr.mxu0 0.0
        %2825 = vmatpush1.msra.mxu0 0.0
        %2826 = vmatprep.subr.mxu0 0.0
        %2827 = vmatpush1.msra.mxu0 0.0
        %2828 = vmatprep.subr.mxu0 0.0
        %2829 = vmatpush1.msra.mxu0 0.0
        %2830 = vmatprep.subr.mxu0 0.0
        %2831 = vmatpush1.msra.mxu0 0.0
        %2832 = vmatprep.subr.mxu0 0.0
        %2833 = vmatpush1.msra.mxu0 0.0
        %2834 = vmatprep.subr.mxu0 0.0
        %2835 = vmatpush1.msra.mxu0 0.0
        %2836 = vmatprep.subr.mxu0 0.0
        %2837 = vmatpush1.msra.mxu0 0.0
        %2838 = vmatprep.subr.mxu0 0.0
        %2839 = vmatpush1.msra.mxu0 0.0
        %2840 = vmatprep.subr.mxu0 0.0
        %2841 = vmatpush1.msra.mxu0 0.0
        %2842 = vmatprep.subr.mxu0 0.0
        %2843 = vmatpush1.msra.mxu0 0.0
        %2844 = vmatprep.subr.mxu0 0.0
        %2845 = vmatpush1.msra.mxu0 0.0
        %2846 = vmatprep.subr.mxu0 0.0
        %2847 = vmatpush1.msra.mxu0 0.0
        %2848 = vmatprep.subr.mxu0 0.0
        %2849 = vmatpush1.msra.mxu0 0.0
        %2850 = vmatprep.subr.mxu0 0.0
        %2851 = vmatpush1.msra.mxu0 0.0
        %2852 = vmatprep.subr.mxu0 0.0
        %2853 = vmatpush1.msra.mxu0 0.0
        %2854 = vmatprep.subr.mxu0 0.0
        %2855 = vmatpush1.msra.mxu0 0.0
        %2856 = vmatprep.subr.mxu0 0.0
        %2857 = vmatpush1.msra.mxu0 0.0
        %2858 = vmatprep.subr.mxu0 0.0
        %2859 = vmatpush1.msra.mxu0 0.0
        %2860 = vmatprep.subr.mxu0 0.0
        %2861 = vmatpush1.msra.mxu0 0.0
        %2862 = vmatprep.subr.mxu0 0.0
        %2863 = vmatpush1.msra.mxu0 0.0
        %2864 = vmatprep.subr.mxu0 0.0
        %2865 = vmatpush1.msra.mxu0 0.0
        %2866 = vmatprep.mubr.f32.mxu0 0.0
        %2867 = vmatmul.mubr.f32.gmra.mrb[0].mxu0 %v2704
        %v2868 = vpop.f32.mrb[0].mxu0
        %v2869 = vadd.f32 0.0, %v2868
        %v2870 = vpop.f32.mrb[0].mxu0
        %2871 = vmatprep.mubr.f32.mxu0 0.0
        %2872 = vmatmul.mubr.f32.gmra.mrb[0].mxu0 %v2707
        %v2873 = vpop.f32.mrb[0].mxu0
        %v2874 = vadd.f32 0.0, %v2873
        %v2875 = vpop.f32.mrb[0].mxu0
        %2876 = vmatprep.mubr.f32.mxu0 0.0
        %2877 = vmatmul.mubr.f32.gmra.mrb[0].mxu0 %v2710
        %v2878 = vpop.f32.mrb[0].mxu0
        %v2879 = vadd.f32 0.0, %v2878
        %v2880 = vpop.f32.mrb[0].mxu0
        %2881 = vmatprep.mubr.f32.mxu0 0.0
        %2882 = vmatmul.mubr.f32.gmra.mrb[0].mxu0 %v2713
        %v2883 = vpop.f32.mrb[0].mxu0
        %v2884 = vadd.f32 0.0, %v2883
        %v2885 = vpop.f32.mrb[0].mxu0
        %2886 = vmatprep.mubr.f32.mxu0 0.0
        %2887 = vmatmul.mubr.f32.gmra.mrb[0].mxu0 %v2716
        %v2888 = vpop.f32.mrb[0].mxu0
        %v2889 = vadd.f32 0.0, %v2888
        %v2890 = vpop.f32.mrb[0].mxu0
        %2891 = vmatprep.mubr.f32.mxu0 0.0
        %2892 = vmatmul.mubr.f32.gmra.mrb[0].mxu0 %v2719
        %v2893 = vpop.f32.mrb[0].mxu0
        %v2894 = vadd.f32 0.0, %v2893
        %v2895 = vpop.f32.mrb[0].mxu0
        %2896 = vmatprep.mubr.f32.mxu0 0.0
        %2897 = vmatmul.mubr.f32.gmra.mrb[0].mxu0 %v2722
        %v2898 = vpop.f32.mrb[0].mxu0
        %v2899 = vadd.f32 0.0, %v2898
        %v2900 = vpop.f32.mrb[0].mxu0
        %2901 = vmatprep.mubr.f32.mxu0 0.0
        %2902 = vmatmul.mubr.f32.gmra.mrb[0].mxu0 %v2725
        %v2903 = vpop.f32.mrb[0].mxu0
        %v2904 = vadd.f32 0.0, %v2903
        %v2905 = vpop.f32.mrb[0].mxu0
        %2906 = vmatprep.mubr.f32.mxu0 0.0
        %2907 = vmatmul.mubr.f32.gmra.mrb[0].mxu0 %v2728
        %v2908 = vpop.f32.mrb[0].mxu0
        %v2909 = vadd.f32 0.0, %v2908
        %v2910 = vpop.f32.mrb[0].mxu0
        %2911 = vmatprep.mubr.f32.mxu0 0.0
        %2912 = vmatmul.mubr.f32.gmra.mrb[0].mxu0 %v2731
        %v2913 = vpop.f32.mrb[0].mxu0
        %v2914 = vadd.f32 0.0, %v2913
        %v2915 = vpop.f32.mrb[0].mxu0
        %2916 = vmatprep.mubr.f32.mxu0 0.0
        %2917 = vmatmul.mubr.f32.gmra.mrb[0].mxu0 %v2734
        %v2918 = vpop.f32.mrb[0].mxu0
        %v2919 = vadd.f32 0.0, %v2918
        %v2920 = vpop.f32.mrb[0].mxu0
        %2921 = vmatprep.mubr.f32.mxu0 0.0
        %2922 = vmatmul.mubr.f32.gmra.mrb[0].mxu0 %v2737
        %v2923 = vpop.f32.mrb[0].mxu0
        %v2924 = vadd.f32 0.0, %v2923
        %v2925 = vpop.f32.mrb[0].mxu0
        %2926 = vmatprep.mubr.f32.mxu0 0.0
        %2927 = vmatmul.mubr.f32.gmra.mrb[0].mxu0 %v2740
        %v2928 = vpop.f32.mrb[0].mxu0
        %v2929 = vadd.f32 0.0, %v2928
        %v2930 = vpop.f32.mrb[0].mxu0
        %2931 = vmatprep.mubr.f32.mxu0 0.0
        %2932 = vmatmul.mubr.f32.gmra.mrb[0].mxu0 %v2743
        %v2933 = vpop.f32.mrb[0].mxu0
        %v2934 = vadd.f32 0.0, %v2933
        %v2935 = vpop.f32.mrb[0].mxu0
        %2936 = vmatprep.mubr.f32.mxu0 0.0
        %2937 = vmatmul.mubr.f32.gmra.mrb[0].mxu0 %v2746
        %v2938 = vpop.f32.mrb[0].mxu0
        %v2939 = vadd.f32 0.0, %v2938
        %v2940 = vpop.f32.mrb[0].mxu0
        %2941 = vmatprep.mubr.f32.mxu0 0.0
        %2942 = vmatmul.mubr.f32.gmra.mrb[0].mxu0 %v2749
        %v2943 = vpop.f32.mrb[0].mxu0
        %v2944 = vadd.f32 0.0, %v2943
        %v2945 = vpop.f32.mrb[0].mxu0
        %2946 = vmatprep.mubr.f32.mxu0 0.0
        %2947 = vmatmul.mubr.f32.gmra.mrb[0].mxu0 %v2752
        %v2948 = vpop.f32.mrb[0].mxu0
        %v2949 = vadd.f32 0.0, %v2948
        %v2950 = vpop.f32.mrb[0].mxu0
        %2951 = vmatprep.mubr.f32.mxu0 0.0
        %2952 = vmatmul.mubr.f32.gmra.mrb[0].mxu0 %v2755
        %v2953 = vpop.f32.mrb[0].mxu0
        %v2954 = vadd.f32 0.0, %v2953
        %v2955 = vpop.f32.mrb[0].mxu0
        %2956 = vmatprep.mubr.f32.mxu0 0.0
        %2957 = vmatmul.mubr.f32.gmra.mrb[0].mxu0 %v2758
        %v2958 = vpop.f32.mrb[0].mxu0
        %v2959 = vadd.f32 0.0, %v2958
        %v2960 = vpop.f32.mrb[0].mxu0
        %2961 = vmatprep.mubr.f32.mxu0 0.0
        %2962 = vmatmul.mubr.f32.gmra.mrb[0].mxu0 %v2761
        %v2963 = vpop.f32.mrb[0].mxu0
        %v2964 = vadd.f32 0.0, %v2963
        %v2965 = vpop.f32.mrb[0].mxu0
        %2966 = vmatprep.mubr.f32.mxu0 0.0
        %2967 = vmatmul.mubr.f32.gmra.mrb[0].mxu0 %v2764
        %v2968 = vpop.f32.mrb[0].mxu0
        %v2969 = vadd.f32 0.0, %v2968
        %v2970 = vpop.f32.mrb[0].mxu0
        %2971 = vmatprep.mubr.f32.mxu0 0.0
        %2972 = vmatmul.mubr.f32.gmra.mrb[0].mxu0 %v2767
        %v2973 = vpop.f32.mrb[0].mxu0
        %v2974 = vadd.f32 0.0, %v2973
        %v2975 = vpop.f32.mrb[0].mxu0
        %2976 = vmatprep.mubr.f32.mxu0 0.0
        %2977 = vmatmul.mubr.f32.gmra.mrb[0].mxu0 %v2770
        %v2978 = vpop.f32.mrb[0].mxu0
        %v2979 = vadd.f32 0.0, %v2978
        %v2980 = vpop.f32.mrb[0].mxu0
        %2981 = vmatprep.mubr.f32.mxu0 0.0
        %2982 = vmatmul.mubr.f32.gmra.mrb[0].mxu0 %v2773
        %v2983 = vpop.f32.mrb[0].mxu0
        %v2984 = vadd.f32 0.0, %v2983
        %v2985 = vpop.f32.mrb[0].mxu0
        %2986 = vmatprep.mubr.f32.mxu0 0.0
        %2987 = vmatmul.mubr.f32.gmra.mrb[0].mxu0 %v2776
        %v2988 = vpop.f32.mrb[0].mxu0
        %v2989 = vadd.f32 0.0, %v2988
        %v2990 = vpop.f32.mrb[0].mxu0
        %2991 = vmatprep.mubr.f32.mxu0 0.0
        %2992 = vmatmul.mubr.f32.gmra.mrb[0].mxu0 %v2779
        %v2993 = vpop.f32.mrb[0].mxu0
        %v2994 = vadd.f32 0.0, %v2993
        %v2995 = vpop.f32.mrb[0].mxu0
        %2996 = vmatprep.mubr.f32.mxu0 0.0
        %2997 = vmatmul.mubr.f32.gmra.mrb[0].mxu0 %v2782
        %v2998 = vpop.f32.mrb[0].mxu0
        %v2999 = vadd.f32 0.0, %v2998
        %v3000 = vpop.f32.mrb[0].mxu0
        %3001 = vmatprep.mubr.f32.mxu0 0.0
        %3002 = vmatmul.mubr.f32.gmra.mrb[0].mxu0 %v2785
        %v3003 = vpop.f32.mrb[0].mxu0
        %v3004 = vadd.f32 0.0, %v3003
        %v3005 = vpop.f32.mrb[0].mxu0
        %3006 = vmatprep.mubr.f32.mxu0 0.0
        %3007 = vmatmul.mubr.f32.gmra.mrb[0].mxu0 %v2788
        %v3008 = vpop.f32.mrb[0].mxu0
        %v3009 = vadd.f32 0.0, %v3008
        %v3010 = vpop.f32.mrb[0].mxu0
        %3011 = vmatprep.mubr.f32.mxu0 0.0
        %3012 = vmatmul.mubr.f32.gmra.mrb[0].mxu0 %v2791
        %v3013 = vpop.f32.mrb[0].mxu0
        %v3014 = vadd.f32 0.0, %v3013
        %v3015 = vpop.f32.mrb[0].mxu0
        %3016 = vmatprep.mubr.f32.mxu0 0.0
        %3017 = vmatmul.mubr.f32.gmra.mrb[0].mxu0 %v2794
        %v3018 = vpop.f32.mrb[0].mxu0
        %v3019 = vadd.f32 0.0, %v3018
        %v3020 = vpop.f32.mrb[0].mxu0
        %3021 = vmatprep.mubr.f32.mxu0 0.0
        %3022 = vmatmul.mubr.f32.gmra.mrb[0].mxu0 %v2797
        %v3023 = vpop.f32.mrb[0].mxu0
        %v3024 = vadd.f32 0.0, %v3023
        %v3025 = vpop.f32.mrb[0].mxu0
        %3026 = vdwg.mxu0
        %v3027 = vadd.f32 %v2636, %v2869
        %v3028 = vadd.f32 %v2637, %v2874
        %v3029 = vadd.f32 %v2638, %v2879
        %v3030 = vadd.f32 %v2639, %v2884
        %v3031 = vadd.f32 %v2640, %v2889
        %v3032 = vadd.f32 %v2641, %v2894
        %v3033 = vadd.f32 %v2642, %v2899
        %v3034 = vadd.f32 %v2643, %v2904
        %v3035 = vadd.f32 %v2644, %v2909
        %v3036 = vadd.f32 %v2645, %v2914
        %v3037 = vadd.f32 %v2646, %v2919
        %v3038 = vadd.f32 %v2647, %v2924
        %v3039 = vadd.f32 %v2648, %v2929
        %v3040 = vadd.f32 %v2649, %v2934
        %v3041 = vadd.f32 %v2650, %v2939
        %v3042 = vadd.f32 %v2651, %v2944
        %v3043 = vadd.f32 %v2652, %v2949
        %v3044 = vadd.f32 %v2653, %v2954
        %v3045 = vadd.f32 %v2654, %v2959
        %v3046 = vadd.f32 %v2655, %v2964
        %v3047 = vadd.f32 %v2656, %v2969
        %v3048 = vadd.f32 %v2657, %v2974
        %v3049 = vadd.f32 %v2658, %v2979
        %v3050 = vadd.f32 %v2659, %v2984
        %v3051 = vadd.f32 %v2660, %v2989
        %v3052 = vadd.f32 %v2661, %v2994
        %v3053 = vadd.f32 %v2662, %v2999
        %v3054 = vadd.f32 %v2663, %v3004
        %v3055 = vadd.f32 %v2664, %v3009
        %v3056 = vadd.f32 %v2665, %v3014
        %v3057 = vadd.f32 %v2666, %v3019
        %v3058 = vadd.f32 %v2667, %v3024
        %v3059 = vld [vmem:[%s2668 + $0x1] sm:$0xff]
        %v3060 = vld [vmem:[%s2668 + $0x9] sm:$0xff]
        %v3061 = vld [vmem:[%s2668 + $0x19] sm:$0xff]
        %v3062 = vld [vmem:[%s2668 + $0x21] sm:$0xff]
        %v3063 = vld [vmem:[%s2668 + $0x31] sm:$0xff]
        %v3064 = vld [vmem:[%s2668 + $0x39] sm:$0xff]
        %v3065 = vld [vmem:[%s2668 + $0x49] sm:$0xff]
        %v3066 = vld [vmem:[%s2668 + $0x51] sm:$0xff]
        %v3067 = vld [vmem:[%s2668 + $0x61] sm:$0xff]
        %v3068 = vld [vmem:[%s2668 + $0x69] sm:$0xff]
        %v3069 = vld [vmem:[%s2668 + $0x79] sm:$0xff]
        %v3070 = vld [vmem:[%s2668 + $0x81] sm:$0xff]
        %v3071 = vld [vmem:[%s2668 + $0x91] sm:$0xff]
        %v3072 = vld [vmem:[%s2668 + $0x99] sm:$0xff]
        %v3073 = vld [vmem:[%s2668 + $0xa9] sm:$0xff]
        %v3074 = vld [vmem:[%s2668 + $0xb1] sm:$0xff]
        %v3075 = vld [vmem:[%s2668 + $0xc1] sm:$0xff]
        %v3076 = vld [vmem:[%s2668 + $0xc9] sm:$0xff]
        %v3077 = vld [vmem:[%s2668 + $0xd9] sm:$0xff]
        %v3078 = vld [vmem:[%s2668 + $0xe1] sm:$0xff]
        %v3079 = vld [vmem:[%s2668 + $0xf1] sm:$0xff]
        %v3080 = vld [vmem:[%s2668 + $0xf9] sm:$0xff]
        %v3081 = vld [vmem:[%s2668 + $0x109] sm:$0xff]
        %v3082 = vld [vmem:[%s2668 + $0x111] sm:$0xff]
        %v3083 = vld [vmem:[%s2668 + $0x121] sm:$0xff]
        %v3084 = vld [vmem:[%s2668 + $0x129] sm:$0xff]
        %v3085 = vld [vmem:[%s2668 + $0x139] sm:$0xff]
        %v3086 = vld [vmem:[%s2668 + $0x141] sm:$0xff]
        %v3087 = vld [vmem:[%s2668 + $0x151] sm:$0xff]
        %v3088 = vld [vmem:[%s2668 + $0x159] sm:$0xff]
        %v3089 = vld [vmem:[%s2668 + $0x169] sm:$0xff]
        %v3090 = vld [vmem:[%s2668 + $0x171] sm:$0xff]
        %s3091 = scalar_lea.vmem %s1, 28
        %v3092 = vld [vmem:[%s3091] sm:$0xf]
        %v3094 = vsel %vm303, %v3059, 0
        %v3097 = vsel %vm303, %v3060, 0
        %v3100 = vsel %vm303, %v3061, 0
        %v3103 = vsel %vm303, %v3062, 0
        %v3106 = vsel %vm303, %v3063, 0
        %v3109 = vsel %vm303, %v3064, 0
        %v3112 = vsel %vm303, %v3065, 0
        %v3115 = vsel %vm303, %v3066, 0
        %v3118 = vsel %vm303, %v3067, 0
        %v3121 = vsel %vm303, %v3068, 0
        %v3124 = vsel %vm303, %v3069, 0
        %v3127 = vsel %vm303, %v3070, 0
        %v3130 = vsel %vm303, %v3071, 0
        %v3133 = vsel %vm303, %v3072, 0
        %v3136 = vsel %vm303, %v3073, 0
        %v3139 = vsel %vm303, %v3074, 0
        %v3142 = vsel %vm303, %v3075, 0
        %v3145 = vsel %vm303, %v3076, 0
        %v3148 = vsel %vm303, %v3077, 0
        %v3151 = vsel %vm303, %v3078, 0
        %v3154 = vsel %vm303, %v3079, 0
        %v3157 = vsel %vm303, %v3080, 0
        %v3160 = vsel %vm303, %v3081, 0
        %v3163 = vsel %vm303, %v3082, 0
        %v3166 = vsel %vm303, %v3083, 0
        %v3169 = vsel %vm303, %v3084, 0
        %v3172 = vsel %vm303, %v3085, 0
        %v3175 = vsel %vm303, %v3086, 0
        %v3178 = vsel %vm303, %v3087, 0
        %v3181 = vsel %vm303, %v3088, 0
        %v3184 = vsel %vm303, %v3089, 0
        %v3187 = vsel %vm303, %v3090, 0
        %v3190 = vsel %vm555, %v3092, 0
        %3192 = vmatprep.subr.mxu0 0.0
        %3193 = vmatpush1.msra.mxu0 %v3190
        %3194 = vmatprep.subr.mxu0 0.0
        %3195 = vmatpush1.msra.mxu0 0.0
        %3196 = vmatprep.subr.mxu0 0.0
        %3197 = vmatpush1.msra.mxu0 0.0
        %3198 = vmatprep.subr.mxu0 0.0
        %3199 = vmatpush1.msra.mxu0 0.0
        %3200 = vmatprep.subr.mxu0 0.0
        %3201 = vmatpush1.msra.mxu0 0.0
        %3202 = vmatprep.subr.mxu0 0.0
        %3203 = vmatpush1.msra.mxu0 0.0
        %3204 = vmatprep.subr.mxu0 0.0
        %3205 = vmatpush1.msra.mxu0 0.0
        %3206 = vmatprep.subr.mxu0 0.0
        %3207 = vmatpush1.msra.mxu0 0.0
        %3208 = vmatprep.subr.mxu0 0.0
        %3209 = vmatpush1.msra.mxu0 0.0
        %3210 = vmatprep.subr.mxu0 0.0
        %3211 = vmatpush1.msra.mxu0 0.0
        %3212 = vmatprep.subr.mxu0 0.0
        %3213 = vmatpush1.msra.mxu0 0.0
        %3214 = vmatprep.subr.mxu0 0.0
        %3215 = vmatpush1.msra.mxu0 0.0
        %3216 = vmatprep.subr.mxu0 0.0
        %3217 = vmatpush1.msra.mxu0 0.0
        %3218 = vmatprep.subr.mxu0 0.0
        %3219 = vmatpush1.msra.mxu0 0.0
        %3220 = vmatprep.subr.mxu0 0.0
        %3221 = vmatpush1.msra.mxu0 0.0
        %3222 = vmatprep.subr.mxu0 0.0
        %3223 = vmatpush1.msra.mxu0 0.0
        %3224 = vmatprep.subr.mxu0 0.0
        %3225 = vmatpush1.msra.mxu0 0.0
        %3226 = vmatprep.subr.mxu0 0.0
        %3227 = vmatpush1.msra.mxu0 0.0
        %3228 = vmatprep.subr.mxu0 0.0
        %3229 = vmatpush1.msra.mxu0 0.0
        %3230 = vmatprep.subr.mxu0 0.0
        %3231 = vmatpush1.msra.mxu0 0.0
        %3232 = vmatprep.subr.mxu0 0.0
        %3233 = vmatpush1.msra.mxu0 0.0
        %3234 = vmatprep.subr.mxu0 0.0
        %3235 = vmatpush1.msra.mxu0 0.0
        %3236 = vmatprep.subr.mxu0 0.0
        %3237 = vmatpush1.msra.mxu0 0.0
        %3238 = vmatprep.subr.mxu0 0.0
        %3239 = vmatpush1.msra.mxu0 0.0
        %3240 = vmatprep.subr.mxu0 0.0
        %3241 = vmatpush1.msra.mxu0 0.0
        %3242 = vmatprep.subr.mxu0 0.0
        %3243 = vmatpush1.msra.mxu0 0.0
        %3244 = vmatprep.subr.mxu0 0.0
        %3245 = vmatpush1.msra.mxu0 0.0
        %3246 = vmatprep.subr.mxu0 0.0
        %3247 = vmatpush1.msra.mxu0 0.0
        %3248 = vmatprep.subr.mxu0 0.0
        %3249 = vmatpush1.msra.mxu0 0.0
        %3250 = vmatprep.subr.mxu0 0.0
        %3251 = vmatpush1.msra.mxu0 0.0
        %3252 = vmatprep.subr.mxu0 0.0
        %3253 = vmatpush1.msra.mxu0 0.0
        %3254 = vmatprep.subr.mxu0 0.0
        %3255 = vmatpush1.msra.mxu0 0.0
        %3256 = vmatprep.mubr.f32.mxu0 0.0
        %3257 = vmatmul.mubr.f32.gmra.mrb[0].mxu0 %v3094
        %v3258 = vpop.f32.mrb[0].mxu0
        %v3259 = vadd.f32 0.0, %v3258
        %v3260 = vpop.f32.mrb[0].mxu0
        %3261 = vmatprep.mubr.f32.mxu0 0.0
        %3262 = vmatmul.mubr.f32.gmra.mrb[0].mxu0 %v3097
        %v3263 = vpop.f32.mrb[0].mxu0
        %v3264 = vadd.f32 0.0, %v3263
        %v3265 = vpop.f32.mrb[0].mxu0
        %3266 = vmatprep.mubr.f32.mxu0 0.0
        %3267 = vmatmul.mubr.f32.gmra.mrb[0].mxu0 %v3100
        %v3268 = vpop.f32.mrb[0].mxu0
        %v3269 = vadd.f32 0.0, %v3268
        %v3270 = vpop.f32.mrb[0].mxu0
        %3271 = vmatprep.mubr.f32.mxu0 0.0
        %3272 = vmatmul.mubr.f32.gmra.mrb[0].mxu0 %v3103
        %v3273 = vpop.f32.mrb[0].mxu0
        %v3274 = vadd.f32 0.0, %v3273
        %v3275 = vpop.f32.mrb[0].mxu0
        %3276 = vmatprep.mubr.f32.mxu0 0.0
        %3277 = vmatmul.mubr.f32.gmra.mrb[0].mxu0 %v3106
        %v3278 = vpop.f32.mrb[0].mxu0
        %v3279 = vadd.f32 0.0, %v3278
        %v3280 = vpop.f32.mrb[0].mxu0
        %3281 = vmatprep.mubr.f32.mxu0 0.0
        %3282 = vmatmul.mubr.f32.gmra.mrb[0].mxu0 %v3109
        %v3283 = vpop.f32.mrb[0].mxu0
        %v3284 = vadd.f32 0.0, %v3283
        %v3285 = vpop.f32.mrb[0].mxu0
        %3286 = vmatprep.mubr.f32.mxu0 0.0
        %3287 = vmatmul.mubr.f32.gmra.mrb[0].mxu0 %v3112
        %v3288 = vpop.f32.mrb[0].mxu0
        %v3289 = vadd.f32 0.0, %v3288
        %v3290 = vpop.f32.mrb[0].mxu0
        %3291 = vmatprep.mubr.f32.mxu0 0.0
        %3292 = vmatmul.mubr.f32.gmra.mrb[0].mxu0 %v3115
        %v3293 = vpop.f32.mrb[0].mxu0
        %v3294 = vadd.f32 0.0, %v3293
        %v3295 = vpop.f32.mrb[0].mxu0
        %3296 = vmatprep.mubr.f32.mxu0 0.0
        %3297 = vmatmul.mubr.f32.gmra.mrb[0].mxu0 %v3118
        %v3298 = vpop.f32.mrb[0].mxu0
        %v3299 = vadd.f32 0.0, %v3298
        %v3300 = vpop.f32.mrb[0].mxu0
        %3301 = vmatprep.mubr.f32.mxu0 0.0
        %3302 = vmatmul.mubr.f32.gmra.mrb[0].mxu0 %v3121
        %v3303 = vpop.f32.mrb[0].mxu0
        %v3304 = vadd.f32 0.0, %v3303
        %v3305 = vpop.f32.mrb[0].mxu0
        %3306 = vmatprep.mubr.f32.mxu0 0.0
        %3307 = vmatmul.mubr.f32.gmra.mrb[0].mxu0 %v3124
        %v3308 = vpop.f32.mrb[0].mxu0
        %v3309 = vadd.f32 0.0, %v3308
        %v3310 = vpop.f32.mrb[0].mxu0
        %3311 = vmatprep.mubr.f32.mxu0 0.0
        %3312 = vmatmul.mubr.f32.gmra.mrb[0].mxu0 %v3127
        %v3313 = vpop.f32.mrb[0].mxu0
        %v3314 = vadd.f32 0.0, %v3313
        %v3315 = vpop.f32.mrb[0].mxu0
        %3316 = vmatprep.mubr.f32.mxu0 0.0
        %3317 = vmatmul.mubr.f32.gmra.mrb[0].mxu0 %v3130
        %v3318 = vpop.f32.mrb[0].mxu0
        %v3319 = vadd.f32 0.0, %v3318
        %v3320 = vpop.f32.mrb[0].mxu0
        %3321 = vmatprep.mubr.f32.mxu0 0.0
        %3322 = vmatmul.mubr.f32.gmra.mrb[0].mxu0 %v3133
        %v3323 = vpop.f32.mrb[0].mxu0
        %v3324 = vadd.f32 0.0, %v3323
        %v3325 = vpop.f32.mrb[0].mxu0
        %3326 = vmatprep.mubr.f32.mxu0 0.0
        %3327 = vmatmul.mubr.f32.gmra.mrb[0].mxu0 %v3136
        %v3328 = vpop.f32.mrb[0].mxu0
        %v3329 = vadd.f32 0.0, %v3328
        %v3330 = vpop.f32.mrb[0].mxu0
        %3331 = vmatprep.mubr.f32.mxu0 0.0
        %3332 = vmatmul.mubr.f32.gmra.mrb[0].mxu0 %v3139
        %v3333 = vpop.f32.mrb[0].mxu0
        %v3334 = vadd.f32 0.0, %v3333
        %v3335 = vpop.f32.mrb[0].mxu0
        %3336 = vmatprep.mubr.f32.mxu0 0.0
        %3337 = vmatmul.mubr.f32.gmra.mrb[0].mxu0 %v3142
        %v3338 = vpop.f32.mrb[0].mxu0
        %v3339 = vadd.f32 0.0, %v3338
        %v3340 = vpop.f32.mrb[0].mxu0
        %3341 = vmatprep.mubr.f32.mxu0 0.0
        %3342 = vmatmul.mubr.f32.gmra.mrb[0].mxu0 %v3145
        %v3343 = vpop.f32.mrb[0].mxu0
        %v3344 = vadd.f32 0.0, %v3343
        %v3345 = vpop.f32.mrb[0].mxu0
        %3346 = vmatprep.mubr.f32.mxu0 0.0
        %3347 = vmatmul.mubr.f32.gmra.mrb[0].mxu0 %v3148
        %v3348 = vpop.f32.mrb[0].mxu0
        %v3349 = vadd.f32 0.0, %v3348
        %v3350 = vpop.f32.mrb[0].mxu0
        %3351 = vmatprep.mubr.f32.mxu0 0.0
        %3352 = vmatmul.mubr.f32.gmra.mrb[0].mxu0 %v3151
        %v3353 = vpop.f32.mrb[0].mxu0
        %v3354 = vadd.f32 0.0, %v3353
        %v3355 = vpop.f32.mrb[0].mxu0
        %3356 = vmatprep.mubr.f32.mxu0 0.0
        %3357 = vmatmul.mubr.f32.gmra.mrb[0].mxu0 %v3154
        %v3358 = vpop.f32.mrb[0].mxu0
        %v3359 = vadd.f32 0.0, %v3358
        %v3360 = vpop.f32.mrb[0].mxu0
        %3361 = vmatprep.mubr.f32.mxu0 0.0
        %3362 = vmatmul.mubr.f32.gmra.mrb[0].mxu0 %v3157
        %v3363 = vpop.f32.mrb[0].mxu0
        %v3364 = vadd.f32 0.0, %v3363
        %v3365 = vpop.f32.mrb[0].mxu0
        %3366 = vmatprep.mubr.f32.mxu0 0.0
        %3367 = vmatmul.mubr.f32.gmra.mrb[0].mxu0 %v3160
        %v3368 = vpop.f32.mrb[0].mxu0
        %v3369 = vadd.f32 0.0, %v3368
        %v3370 = vpop.f32.mrb[0].mxu0
        %3371 = vmatprep.mubr.f32.mxu0 0.0
        %3372 = vmatmul.mubr.f32.gmra.mrb[0].mxu0 %v3163
        %v3373 = vpop.f32.mrb[0].mxu0
        %v3374 = vadd.f32 0.0, %v3373
        %v3375 = vpop.f32.mrb[0].mxu0
        %3376 = vmatprep.mubr.f32.mxu0 0.0
        %3377 = vmatmul.mubr.f32.gmra.mrb[0].mxu0 %v3166
        %v3378 = vpop.f32.mrb[0].mxu0
        %v3379 = vadd.f32 0.0, %v3378
        %v3380 = vpop.f32.mrb[0].mxu0
        %3381 = vmatprep.mubr.f32.mxu0 0.0
        %3382 = vmatmul.mubr.f32.gmra.mrb[0].mxu0 %v3169
        %v3383 = vpop.f32.mrb[0].mxu0
        %v3384 = vadd.f32 0.0, %v3383
        %v3385 = vpop.f32.mrb[0].mxu0
        %3386 = vmatprep.mubr.f32.mxu0 0.0
        %3387 = vmatmul.mubr.f32.gmra.mrb[0].mxu0 %v3172
        %v3388 = vpop.f32.mrb[0].mxu0
        %v3389 = vadd.f32 0.0, %v3388
        %v3390 = vpop.f32.mrb[0].mxu0
        %3391 = vmatprep.mubr.f32.mxu0 0.0
        %3392 = vmatmul.mubr.f32.gmra.mrb[0].mxu0 %v3175
        %v3393 = vpop.f32.mrb[0].mxu0
        %v3394 = vadd.f32 0.0, %v3393
        %v3395 = vpop.f32.mrb[0].mxu0
        %3396 = vmatprep.mubr.f32.mxu0 0.0
        %3397 = vmatmul.mubr.f32.gmra.mrb[0].mxu0 %v3178
        %v3398 = vpop.f32.mrb[0].mxu0
        %v3399 = vadd.f32 0.0, %v3398
        %v3400 = vpop.f32.mrb[0].mxu0
        %3401 = vmatprep.mubr.f32.mxu0 0.0
        %3402 = vmatmul.mubr.f32.gmra.mrb[0].mxu0 %v3181
        %v3403 = vpop.f32.mrb[0].mxu0
        %v3404 = vadd.f32 0.0, %v3403
        %v3405 = vpop.f32.mrb[0].mxu0
        %3406 = vmatprep.mubr.f32.mxu0 0.0
        %3407 = vmatmul.mubr.f32.gmra.mrb[0].mxu0 %v3184
        %v3408 = vpop.f32.mrb[0].mxu0
        %v3409 = vadd.f32 0.0, %v3408
        %v3410 = vpop.f32.mrb[0].mxu0
        %3411 = vmatprep.mubr.f32.mxu0 0.0
        %3412 = vmatmul.mubr.f32.gmra.mrb[0].mxu0 %v3187
        %v3413 = vpop.f32.mrb[0].mxu0
        %v3414 = vadd.f32 0.0, %v3413
        %v3415 = vpop.f32.mrb[0].mxu0
        %3416 = vdwg.mxu0
        %v3417 = vadd.f32 %v3027, %v3259
        %v3418 = vadd.f32 %v3028, %v3264
        %v3419 = vadd.f32 %v3029, %v3269
        %v3420 = vadd.f32 %v3030, %v3274
        %v3421 = vadd.f32 %v3031, %v3279
        %v3422 = vadd.f32 %v3032, %v3284
        %v3423 = vadd.f32 %v3033, %v3289
        %v3424 = vadd.f32 %v3034, %v3294
        %v3425 = vadd.f32 %v3035, %v3299
        %v3426 = vadd.f32 %v3036, %v3304
        %v3427 = vadd.f32 %v3037, %v3309
        %v3428 = vadd.f32 %v3038, %v3314
        %v3429 = vadd.f32 %v3039, %v3319
        %v3430 = vadd.f32 %v3040, %v3324
        %v3431 = vadd.f32 %v3041, %v3329
        %v3432 = vadd.f32 %v3042, %v3334
        %v3433 = vadd.f32 %v3043, %v3339
        %v3434 = vadd.f32 %v3044, %v3344
        %v3435 = vadd.f32 %v3045, %v3349
        %v3436 = vadd.f32 %v3046, %v3354
        %v3437 = vadd.f32 %v3047, %v3359
        %v3438 = vadd.f32 %v3048, %v3364
        %v3439 = vadd.f32 %v3049, %v3369
        %v3440 = vadd.f32 %v3050, %v3374
        %v3441 = vadd.f32 %v3051, %v3379
        %v3442 = vadd.f32 %v3052, %v3384
        %v3443 = vadd.f32 %v3053, %v3389
        %v3444 = vadd.f32 %v3054, %v3394
        %v3445 = vadd.f32 %v3055, %v3399
        %v3446 = vadd.f32 %v3056, %v3404
        %v3447 = vadd.f32 %v3057, %v3409
        %v3448 = vadd.f32 %v3058, %v3414
        %v3449 = vld [vmem:[%s2668 + $0x2] sm:$0xff]
        %v3450 = vld [vmem:[%s2668 + $0xa] sm:$0xff]
        %v3451 = vld [vmem:[%s2668 + $0x1a] sm:$0xff]
        %v3452 = vld [vmem:[%s2668 + $0x22] sm:$0xff]
        %v3453 = vld [vmem:[%s2668 + $0x32] sm:$0xff]
        %v3454 = vld [vmem:[%s2668 + $0x3a] sm:$0xff]
        %v3455 = vld [vmem:[%s2668 + $0x4a] sm:$0xff]
        %v3456 = vld [vmem:[%s2668 + $0x52] sm:$0xff]
        %v3457 = vld [vmem:[%s2668 + $0x62] sm:$0xff]
        %v3458 = vld [vmem:[%s2668 + $0x6a] sm:$0xff]
        %v3459 = vld [vmem:[%s2668 + $0x7a] sm:$0xff]
        %v3460 = vld [vmem:[%s2668 + $0x82] sm:$0xff]
        %v3461 = vld [vmem:[%s2668 + $0x92] sm:$0xff]
        %v3462 = vld [vmem:[%s2668 + $0x9a] sm:$0xff]
        %v3463 = vld [vmem:[%s2668 + $0xaa] sm:$0xff]
        %v3464 = vld [vmem:[%s2668 + $0xb2] sm:$0xff]
        %v3465 = vld [vmem:[%s2668 + $0xc2] sm:$0xff]
        %v3466 = vld [vmem:[%s2668 + $0xca] sm:$0xff]
        %v3467 = vld [vmem:[%s2668 + $0xda] sm:$0xff]
        %v3468 = vld [vmem:[%s2668 + $0xe2] sm:$0xff]
        %v3469 = vld [vmem:[%s2668 + $0xf2] sm:$0xff]
        %v3470 = vld [vmem:[%s2668 + $0xfa] sm:$0xff]
        %v3471 = vld [vmem:[%s2668 + $0x10a] sm:$0xff]
        %v3472 = vld [vmem:[%s2668 + $0x112] sm:$0xff]
        %v3473 = vld [vmem:[%s2668 + $0x122] sm:$0xff]
        %v3474 = vld [vmem:[%s2668 + $0x12a] sm:$0xff]
        %v3475 = vld [vmem:[%s2668 + $0x13a] sm:$0xff]
        %v3476 = vld [vmem:[%s2668 + $0x142] sm:$0xff]
        %v3477 = vld [vmem:[%s2668 + $0x152] sm:$0xff]
        %v3478 = vld [vmem:[%s2668 + $0x15a] sm:$0xff]
        %v3479 = vld [vmem:[%s2668 + $0x16a] sm:$0xff]
        %v3480 = vld [vmem:[%s2668 + $0x172] sm:$0xff]
        %s3481 = scalar_lea.vmem %s1, 32
        %v3482 = vld [vmem:[%s3481] sm:$0xf]
        %v3484 = vsel %vm303, %v3449, 0
        %v3487 = vsel %vm303, %v3450, 0
        %v3490 = vsel %vm303, %v3451, 0
        %v3493 = vsel %vm303, %v3452, 0
        %v3496 = vsel %vm303, %v3453, 0
        %v3499 = vsel %vm303, %v3454, 0
        %v3502 = vsel %vm303, %v3455, 0
        %v3505 = vsel %vm303, %v3456, 0
        %v3508 = vsel %vm303, %v3457, 0
        %v3511 = vsel %vm303, %v3458, 0
        %v3514 = vsel %vm303, %v3459, 0
        %v3517 = vsel %vm303, %v3460, 0
        %v3520 = vsel %vm303, %v3461, 0
        %v3523 = vsel %vm303, %v3462, 0
        %v3526 = vsel %vm303, %v3463, 0
        %v3529 = vsel %vm303, %v3464, 0
        %v3532 = vsel %vm303, %v3465, 0
        %v3535 = vsel %vm303, %v3466, 0
        %v3538 = vsel %vm303, %v3467, 0
        %v3541 = vsel %vm303, %v3468, 0
        %v3544 = vsel %vm303, %v3469, 0
        %v3547 = vsel %vm303, %v3470, 0
        %v3550 = vsel %vm303, %v3471, 0
        %v3553 = vsel %vm303, %v3472, 0
        %v3556 = vsel %vm303, %v3473, 0
        %v3559 = vsel %vm303, %v3474, 0
        %v3562 = vsel %vm303, %v3475, 0
        %v3565 = vsel %vm303, %v3476, 0
        %v3568 = vsel %vm303, %v3477, 0
        %v3571 = vsel %vm303, %v3478, 0
        %v3574 = vsel %vm303, %v3479, 0
        %v3577 = vsel %vm303, %v3480, 0
        %v3580 = vsel %vm555, %v3482, 0
        %3582 = vmatprep.subr.mxu0 0.0
        %3583 = vmatpush1.msra.mxu0 %v3580
        %3584 = vmatprep.subr.mxu0 0.0
        %3585 = vmatpush1.msra.mxu0 0.0
        %3586 = vmatprep.subr.mxu0 0.0
        %3587 = vmatpush1.msra.mxu0 0.0
        %3588 = vmatprep.subr.mxu0 0.0
        %3589 = vmatpush1.msra.mxu0 0.0
        %3590 = vmatprep.subr.mxu0 0.0
        %3591 = vmatpush1.msra.mxu0 0.0
        %3592 = vmatprep.subr.mxu0 0.0
        %3593 = vmatpush1.msra.mxu0 0.0
        %3594 = vmatprep.subr.mxu0 0.0
        %3595 = vmatpush1.msra.mxu0 0.0
        %3596 = vmatprep.subr.mxu0 0.0
        %3597 = vmatpush1.msra.mxu0 0.0
        %3598 = vmatprep.subr.mxu0 0.0
        %3599 = vmatpush1.msra.mxu0 0.0
        %3600 = vmatprep.subr.mxu0 0.0
        %3601 = vmatpush1.msra.mxu0 0.0
        %3602 = vmatprep.subr.mxu0 0.0
        %3603 = vmatpush1.msra.mxu0 0.0
        %3604 = vmatprep.subr.mxu0 0.0
        %3605 = vmatpush1.msra.mxu0 0.0
        %3606 = vmatprep.subr.mxu0 0.0
        %3607 = vmatpush1.msra.mxu0 0.0
        %3608 = vmatprep.subr.mxu0 0.0
        %3609 = vmatpush1.msra.mxu0 0.0
        %3610 = vmatprep.subr.mxu0 0.0
        %3611 = vmatpush1.msra.mxu0 0.0
        %3612 = vmatprep.subr.mxu0 0.0
        %3613 = vmatpush1.msra.mxu0 0.0
        %3614 = vmatprep.subr.mxu0 0.0
        %3615 = vmatpush1.msra.mxu0 0.0
        %3616 = vmatprep.subr.mxu0 0.0
        %3617 = vmatpush1.msra.mxu0 0.0
        %3618 = vmatprep.subr.mxu0 0.0
        %3619 = vmatpush1.msra.mxu0 0.0
        %3620 = vmatprep.subr.mxu0 0.0
        %3621 = vmatpush1.msra.mxu0 0.0
        %3622 = vmatprep.subr.mxu0 0.0
        %3623 = vmatpush1.msra.mxu0 0.0
        %3624 = vmatprep.subr.mxu0 0.0
        %3625 = vmatpush1.msra.mxu0 0.0
        %3626 = vmatprep.subr.mxu0 0.0
        %3627 = vmatpush1.msra.mxu0 0.0
        %3628 = vmatprep.subr.mxu0 0.0
        %3629 = vmatpush1.msra.mxu0 0.0
        %3630 = vmatprep.subr.mxu0 0.0
        %3631 = vmatpush1.msra.mxu0 0.0
        %3632 = vmatprep.subr.mxu0 0.0
        %3633 = vmatpush1.msra.mxu0 0.0
        %3634 = vmatprep.subr.mxu0 0.0
        %3635 = vmatpush1.msra.mxu0 0.0
        %3636 = vmatprep.subr.mxu0 0.0
        %3637 = vmatpush1.msra.mxu0 0.0
        %3638 = vmatprep.subr.mxu0 0.0
        %3639 = vmatpush1.msra.mxu0 0.0
        %3640 = vmatprep.subr.mxu0 0.0
        %3641 = vmatpush1.msra.mxu0 0.0
        %3642 = vmatprep.subr.mxu0 0.0
        %3643 = vmatpush1.msra.mxu0 0.0
        %3644 = vmatprep.subr.mxu0 0.0
        %3645 = vmatpush1.msra.mxu0 0.0
        %3646 = vmatprep.mubr.f32.mxu0 0.0
        %3647 = vmatmul.mubr.f32.gmra.mrb[0].mxu0 %v3484
        %v3648 = vpop.f32.mrb[0].mxu0
        %v3649 = vadd.f32 0.0, %v3648
        %v3650 = vpop.f32.mrb[0].mxu0
        %3651 = vmatprep.mubr.f32.mxu0 0.0
        %3652 = vmatmul.mubr.f32.gmra.mrb[0].mxu0 %v3487
        %v3653 = vpop.f32.mrb[0].mxu0
        %v3654 = vadd.f32 0.0, %v3653
        %v3655 = vpop.f32.mrb[0].mxu0
        %3656 = vmatprep.mubr.f32.mxu0 0.0
        %3657 = vmatmul.mubr.f32.gmra.mrb[0].mxu0 %v3490
        %v3658 = vpop.f32.mrb[0].mxu0
        %v3659 = vadd.f32 0.0, %v3658
        %v3660 = vpop.f32.mrb[0].mxu0
        %3661 = vmatprep.mubr.f32.mxu0 0.0
        %3662 = vmatmul.mubr.f32.gmra.mrb[0].mxu0 %v3493
        %v3663 = vpop.f32.mrb[0].mxu0
        %v3664 = vadd.f32 0.0, %v3663
        %v3665 = vpop.f32.mrb[0].mxu0
        %3666 = vmatprep.mubr.f32.mxu0 0.0
        %3667 = vmatmul.mubr.f32.gmra.mrb[0].mxu0 %v3496
        %v3668 = vpop.f32.mrb[0].mxu0
        %v3669 = vadd.f32 0.0, %v3668
        %v3670 = vpop.f32.mrb[0].mxu0
        %3671 = vmatprep.mubr.f32.mxu0 0.0
        %3672 = vmatmul.mubr.f32.gmra.mrb[0].mxu0 %v3499
        %v3673 = vpop.f32.mrb[0].mxu0
        %v3674 = vadd.f32 0.0, %v3673
        %v3675 = vpop.f32.mrb[0].mxu0
        %3676 = vmatprep.mubr.f32.mxu0 0.0
        %3677 = vmatmul.mubr.f32.gmra.mrb[0].mxu0 %v3502
        %v3678 = vpop.f32.mrb[0].mxu0
        %v3679 = vadd.f32 0.0, %v3678
        %v3680 = vpop.f32.mrb[0].mxu0
        %3681 = vmatprep.mubr.f32.mxu0 0.0
        %3682 = vmatmul.mubr.f32.gmra.mrb[0].mxu0 %v3505
        %v3683 = vpop.f32.mrb[0].mxu0
        %v3684 = vadd.f32 0.0, %v3683
        %v3685 = vpop.f32.mrb[0].mxu0
        %3686 = vmatprep.mubr.f32.mxu0 0.0
        %3687 = vmatmul.mubr.f32.gmra.mrb[0].mxu0 %v3508
        %v3688 = vpop.f32.mrb[0].mxu0
        %v3689 = vadd.f32 0.0, %v3688
        %v3690 = vpop.f32.mrb[0].mxu0
        %3691 = vmatprep.mubr.f32.mxu0 0.0
        %3692 = vmatmul.mubr.f32.gmra.mrb[0].mxu0 %v3511
        %v3693 = vpop.f32.mrb[0].mxu0
        %v3694 = vadd.f32 0.0, %v3693
        %v3695 = vpop.f32.mrb[0].mxu0
        %3696 = vmatprep.mubr.f32.mxu0 0.0
        %3697 = vmatmul.mubr.f32.gmra.mrb[0].mxu0 %v3514
        %v3698 = vpop.f32.mrb[0].mxu0
        %v3699 = vadd.f32 0.0, %v3698
        %v3700 = vpop.f32.mrb[0].mxu0
        %3701 = vmatprep.mubr.f32.mxu0 0.0
        %3702 = vmatmul.mubr.f32.gmra.mrb[0].mxu0 %v3517
        %v3703 = vpop.f32.mrb[0].mxu0
        %v3704 = vadd.f32 0.0, %v3703
        %v3705 = vpop.f32.mrb[0].mxu0
        %3706 = vmatprep.mubr.f32.mxu0 0.0
        %3707 = vmatmul.mubr.f32.gmra.mrb[0].mxu0 %v3520
        %v3708 = vpop.f32.mrb[0].mxu0
        %v3709 = vadd.f32 0.0, %v3708
        %v3710 = vpop.f32.mrb[0].mxu0
        %3711 = vmatprep.mubr.f32.mxu0 0.0
        %3712 = vmatmul.mubr.f32.gmra.mrb[0].mxu0 %v3523
        %v3713 = vpop.f32.mrb[0].mxu0
        %v3714 = vadd.f32 0.0, %v3713
        %v3715 = vpop.f32.mrb[0].mxu0
        %3716 = vmatprep.mubr.f32.mxu0 0.0
        %3717 = vmatmul.mubr.f32.gmra.mrb[0].mxu0 %v3526
        %v3718 = vpop.f32.mrb[0].mxu0
        %v3719 = vadd.f32 0.0, %v3718
        %v3720 = vpop.f32.mrb[0].mxu0
        %3721 = vmatprep.mubr.f32.mxu0 0.0
        %3722 = vmatmul.mubr.f32.gmra.mrb[0].mxu0 %v3529
        %v3723 = vpop.f32.mrb[0].mxu0
        %v3724 = vadd.f32 0.0, %v3723
        %v3725 = vpop.f32.mrb[0].mxu0
        %3726 = vmatprep.mubr.f32.mxu0 0.0
        %3727 = vmatmul.mubr.f32.gmra.mrb[0].mxu0 %v3532
        %v3728 = vpop.f32.mrb[0].mxu0
        %v3729 = vadd.f32 0.0, %v3728
        %v3730 = vpop.f32.mrb[0].mxu0
        %3731 = vmatprep.mubr.f32.mxu0 0.0
        %3732 = vmatmul.mubr.f32.gmra.mrb[0].mxu0 %v3535
        %v3733 = vpop.f32.mrb[0].mxu0
        %v3734 = vadd.f32 0.0, %v3733
        %v3735 = vpop.f32.mrb[0].mxu0
        %3736 = vmatprep.mubr.f32.mxu0 0.0
        %3737 = vmatmul.mubr.f32.gmra.mrb[0].mxu0 %v3538
        %v3738 = vpop.f32.mrb[0].mxu0
        %v3739 = vadd.f32 0.0, %v3738
        %v3740 = vpop.f32.mrb[0].mxu0
        %3741 = vmatprep.mubr.f32.mxu0 0.0
        %3742 = vmatmul.mubr.f32.gmra.mrb[0].mxu0 %v3541
        %v3743 = vpop.f32.mrb[0].mxu0
        %v3744 = vadd.f32 0.0, %v3743
        %v3745 = vpop.f32.mrb[0].mxu0
        %3746 = vmatprep.mubr.f32.mxu0 0.0
        %3747 = vmatmul.mubr.f32.gmra.mrb[0].mxu0 %v3544
        %v3748 = vpop.f32.mrb[0].mxu0
        %v3749 = vadd.f32 0.0, %v3748
        %v3750 = vpop.f32.mrb[0].mxu0
        %3751 = vmatprep.mubr.f32.mxu0 0.0
        %3752 = vmatmul.mubr.f32.gmra.mrb[0].mxu0 %v3547
        %v3753 = vpop.f32.mrb[0].mxu0
        %v3754 = vadd.f32 0.0, %v3753
        %v3755 = vpop.f32.mrb[0].mxu0
        %3756 = vmatprep.mubr.f32.mxu0 0.0
        %3757 = vmatmul.mubr.f32.gmra.mrb[0].mxu0 %v3550
        %v3758 = vpop.f32.mrb[0].mxu0
        %v3759 = vadd.f32 0.0, %v3758
        %v3760 = vpop.f32.mrb[0].mxu0
        %3761 = vmatprep.mubr.f32.mxu0 0.0
        %3762 = vmatmul.mubr.f32.gmra.mrb[0].mxu0 %v3553
        %v3763 = vpop.f32.mrb[0].mxu0
        %v3764 = vadd.f32 0.0, %v3763
        %v3765 = vpop.f32.mrb[0].mxu0
        %3766 = vmatprep.mubr.f32.mxu0 0.0
        %3767 = vmatmul.mubr.f32.gmra.mrb[0].mxu0 %v3556
        %v3768 = vpop.f32.mrb[0].mxu0
        %v3769 = vadd.f32 0.0, %v3768
        %v3770 = vpop.f32.mrb[0].mxu0
        %3771 = vmatprep.mubr.f32.mxu0 0.0
        %3772 = vmatmul.mubr.f32.gmra.mrb[0].mxu0 %v3559
        %v3773 = vpop.f32.mrb[0].mxu0
        %v3774 = vadd.f32 0.0, %v3773
        %v3775 = vpop.f32.mrb[0].mxu0
        %3776 = vmatprep.mubr.f32.mxu0 0.0
        %3777 = vmatmul.mubr.f32.gmra.mrb[0].mxu0 %v3562
        %v3778 = vpop.f32.mrb[0].mxu0
        %v3779 = vadd.f32 0.0, %v3778
        %v3780 = vpop.f32.mrb[0].mxu0
        %3781 = vmatprep.mubr.f32.mxu0 0.0
        %3782 = vmatmul.mubr.f32.gmra.mrb[0].mxu0 %v3565
        %v3783 = vpop.f32.mrb[0].mxu0
        %v3784 = vadd.f32 0.0, %v3783
        %v3785 = vpop.f32.mrb[0].mxu0
        %3786 = vmatprep.mubr.f32.mxu0 0.0
        %3787 = vmatmul.mubr.f32.gmra.mrb[0].mxu0 %v3568
        %v3788 = vpop.f32.mrb[0].mxu0
        %v3789 = vadd.f32 0.0, %v3788
        %v3790 = vpop.f32.mrb[0].mxu0
        %3791 = vmatprep.mubr.f32.mxu0 0.0
        %3792 = vmatmul.mubr.f32.gmra.mrb[0].mxu0 %v3571
        %v3793 = vpop.f32.mrb[0].mxu0
        %v3794 = vadd.f32 0.0, %v3793
        %v3795 = vpop.f32.mrb[0].mxu0
        %3796 = vmatprep.mubr.f32.mxu0 0.0
        %3797 = vmatmul.mubr.f32.gmra.mrb[0].mxu0 %v3574
        %v3798 = vpop.f32.mrb[0].mxu0
        %v3799 = vadd.f32 0.0, %v3798
        %v3800 = vpop.f32.mrb[0].mxu0
        %3801 = vmatprep.mubr.f32.mxu0 0.0
        %3802 = vmatmul.mubr.f32.gmra.mrb[0].mxu0 %v3577
        %v3803 = vpop.f32.mrb[0].mxu0
        %v3804 = vadd.f32 0.0, %v3803
        %v3805 = vpop.f32.mrb[0].mxu0
        %3806 = vdwg.mxu0
        %v3807 = vadd.f32 %v3417, %v3649
        %v3808 = vadd.f32 %v3418, %v3654
        %v3809 = vadd.f32 %v3419, %v3659
        %v3810 = vadd.f32 %v3420, %v3664
        %v3811 = vadd.f32 %v3421, %v3669
        %v3812 = vadd.f32 %v3422, %v3674
        %v3813 = vadd.f32 %v3423, %v3679
        %v3814 = vadd.f32 %v3424, %v3684
        %v3815 = vadd.f32 %v3425, %v3689
        %v3816 = vadd.f32 %v3426, %v3694
        %v3817 = vadd.f32 %v3427, %v3699
        %v3818 = vadd.f32 %v3428, %v3704
        %v3819 = vadd.f32 %v3429, %v3709
        %v3820 = vadd.f32 %v3430, %v3714
        %v3821 = vadd.f32 %v3431, %v3719
        %v3822 = vadd.f32 %v3432, %v3724
        %v3823 = vadd.f32 %v3433, %v3729
        %v3824 = vadd.f32 %v3434, %v3734
        %v3825 = vadd.f32 %v3435, %v3739
        %v3826 = vadd.f32 %v3436, %v3744
        %v3827 = vadd.f32 %v3437, %v3749
        %v3828 = vadd.f32 %v3438, %v3754
        %v3829 = vadd.f32 %v3439, %v3759
        %v3830 = vadd.f32 %v3440, %v3764
        %v3831 = vadd.f32 %v3441, %v3769
        %v3832 = vadd.f32 %v3442, %v3774
        %v3833 = vadd.f32 %v3443, %v3779
        %v3834 = vadd.f32 %v3444, %v3784
        %v3835 = vadd.f32 %v3445, %v3789
        %v3836 = vadd.f32 %v3446, %v3794
        %v3837 = vadd.f32 %v3447, %v3799
        %v3838 = vadd.f32 %v3448, %v3804
        %vm3839 = vcmask 64512
        %3840 = vst.msk [vmem:[%s270] sm:$0xff] %vm3839, %v3807
        %3841 = vst.msk [vmem:[%s270 + $0x8] sm:$0xff] %vm3839, %v3808
        %3842 = vst.msk [vmem:[%s270 + $0x10] sm:$0xff] %vm3839, %v3809
        %3843 = vst.msk [vmem:[%s270 + $0x18] sm:$0xff] %vm3839, %v3810
        %3844 = vst.msk [vmem:[%s270 + $0x20] sm:$0xff] %vm3839, %v3811
        %3845 = vst.msk [vmem:[%s270 + $0x28] sm:$0xff] %vm3839, %v3812
        %3846 = vst.msk [vmem:[%s270 + $0x30] sm:$0xff] %vm3839, %v3813
        %3847 = vst.msk [vmem:[%s270 + $0x38] sm:$0xff] %vm3839, %v3814
        %3848 = vst.msk [vmem:[%s270 + $0x40] sm:$0xff] %vm3839, %v3815
        %3849 = vst.msk [vmem:[%s270 + $0x48] sm:$0xff] %vm3839, %v3816
        %3850 = vst.msk [vmem:[%s270 + $0x50] sm:$0xff] %vm3839, %v3817
        %3851 = vst.msk [vmem:[%s270 + $0x58] sm:$0xff] %vm3839, %v3818
        %3852 = vst.msk [vmem:[%s270 + $0x60] sm:$0xff] %vm3839, %v3819
        %3853 = vst.msk [vmem:[%s270 + $0x68] sm:$0xff] %vm3839, %v3820
        %3854 = vst.msk [vmem:[%s270 + $0x70] sm:$0xff] %vm3839, %v3821
        %3855 = vst.msk [vmem:[%s270 + $0x78] sm:$0xff] %vm3839, %v3822
        %3856 = vst.msk [vmem:[%s270 + $0x80] sm:$0xff] %vm3839, %v3823
        %3857 = vst.msk [vmem:[%s270 + $0x88] sm:$0xff] %vm3839, %v3824
        %3858 = vst.msk [vmem:[%s270 + $0x90] sm:$0xff] %vm3839, %v3825
        %3859 = vst.msk [vmem:[%s270 + $0x98] sm:$0xff] %vm3839, %v3826
        %3860 = vst.msk [vmem:[%s270 + $0xa0] sm:$0xff] %vm3839, %v3827
        %3861 = vst.msk [vmem:[%s270 + $0xa8] sm:$0xff] %vm3839, %v3828
        %3862 = vst.msk [vmem:[%s270 + $0xb0] sm:$0xff] %vm3839, %v3829
        %3863 = vst.msk [vmem:[%s270 + $0xb8] sm:$0xff] %vm3839, %v3830
        %3864 = vst.msk [vmem:[%s270 + $0xc0] sm:$0xff] %vm3839, %v3831
        %3865 = vst.msk [vmem:[%s270 + $0xc8] sm:$0xff] %vm3839, %v3832
        %3866 = vst.msk [vmem:[%s270 + $0xd0] sm:$0xff] %vm3839, %v3833
        %3867 = vst.msk [vmem:[%s270 + $0xd8] sm:$0xff] %vm3839, %v3834
        %3868 = vst.msk [vmem:[%s270 + $0xe0] sm:$0xff] %vm3839, %v3835
        %3869 = vst.msk [vmem:[%s270 + $0xe8] sm:$0xff] %vm3839, %v3836
        %3870 = vst.msk [vmem:[%s270 + $0xf0] sm:$0xff] %vm3839, %v3837
        %3871 = vst.msk [vmem:[%s270 + $0xf8] sm:$0xff] %vm3839, %v3838
        %v3872 = vsel %vm3839, %v3807, 0.0
        %v3873 = vsel %vm3839, %v3808, 0.0
        %v3874 = vadd.f32 %v3872, %v3873
        %v3875 = vsel %vm3839, %v3809, 0.0
        %v3876 = vadd.f32 %v3874, %v3875
        %v3877 = vsel %vm3839, %v3810, 0.0
        %v3878 = vadd.f32 %v3876, %v3877
        %v3879 = vsel %vm3839, %v3811, 0.0
        %v3880 = vadd.f32 %v3878, %v3879
        %v3881 = vsel %vm3839, %v3812, 0.0
        %v3882 = vadd.f32 %v3880, %v3881
        %v3883 = vsel %vm3839, %v3813, 0.0
        %v3884 = vadd.f32 %v3882, %v3883
        %v3885 = vsel %vm3839, %v3814, 0.0
        %v3886 = vadd.f32 %v3884, %v3885
        %v3887 = vsel %vm3839, %v3815, 0.0
        %v3888 = vadd.f32 %v3886, %v3887
        %v3889 = vsel %vm3839, %v3816, 0.0
        %v3890 = vadd.f32 %v3888, %v3889
        %v3891 = vsel %vm3839, %v3817, 0.0
        %v3892 = vadd.f32 %v3890, %v3891
        %v3893 = vsel %vm3839, %v3818, 0.0
        %v3894 = vadd.f32 %v3892, %v3893
        %v3895 = vsel %vm3839, %v3819, 0.0
        %v3896 = vadd.f32 %v3894, %v3895
        %v3897 = vsel %vm3839, %v3820, 0.0
        %v3898 = vadd.f32 %v3896, %v3897
        %v3899 = vsel %vm3839, %v3821, 0.0
        %v3900 = vadd.f32 %v3898, %v3899
        %v3901 = vsel %vm3839, %v3822, 0.0
        %v3902 = vadd.f32 %v3900, %v3901
        %v3903 = vsel %vm3839, %v3823, 0.0
        %v3904 = vadd.f32 %v3902, %v3903
        %v3905 = vsel %vm3839, %v3824, 0.0
        %v3906 = vadd.f32 %v3904, %v3905
        %v3907 = vsel %vm3839, %v3825, 0.0
        %v3908 = vadd.f32 %v3906, %v3907
        %v3909 = vsel %vm3839, %v3826, 0.0
        %v3910 = vadd.f32 %v3908, %v3909
        %v3911 = vsel %vm3839, %v3827, 0.0
        %v3912 = vadd.f32 %v3910, %v3911
        %v3913 = vsel %vm3839, %v3828, 0.0
        %v3914 = vadd.f32 %v3912, %v3913
        %v3915 = vsel %vm3839, %v3829, 0.0
        %v3916 = vadd.f32 %v3914, %v3915
        %v3917 = vsel %vm3839, %v3830, 0.0
        %v3918 = vadd.f32 %v3916, %v3917
        %v3919 = vsel %vm3839, %v3831, 0.0
        %v3920 = vadd.f32 %v3918, %v3919
        %v3921 = vsel %vm3839, %v3832, 0.0
        %v3922 = vadd.f32 %v3920, %v3921
        %v3923 = vsel %vm3839, %v3833, 0.0
        %v3924 = vadd.f32 %v3922, %v3923
        %v3925 = vsel %vm3839, %v3834, 0.0
        %v3926 = vadd.f32 %v3924, %v3925
        %v3927 = vsel %vm3839, %v3835, 0.0
        %v3928 = vadd.f32 %v3926, %v3927
        %v3929 = vsel %vm3839, %v3836, 0.0
        %v3930 = vadd.f32 %v3928, %v3929
        %v3931 = vsel %vm3839, %v3837, 0.0
        %v3932 = vadd.f32 %v3930, %v3931
        %v3933 = vsel %vm3839, %v3838, 0.0
        %v3934 = vadd.f32 %v3932, %v3933
        %v3935 = vrot.slane %v3934, 4
        %v3936 = vadd.f32 %v3934, %v3935
        %v3937 = vrot.slane %v3936, 2
        %v3938 = vadd.f32 %v3936, %v3937
        %v3939 = vrot.slane %v3938, 1
        %v3940 = vadd.f32 %v3938, %v3939
        %vm3941 = vcmask 57344
        %3942 = vst.msk [vmem:[%s254] sm:$0x1] %vm3941, %v3940
        %v3943 = vmul.f32 %v3807, %v3807
        %v3944 = vmul.f32 %v3808, %v3808
        %v3945 = vmul.f32 %v3809, %v3809
        %v3946 = vmul.f32 %v3810, %v3810
        %v3947 = vmul.f32 %v3811, %v3811
        %v3948 = vmul.f32 %v3812, %v3812
        %v3949 = vmul.f32 %v3813, %v3813
        %v3950 = vmul.f32 %v3814, %v3814
        %v3951 = vmul.f32 %v3815, %v3815
        %v3952 = vmul.f32 %v3816, %v3816
        %v3953 = vmul.f32 %v3817, %v3817
        %v3954 = vmul.f32 %v3818, %v3818
        %v3955 = vmul.f32 %v3819, %v3819
        %v3956 = vmul.f32 %v3820, %v3820
        %v3957 = vmul.f32 %v3821, %v3821
        %v3958 = vmul.f32 %v3822, %v3822
        %v3959 = vmul.f32 %v3823, %v3823
        %v3960 = vmul.f32 %v3824, %v3824
        %v3961 = vmul.f32 %v3825, %v3825
        %v3962 = vmul.f32 %v3826, %v3826
        %v3963 = vmul.f32 %v3827, %v3827
        %v3964 = vmul.f32 %v3828, %v3828
        %v3965 = vmul.f32 %v3829, %v3829
        %v3966 = vmul.f32 %v3830, %v3830
        %v3967 = vmul.f32 %v3831, %v3831
        %v3968 = vmul.f32 %v3832, %v3832
        %v3969 = vmul.f32 %v3833, %v3833
        %v3970 = vmul.f32 %v3834, %v3834
        %v3971 = vmul.f32 %v3835, %v3835
        %v3972 = vmul.f32 %v3836, %v3836
        %v3973 = vmul.f32 %v3837, %v3837
        %v3974 = vmul.f32 %v3838, %v3838
        %v3975 = vsel %vm3839, %v3943, 0.0
        %v3976 = vsel %vm3839, %v3944, 0.0
        %v3977 = vadd.f32 %v3975, %v3976
        %v3978 = vsel %vm3839, %v3945, 0.0
        %v3979 = vadd.f32 %v3977, %v3978
        %v3980 = vsel %vm3839, %v3946, 0.0
        %v3981 = vadd.f32 %v3979, %v3980
        %v3982 = vsel %vm3839, %v3947, 0.0
        %v3983 = vadd.f32 %v3981, %v3982
        %v3984 = vsel %vm3839, %v3948, 0.0
        %v3985 = vadd.f32 %v3983, %v3984
        %v3986 = vsel %vm3839, %v3949, 0.0
        %v3987 = vadd.f32 %v3985, %v3986
        %v3988 = vsel %vm3839, %v3950, 0.0
        %v3989 = vadd.f32 %v3987, %v3988
        %v3990 = vsel %vm3839, %v3951, 0.0
        %v3991 = vadd.f32 %v3989, %v3990
        %v3992 = vsel %vm3839, %v3952, 0.0
        %v3993 = vadd.f32 %v3991, %v3992
        %v3994 = vsel %vm3839, %v3953, 0.0
        %v3995 = vadd.f32 %v3993, %v3994
        %v3996 = vsel %vm3839, %v3954, 0.0
        %v3997 = vadd.f32 %v3995, %v3996
        %v3998 = vsel %vm3839, %v3955, 0.0
        %v3999 = vadd.f32 %v3997, %v3998
        %v4000 = vsel %vm3839, %v3956, 0.0
        %v4001 = vadd.f32 %v3999, %v4000
        %v4002 = vsel %vm3839, %v3957, 0.0
        %v4003 = vadd.f32 %v4001, %v4002
        %v4004 = vsel %vm3839, %v3958, 0.0
        %v4005 = vadd.f32 %v4003, %v4004
        %v4006 = vsel %vm3839, %v3959, 0.0
        %v4007 = vadd.f32 %v4005, %v4006
        %v4008 = vsel %vm3839, %v3960, 0.0
        %v4009 = vadd.f32 %v4007, %v4008
        %v4010 = vsel %vm3839, %v3961, 0.0
        %v4011 = vadd.f32 %v4009, %v4010
        %v4012 = vsel %vm3839, %v3962, 0.0
        %v4013 = vadd.f32 %v4011, %v4012
        %v4014 = vsel %vm3839, %v3963, 0.0
        %v4015 = vadd.f32 %v4013, %v4014
        %v4016 = vsel %vm3839, %v3964, 0.0
        %v4017 = vadd.f32 %v4015, %v4016
        %v4018 = vsel %vm3839, %v3965, 0.0
        %v4019 = vadd.f32 %v4017, %v4018
        %v4020 = vsel %vm3839, %v3966, 0.0
        %v4021 = vadd.f32 %v4019, %v4020
        %v4022 = vsel %vm3839, %v3967, 0.0
        %v4023 = vadd.f32 %v4021, %v4022
        %v4024 = vsel %vm3839, %v3968, 0.0
        %v4025 = vadd.f32 %v4023, %v4024
        %v4026 = vsel %vm3839, %v3969, 0.0
        %v4027 = vadd.f32 %v4025, %v4026
        %v4028 = vsel %vm3839, %v3970, 0.0
        %v4029 = vadd.f32 %v4027, %v4028
        %v4030 = vsel %vm3839, %v3971, 0.0
        %v4031 = vadd.f32 %v4029, %v4030
        %v4032 = vsel %vm3839, %v3972, 0.0
        %v4033 = vadd.f32 %v4031, %v4032
        %v4034 = vsel %vm3839, %v3973, 0.0
        %v4035 = vadd.f32 %v4033, %v4034
        %v4036 = vsel %vm3839, %v3974, 0.0
        %v4037 = vadd.f32 %v4035, %v4036
        %v4038 = vrot.slane %v4037, 4
        %v4039 = vadd.f32 %v4037, %v4038
        %v4040 = vrot.slane %v4039, 2
        %v4041 = vadd.f32 %v4039, %v4040
        %v4042 = vrot.slane %v4041, 1
        %v4043 = vadd.f32 %v4041, %v4042
        %4044 = vst.msk [vmem:[%s260] sm:$0x1] %vm3941, %v4043
        %p4045 = scmp.lt.s32.totalorder %s24, 1
        %s4046 = scalar_select %p4045, %s24, 1
        %s4047 = smul.addr %s4046, 32
        %s4048 = smul.addr %s4047, 8
        %s4049 = scalar_lea.vmem %s4, %s4048
        %s4050 = sand.u32 %s147, 1
        %s4051 = scalar_lea.sflag [#allocation4], %s4050
        %s4052 = sand.u32 %s147, 1
        %s4053 = scalar_lea.vmem [#allocation3], %s4052
        %s4054 = sand.u32 %s173, 1
        %s4055 = scalar_lea.sflag [#allocation6], %s4054
        %s4056 = sand.u32 %s173, 1
        %s4057 = scalar_lea.vmem [#allocation5], %s4056
        // Predicated region
        $region37: #{tpu_custom_call.1} parent=35 // pred_check
          %p4058 = pneg %p131
        $region38: #{tpu_custom_call.1} parent=35 // pred_check_branch
          %4060 = sbr.rel (%p4058) target = $region40
        $region39: #{tpu_custom_call.1} parent=35 // pred_region
          _
        $region40: #{tpu_custom_call.1} parent=35 // pred_fallthru
          _
        // Predicated region
        $region41: #{tpu_custom_call.1} parent=35 // pred_check
          %p4061 = pneg %p157
        $region42: #{tpu_custom_call.1} parent=35 // pred_check_branch
          %4063 = sbr.rel (%p4061) target = $region44
        $region43: #{tpu_custom_call.1} parent=35 // pred_region
          %s4065 = ssub.s32 16, 16
          %4066 = vsyncadd %s4051, %s4065
          %s4067 = smul.addr %s24, 16
          %s4068 = scalar_lea.hbm %s5, %s4067
          %s4070 = sshll.u32 %s4053, 4
          %s4071 = int_to_ptr.vmem [resolvable:$true] %s4070
          %4073 = dma.vmem_to_hbm [thread:$0]  %s4071, 16, %s4068, %s4051
        $region44: #{tpu_custom_call.1} parent=35 // pred_fallthru
          _
        // Predicated region
        $region45: #{tpu_custom_call.1} parent=35 // pred_check
          %p4074 = pneg %p183
        $region46: #{tpu_custom_call.1} parent=35 // pred_check_branch
          %4076 = sbr.rel (%p4074) target = $region48
        $region47: #{tpu_custom_call.1} parent=35 // pred_region
          %s4078 = ssub.s32 16, 16
          %4079 = vsyncadd %s4055, %s4078
          %s4080 = smul.addr %s24, 16
          %s4081 = scalar_lea.hbm %s6, %s4080
          %s4083 = sshll.u32 %s4057, 4
          %s4084 = int_to_ptr.vmem [resolvable:$true] %s4083
          %4086 = dma.vmem_to_hbm [thread:$0]  %s4084, 16, %s4081, %s4055
        $region48: #{tpu_custom_call.1} parent=35 // pred_fallthru
          _
      $region36: #{tpu_custom_call.1} parent=5 // pred_fallthru
        _
      %p4087 = scmp.le.s32.totalorder 2, %s19
      // Predicated region
      $region49: #{tpu_custom_call.1} parent=5 // pred_check
        %p4088 = pneg %p4087
      $region50: #{tpu_custom_call.1} parent=5 // pred_check_branch
        %4090 = sbr.rel (%p4088) target = $region52
      $region51: #{tpu_custom_call.1} parent=5 // pred_region
        %s4091 = ssub.s32 %s19, 2
        // Predicated region
        $region53: #{tpu_custom_call.1} parent=51 // pred_check
          %p4092 = pneg %p137
        $region54: #{tpu_custom_call.1} parent=51 // pred_check_branch
          %4094 = sbr.rel (%p4092) target = $region56
        $region55: #{tpu_custom_call.1} parent=51 // pred_region
          %p4095 = scmp.lt.s32.totalorder %s25, 1
          %s4096 = scalar_select %p4095, %s25, 1
          %s4097 = smul.addr %s4096, 32
          %s4098 = smul.addr %s4097, 8
          %s4099 = scalar_lea.vmem %s4, %s4098
        $region56: #{tpu_custom_call.1} parent=51 // pred_fallthru
          _
        // Predicated region
        $region57: #{tpu_custom_call.1} parent=51 // pred_check
          %p4100 = pneg %p163
        $region58: #{tpu_custom_call.1} parent=51 // pred_check_branch
          %4102 = sbr.rel (%p4100) target = $region60
        $region59: #{tpu_custom_call.1} parent=51 // pred_region
          %s4103 = sand.u32 %s148, 1
          %s4104 = scalar_lea.sflag [#allocation4], %s4103
          %s4105 = sand.u32 %s148, 1
          %s4106 = scalar_lea.vmem [#allocation3], %s4105
          %4107 = dma.done %s4104, 16
        $region60: #{tpu_custom_call.1} parent=51 // pred_fallthru
          _
        // Predicated region
        $region61: #{tpu_custom_call.1} parent=51 // pred_check
          %p4108 = pneg %p189
        $region62: #{tpu_custom_call.1} parent=51 // pred_check_branch
          %4110 = sbr.rel (%p4108) target = $region64
        $region63: #{tpu_custom_call.1} parent=51 // pred_region
          %s4111 = sand.u32 %s174, 1
          %s4112 = scalar_lea.sflag [#allocation6], %s4111
          %s4113 = sand.u32 %s174, 1
          %s4114 = scalar_lea.vmem [#allocation5], %s4113
          %4115 = dma.done %s4112, 16
        $region64: #{tpu_custom_call.1} parent=51 // pred_fallthru
          _
      $region52: #{tpu_custom_call.1} parent=5 // pred_fallthru
        _
    $region6: #{tpu_custom_call.1} parent=1 // loop_footer
      %s23 = sadd.s32 1, %s19
    $region7: #{tpu_custom_call.1} parent=1 // loop_footer_branch
      %18 = sbr.rel target = $region3
    $region8: #{tpu_custom_call.1} parent=1 // loop_exit
      _
    %4116 = vsyncpa [#allocation4], 1
    %s4117 = scalar_lea.sflag [#allocation4], 1
    %4118 = vsyncpa %s4117, 1
    %4119 = vsyncpa [#allocation6], 1
    %s4120 = scalar_lea.sflag [#allocation6], 1
    %4121 = vsyncpa %s4120, 1

</llo_original>
